<compile_context>
chip_gen: v6e
topology: v6e:2x2x1
jax: 0.10.0
libtpu: 0.0.40
codegen_flags: <defaults>
</compile_context>

<pallas_src>
import jax
import jax.numpy as jnp
import numpy as np
from jax import lax
from jax.experimental import pallas as pl
from jax.experimental.pallas import tpu as pltpu

SUP_WEIGHT = 0.35
UNSUP_TEMP = 0.1
SUP_TEMP = 0.1
NEG_INF = -1e30

# The kernel computes the scaled logits once and shares one exp() pass between
# the sup and unsup paths; that is only valid while the temperatures are equal.
assert SUP_TEMP == UNSUP_TEMP, "kernel shares logits/exp between sup and unsup paths"
_INV_TEMP = 1.0 / UNSUP_TEMP


def _gcd_loss_kernel(e_rows_ref, e_cols_ref, tgt_rows_ref, tgt_cols_ref,
                     row_aux_ref, col_aux_ref, out_ref):
    tm = e_rows_ref.shape[0]
    n_pad = e_cols_ref.shape[1]
    row_off = pl.program_id(0) * tm

    # [tm, n_pad] gram strip: plain [M,K] @ [K,N] MXU feed, bf16 in / f32 acc.
    prods = lax.dot_general(
        e_rows_ref[...], e_cols_ref[...], (((1,), (0,)), ((), ())),
        preferred_element_type=jnp.float32)

    col_bias = col_aux_ref[0:1, :]          # [1, n_pad]: 0.0 real col, -1e30 padded col
    nm_cols = col_aux_ref[1:2, :]           # [1, n_pad]: 1.0 norm-masked col, else 0.0
    logits = prods * _INV_TEMP + col_bias   # padded columns pushed to -inf

    # Diagonal (self) exclusion: one full-size lane iota; row ids from a [tm,1] iota.
    col_ids = lax.broadcasted_iota(jnp.int32, (tm, n_pad), 1)
    row_ids = lax.broadcasted_iota(jnp.int32, (tm, 1), 0) + row_off
    masked = jnp.where(col_ids == row_ids, NEG_INF, logits)

    # Single shifted exp pass shared by both softmax denominators (SUP==UNSUP temp;
    # the shared shift is exact/stable because the GCD embeddings are L2-normalized,
    # so |logit| <= 1/temp).
    m = jnp.max(masked, axis=1, keepdims=True)          # [tm, 1]
    ex = jnp.exp(masked - m)                             # [tm, n_pad]

    # ---------------- unsupervised: logsumexp over all other real samples ----------------
    vld_rows = row_aux_ref[:, 0:1]                       # [tm, 1] 1.0 real row, else 0.0
    denom_u = m + jnp.log(jnp.sum(ex, axis=1, keepdims=True))
    part_unsup = jnp.sum(denom_u * vld_rows)             # padded rows excluded

    # ---------------- supervised ----------------
    sum_s = jnp.sum(ex * nm_cols, axis=1, keepdims=True)
    denom_s = m + jnp.log(jnp.maximum(sum_s, 1e-30))     # rows w/o pairs excluded below

    # Sentinel targets make this compare exact: non-normed / padded rows & columns
    # can never match anything, so no extra mask algebra is needed.
    same = tgt_rows_ref[...] == tgt_cols_ref[...]        # [tm, n_pad] bool
    k = jnp.sum(same, axis=1, keepdims=True)             # int32 group size (incl. self)
    self_logit = row_aux_ref[:, 1:2]                     # [tm, 1]: e_r.e_r / temp (bf16-rounded)
    num_s = jnp.sum(jnp.where(same, logits, 0.0), axis=1, keepdims=True) - self_logit

    include = k >= 2                                     # norm-masked row with >=1 partner
    k_f = jnp.where(include, k.astype(jnp.float32), 1.0)
    loss_i = denom_s - num_s / k_f
    part_sup = jnp.sum(jnp.where(include, loss_i, 0.0))
    part_cnt = jnp.sum(include.astype(jnp.float32))

    # Lane-dense per-tile partials: row 0, lanes 0..2 of this tile's (8,128) block.
    sub = lax.broadcasted_iota(jnp.int32, (8, 128), 0)
    lane = lax.broadcasted_iota(jnp.int32, (8, 128), 1)
    blk = jnp.where((sub == 0) & (lane == 0), part_unsup, 0.0)
    blk = jnp.where((sub == 0) & (lane == 1), part_sup, blk)
    blk = jnp.where((sub == 0) & (lane == 2), part_cnt, blk)
    out_ref[...] = blk


def _round_up(x, m):
    return ((x + m - 1) // m) * m


def _vmem_bytes(row_tile, n_pad, d, col_buffers):
    """Rough VMEM footprint used for tile sizing (includes the resident column operand)."""
    cols = n_pad * d * 2 * col_buffers            # embeds^T (bf16), resident columns
    rows = row_tile * d * 2 * 2                   # embeds row tile (bf16), double-buffered
    strip = row_tile * n_pad * 24                 # ~6 f32-equivalent [tm, n_pad] temporaries
    vecs = n_pad * 12 * col_buffers + row_tile * 12 * 2   # target / aux vectors
    out = 2 * 8 * 128 * 4
    return cols + rows + strip + vecs + out


def gcd_loss(embeds, t_embeds, targets, norm_mask):
    """Pallas implementation of GCDLoss.forward.

    Assumes embeddings are (approximately) L2-normalized, as in the GCD training
    pipeline: the supervised log-sum-exp reuses the unsupervised row max as its
    shift, which is safe only while |logit| <= 1/temp.
    """
    n = int(embeds.shape[0])
    d = int(embeds.shape[1])
    if int(targets.shape[0]) == 0:
        return jnp.float32(0.0)        # torch: empty-target early return (static shape)
    if n < 2:
        return jnp.float32(0.0)        # unsup needs >=2 rows; norm-masked subset also <2

    # ---- VMEM budget (per-generation) & tile geometry ----
    try:
        phys_vmem = int(pltpu.get_tpu_info().vmem_capacity_bytes)
    except Exception:
        phys_vmem = 64 * 1024 * 1024                 # v7x floor -> safe everywhere
    budget = min(96 * 1024 * 1024, (phys_vmem * 3) // 4)  # ~96 MiB v5e/v6e, ~48 MiB v7x

    n_pad0 = _round_up(n, 128)
    row_tile = 512
    # Shrink (powers of two, floor 128) until (a) >= 2 tiles so a dual-TC chip can
    # split the parallel axis and (b) the budget (with single-buffered columns) fits.
    while row_tile > 128 and (row_tile > n_pad0 // 2 or
                              _vmem_bytes(row_tile, _round_up(n, row_tile), d, 1) > budget):
        row_tile //= 2
    # TODO(synk): when the resident [D, N] column operand alone exceeds the budget
    # (N*D >~ 12M bf16), add a column-tile grid axis with online-softmax accumulators
    # instead of shrinking row_tile below 128.
    n_pad = _round_up(n, row_tile)
    num_tiles = n_pad // row_tile

    # ---- pad + lay out inputs (D kept at its natural width; no feature padding) ----
    e32 = embeds.astype(jnp.float32)
    e_pad = jnp.zeros((n_pad, d), jnp.float32).at[:n, :].set(e32)
    e_bf = e_pad.astype(jnp.bfloat16)        # gram runs bf16 on the MXU, f32 accumulation
    e_cols_t = e_bf.T                        # [d, n_pad] pre-transposed RHS
    e_bfr = e_bf.astype(jnp.float32)         # bf16-rounded values, for the self logit

    tgt_i = targets.astype(jnp.int32)
    tmin = jnp.minimum(jnp.min(tgt_i), 0)
    row_sent = tmin - 1                      # never equals any column value
    col_sent = tmin - 2                      # never equals any row value
    tgt_full = jnp.full((n_pad,), row_sent, jnp.int32).at[:n].set(tgt_i)
    nm_full = jnp.zeros((n_pad,), bool).at[:n].set(norm_mask.astype(bool))
    tgt_rows = jnp.where(nm_full, tgt_full, row_sent).reshape(n_pad, 1)
    tgt_cols = jnp.where(nm_full, tgt_full, col_sent).reshape(1, n_pad)

    vld = jnp.zeros((n_pad,), jnp.float32).at[:n].set(1.0)
    self_logit = jnp.sum(e_bfr * e_bfr, axis=1) * jnp.float32(_INV_TEMP)
    row_aux = jnp.stack([vld, self_logit], axis=1)                      # [n_pad, 2]
    col_bias = jnp.where(vld > 0.5, 0.0, NEG_INF).astype(jnp.float32)
    col_aux = jnp.stack([col_bias, nm_full.astype(jnp.float32)], axis=0)  # [2, n_pad]

    def _call(const_pipeline_mode):
        kw = {} if const_pipeline_mode is None else {"pipeline_mode": const_pipeline_mode}
        grid_spec = pltpu.PrefetchScalarGridSpec(
            num_scalar_prefetch=0,
            grid=(num_tiles,),
            in_specs=[
                pl.BlockSpec((row_tile, d), lambda i: (i, 0)),        # embeds, row tile
                pl.BlockSpec((d, n_pad), lambda i: (0, 0), **kw),     # embeds^T, resident
                pl.BlockSpec((row_tile, 1), lambda i: (i, 0)),        # row targets
                pl.BlockSpec((1, n_pad), lambda i: (0, 0), **kw),     # col targets, resident
                pl.BlockSpec((row_tile, 2), lambda i: (i, 0)),        # row aux [vld, self_logit]
                pl.BlockSpec((2, n_pad), lambda i: (0, 0), **kw),     # col aux [bias, nm]
            ],
            out_specs=pl.BlockSpec((8, 128), lambda i: (i, 0)),
        )
        return pl.pallas_call(
            _gcd_loss_kernel,
            out_shape=jax.ShapeDtypeStruct((num_tiles * 8, 128), jnp.float32),
            grid_spec=grid_spec,
            compiler_params=pltpu.CompilerParams(
                dimension_semantics=("parallel",),     # per-tile partials -> megacore/2-TC friendly
                vmem_limit_bytes=int(budget)),
        )(e_bf, e_cols_t, tgt_rows, tgt_cols, row_aux, col_aux)

    try:
        # Constant-index operands single-buffered (halves the dominant resident buffer).
        out = _call(pl.Buffered(1))
    except Exception:
        # pipeline_mode not accepted by this jax/Mosaic build: identical math,
        # default double-buffering (just 2x VMEM for the resident column operand).
        out = _call(None)

    parts = out.reshape(num_tiles, 8, 128)[:, 0, :3]
    sum_denom_u = jnp.sum(parts[:, 0])
    sup_sum = jnp.sum(parts[:, 1])
    sup_cnt = jnp.sum(parts[:, 2])

    # O(N*D) unsup numerators stay out of the kernel (t_embeds never touches VMEM).
    sum_num_u = jnp.sum(e32 * t_embeds.astype(jnp.float32)) * jnp.float32(_INV_TEMP)

    unsup_loss = (sum_denom_u - sum_num_u) / n
    sup_loss = jnp.where(sup_cnt > 0.5, sup_sum / jnp.maximum(sup_cnt, 1.0), 0.0)
    return (1.0 - SUP_WEIGHT) * unsup_loss + SUP_WEIGHT * sup_loss


def gcd_loss_ref(embeds, t_embeds, targets, norm_mask, gram_embeds=None):
    """Numpy reference mirroring the PyTorch code path (compaction + per-target loop).

    `gram_embeds` optionally substitutes the embeddings used for the NxN gram
    products (e.g. bf16-rounded), so the kernel's masked-reduction logic can be
    checked tightly even though its matmul runs in bf16.
    """
    e = np.asarray(embeds, np.float32)
    ge = e if gram_embeds is None else np.asarray(gram_embeds, np.float32)
    te = np.asarray(t_embeds, np.float32)
    tg = np.asarray(targets)
    nm = np.asarray(norm_mask).astype(bool)
    n = e.shape[0]

    def dot_others(x):
        m = x.shape[0]
        g = x @ x.T
        return g[~np.eye(m, dtype=bool)].reshape(m, m - 1)

    def logsumexp(a):
        mx = a.max(axis=1, keepdims=True)
        return (mx + np.log(np.sum(np.exp(a - mx), axis=1, keepdims=True)))[:, 0]

    if n < 2:
        unsup = 0.0
    else:
        nums = np.sum(e * te, axis=1) / UNSUP_TEMP
        denoms = logsumexp(dot_others(ge) / UNSUP_TEMP)
        unsup = float(np.mean(denoms - nums))

    sge, st = ge[nm], tg[nm]
    if sge.shape[0] < 2:
        sup = 0.0
    else:
        denoms = logsumexp(dot_others(sge) / SUP_TEMP)
        losses = []
        for t in np.unique(st):
            msk = st == t
            if msk.sum() == 1:
                continue
            nums = np.sum(dot_others(sge[msk]) / SUP_TEMP, axis=1)
            losses.append(denoms[msk] - nums / msk.sum())
        sup = float(np.mean(np.concatenate(losses))) if losses else 0.0
    return (1.0 - SUP_WEIGHT) * unsup + SUP_WEIGHT * sup


if __name__ == "__main__":
    N, D = 256, 32                      # 2 row tiles of 128 -> exercises the parallel grid
    key = jax.random.PRNGKey(0)
    k1, k2 = jax.random.split(key)
    embeds = jax.random.normal(k1, (N, D), dtype=jnp.float32)
    embeds = embeds / jnp.linalg.norm(embeds, axis=1, keepdims=True)
    t_embeds = jax.random.normal(k2, (N, D), dtype=jnp.float32)
    t_embeds = t_embeds / jnp.linalg.norm(t_embeds, axis=1, keepdims=True)
    targets = (jnp.arange(N) % 7).astype(jnp.int32)
    targets = targets.at[5].set(100)            # singleton group among normed rows -> skipped
    norm_mask = (jnp.arange(N) % 3) != 0        # ~2/3 of rows norm-masked

    loss = gcd_loss(embeds, t_embeds, targets, norm_mask)
    loss = float(jax.block_until_ready(loss))

    # Tight check of the kernel math: reference uses the same bf16-rounded gram inputs.
    e_bf16 = np.asarray(embeds.astype(jnp.bfloat16).astype(jnp.float32))
    ref_bf = gcd_loss_ref(embeds, t_embeds, targets, norm_mask, gram_embeds=e_bf16)
    np.testing.assert_allclose(loss, ref_bf, rtol=1e-3, atol=1e-3)

    # Fidelity check against the pure-f32 PyTorch-equivalent reference
    # (looser tolerance accounts for the bf16 gram matmul on the MXU).
    ref_f32 = gcd_loss_ref(embeds, t_embeds, targets, norm_mask)
    np.testing.assert_allclose(loss, ref_f32, rtol=2e-2, atol=5e-2)

    print("KERNEL_OK")
</pallas_src>

<mosaic_0001>
module attributes {stable_mosaic.version = 11 : i64} {
  func.func @_gcd_loss_kernel(%arg0: i32, %arg1: memref<128x32xbf16, #tpu.memory_space<vmem>>, %arg2: memref<32x256xbf16, #tpu.memory_space<vmem>>, %arg3: memref<128x1xi32, #tpu.memory_space<vmem>>, %arg4: memref<1x256xi32, #tpu.memory_space<vmem>>, %arg5: memref<128x2xf32, #tpu.memory_space<vmem>>, %arg6: memref<2x256xf32, #tpu.memory_space<vmem>>, %arg7: memref<8x128xf32, #tpu.memory_space<vmem>>) attributes {dimension_semantics = [#tpu.dimension_semantics<parallel>], iteration_bounds = array<i64: 2>, scalar_prefetch = 0 : i64, scratch_operands = 0 : i64, tpu.core_type = #tpu.core_type<tc>, window_params = [{transform_indices = @transform_0, window_bounds = array<i64: 128, 32>}, {pipeline_mode = #tpu.pipeline_mode<synchronous>, transform_indices = @transform_1, window_bounds = array<i64: 32, 256>}, {transform_indices = @transform_2, window_bounds = array<i64: 128, 1>}, {pipeline_mode = #tpu.pipeline_mode<synchronous>, transform_indices = @transform_3, window_bounds = array<i64: 1, 256>}, {transform_indices = @transform_4, window_bounds = array<i64: 128, 2>}, {pipeline_mode = #tpu.pipeline_mode<synchronous>, transform_indices = @transform_5, window_bounds = array<i64: 2, 256>}, {transform_indices = @transform_6, window_bounds = array<i64: 8, 128>}]} {
    %c128_i32 = arith.constant 128 : i32
    %0 = arith.muli %arg0, %c128_i32 : i32
    %c0 = arith.constant 0 : index
    %c0_0 = arith.constant 0 : index
    %1 = vector.load %arg1[%c0, %c0_0] : memref<128x32xbf16, #tpu.memory_space<vmem>>, vector<128x32xbf16>
    %c0_1 = arith.constant 0 : index
    %c0_2 = arith.constant 0 : index
    %2 = vector.load %arg2[%c0_1, %c0_2] : memref<32x256xbf16, #tpu.memory_space<vmem>>, vector<32x256xbf16>
    %cst = arith.constant dense<0.000000e+00> : vector<128x256xf32>
    %3 = tpu.matmul %1, %2, %cst {dimension_numbers = #tpu.dot_dimension_numbers<[1], [0], [0], [1], [0, 0, 1, 1], [], []>} : vector<128x32xbf16>, vector<32x256xbf16>, vector<128x256xf32> -> vector<128x256xf32>
    %c0_3 = arith.constant 0 : index
    %c0_4 = arith.constant 0 : index
    %4 = vector.load %arg6[%c0_3, %c0_4] : memref<2x256xf32, #tpu.memory_space<vmem>>, vector<1x256xf32>
    %c1 = arith.constant 1 : index
    %c0_5 = arith.constant 0 : index
    %5 = vector.load %arg6[%c1, %c0_5] : memref<2x256xf32, #tpu.memory_space<vmem>>, vector<1x256xf32>
    %cst_6 = arith.constant 1.000000e+01 : f32
    %6 = vector.broadcast %cst_6 : f32 to vector<128x256xf32>
    %7 = arith.mulf %3, %6 : vector<128x256xf32>
    %8 = vector.broadcast %4 : vector<1x256xf32> to vector<128x256xf32>
    %9 = arith.addf %7, %8 : vector<128x256xf32>
    %10 = tpu.iota {dimensions = array<i32: 1>} : vector<128x256xi32>
    %11 = tpu.iota {dimensions = array<i32: 0>} : vector<128x1xi32>
    %12 = vector.broadcast %0 : i32 to vector<128x1xi32>
    %13 = arith.addi %11, %12 : vector<128x1xi32>
    %14 = vector.broadcast %13 : vector<128x1xi32> to vector<128x256xi32>
    %15 = arith.cmpi eq, %10, %14 : vector<128x256xi32>
    %cst_7 = arith.constant -1.000000e+30 : f32
    %16 = vector.broadcast %cst_7 : f32 to vector<128x256xf32>
    %17 = arith.select %15, %16, %9 : vector<128x256xi1>, vector<128x256xf32>
    %cst_8 = arith.constant dense<0xFF800000> : vector<128xf32>
    %18 = vector.multi_reduction <maximumf>, %17, %cst_8 [1] : vector<128x256xf32> to vector<128xf32>
    %19 = vector.shape_cast %18 : vector<128xf32> to vector<128x1xf32>
    %20 = vector.broadcast %19 : vector<128x1xf32> to vector<128x256xf32>
    %21 = arith.subf %17, %20 : vector<128x256xf32>
    %22 = math.exp %21 : vector<128x256xf32>
    %c0_9 = arith.constant 0 : index
    %c0_10 = arith.constant 0 : index
    %23 = vector.load %arg5[%c0_9, %c0_10] : memref<128x2xf32, #tpu.memory_space<vmem>>, vector<128x1xf32>
    %cst_11 = arith.constant dense<0.000000e+00> : vector<128xf32>
    %24 = vector.multi_reduction <add>, %22, %cst_11 [1] : vector<128x256xf32> to vector<128xf32>
    %25 = vector.shape_cast %24 : vector<128xf32> to vector<128x1xf32>
    %26 = math.log %25 : vector<128x1xf32>
    %27 = arith.addf %19, %26 : vector<128x1xf32>
    %28 = arith.mulf %27, %23 : vector<128x1xf32>
    %29 = vector.shape_cast %28 : vector<128x1xf32> to vector<1x128x1xf32>
    %cst_12 = arith.constant dense<0.000000e+00> : vector<1xf32>
    %30 = vector.multi_reduction <add>, %29, %cst_12 [1, 2] : vector<1x128x1xf32> to vector<1xf32>
    %31 = vector.shape_cast %30 : vector<1xf32> to vector<1x1x1xf32>
    %32 = vector.extract %31[0, 0, 0] : f32 from vector<1x1x1xf32>
    %33 = vector.broadcast %5 : vector<1x256xf32> to vector<128x256xf32>
    %34 = arith.mulf %22, %33 : vector<128x256xf32>
    %cst_13 = arith.constant dense<0.000000e+00> : vector<128xf32>
    %35 = vector.multi_reduction <add>, %34, %cst_13 [1] : vector<128x256xf32> to vector<128xf32>
    %36 = vector.shape_cast %35 : vector<128xf32> to vector<128x1xf32>
    %cst_14 = arith.constant 1.000000e-30 : f32
    %37 = vector.broadcast %cst_14 : f32 to vector<128x1xf32>
    %38 = arith.maximumf %36, %37 : vector<128x1xf32>
    %39 = math.log %38 : vector<128x1xf32>
    %40 = arith.addf %19, %39 : vector<128x1xf32>
    %c0_15 = arith.constant 0 : index
    %c0_16 = arith.constant 0 : index
    %41 = vector.load %arg3[%c0_15, %c0_16] : memref<128x1xi32, #tpu.memory_space<vmem>>, vector<128x1xi32>
    %c0_17 = arith.constant 0 : index
    %c0_18 = arith.constant 0 : index
    %42 = vector.load %arg4[%c0_17, %c0_18] : memref<1x256xi32, #tpu.memory_space<vmem>>, vector<1x256xi32>
    %43 = vector.broadcast %41 : vector<128x1xi32> to vector<128x256xi32>
    %44 = vector.broadcast %42 : vector<1x256xi32> to vector<128x256xi32>
    %45 = arith.cmpi eq, %43, %44 : vector<128x256xi32>
    %46 = arith.extui %45 : vector<128x256xi1> to vector<128x256xi32>
    %cst_19 = arith.constant dense<0> : vector<128xi32>
    %47 = vector.multi_reduction <add>, %46, %cst_19 [1] : vector<128x256xi32> to vector<128xi32>
    %48 = vector.shape_cast %47 : vector<128xi32> to vector<128x1xi32>
    %c0_20 = arith.constant 0 : index
    %c1_21 = arith.constant 1 : index
    %49 = vector.load %arg5[%c0_20, %c1_21] : memref<128x2xf32, #tpu.memory_space<vmem>>, vector<128x1xf32>
    %cst_22 = arith.constant 0.000000e+00 : f32
    %50 = vector.broadcast %cst_22 : f32 to vector<128x256xf32>
    %51 = arith.select %45, %9, %50 : vector<128x256xi1>, vector<128x256xf32>
    %cst_23 = arith.constant dense<0.000000e+00> : vector<128xf32>
    %52 = vector.multi_reduction <add>, %51, %cst_23 [1] : vector<128x256xf32> to vector<128xf32>
    %53 = vector.shape_cast %52 : vector<128xf32> to vector<128x1xf32>
    %54 = arith.subf %53, %49 : vector<128x1xf32>
    %c2_i32 = arith.constant 2 : i32
    %55 = vector.broadcast %c2_i32 : i32 to vector<128x1xi32>
    %56 = arith.cmpi sge, %48, %55 : vector<128x1xi32>
    %57 = arith.sitofp %48 : vector<128x1xi32> to vector<128x1xf32>
    %cst_24 = arith.constant 1.000000e+00 : f32
    %58 = vector.broadcast %cst_24 : f32 to vector<128x1xf32>
    %59 = arith.select %56, %57, %58 : vector<128x1xi1>, vector<128x1xf32>
    %60 = arith.divf %54, %59 : vector<128x1xf32>
    %61 = arith.subf %40, %60 : vector<128x1xf32>
    %cst_25 = arith.constant 0.000000e+00 : f32
    %62 = vector.broadcast %cst_25 : f32 to vector<128x1xf32>
    %63 = arith.select %56, %61, %62 : vector<128x1xi1>, vector<128x1xf32>
    %64 = vector.shape_cast %63 : vector<128x1xf32> to vector<1x128x1xf32>
    %cst_26 = arith.constant dense<0.000000e+00> : vector<1xf32>
    %65 = vector.multi_reduction <add>, %64, %cst_26 [1, 2] : vector<1x128x1xf32> to vector<1xf32>
    %66 = vector.shape_cast %65 : vector<1xf32> to vector<1x1x1xf32>
    %67 = vector.extract %66[0, 0, 0] : f32 from vector<1x1x1xf32>
    %68 = arith.extui %56 : vector<128x1xi1> to vector<128x1xi32>
    %69 = arith.sitofp %68 : vector<128x1xi32> to vector<128x1xf32>
    %70 = vector.shape_cast %69 : vector<128x1xf32> to vector<1x128x1xf32>
    %cst_27 = arith.constant dense<0.000000e+00> : vector<1xf32>
    %71 = vector.multi_reduction <add>, %70, %cst_27 [1, 2] : vector<1x128x1xf32> to vector<1xf32>
    %72 = vector.shape_cast %71 : vector<1xf32> to vector<1x1x1xf32>
    %73 = vector.extract %72[0, 0, 0] : f32 from vector<1x1x1xf32>
    %74 = tpu.iota {dimensions = array<i32: 0>} : vector<8x128xi32>
    %75 = tpu.iota {dimensions = array<i32: 1>} : vector<8x128xi32>
    %c0_i32 = arith.constant 0 : i32
    %76 = vector.broadcast %c0_i32 : i32 to vector<8x128xi32>
    %77 = arith.cmpi eq, %74, %76 : vector<8x128xi32>
    %c0_i32_28 = arith.constant 0 : i32
    %78 = vector.broadcast %c0_i32_28 : i32 to vector<8x128xi32>
    %79 = arith.cmpi eq, %75, %78 : vector<8x128xi32>
    %80 = arith.andi %77, %79 : vector<8x128xi1>
    %cst_29 = arith.constant 0.000000e+00 : f32
    %81 = vector.broadcast %32 : f32 to vector<8x128xf32>
    %82 = vector.broadcast %cst_29 : f32 to vector<8x128xf32>
    %83 = arith.select %80, %81, %82 : vector<8x128xi1>, vector<8x128xf32>
    %c0_i32_30 = arith.constant 0 : i32
    %84 = vector.broadcast %c0_i32_30 : i32 to vector<8x128xi32>
    %85 = arith.cmpi eq, %74, %84 : vector<8x128xi32>
    %c1_i32 = arith.constant 1 : i32
    %86 = vector.broadcast %c1_i32 : i32 to vector<8x128xi32>
    %87 = arith.cmpi eq, %75, %86 : vector<8x128xi32>
    %88 = arith.andi %85, %87 : vector<8x128xi1>
    %89 = vector.broadcast %67 : f32 to vector<8x128xf32>
    %90 = arith.select %88, %89, %83 : vector<8x128xi1>, vector<8x128xf32>
    %c0_i32_31 = arith.constant 0 : i32
    %91 = vector.broadcast %c0_i32_31 : i32 to vector<8x128xi32>
    %92 = arith.cmpi eq, %74, %91 : vector<8x128xi32>
    %c2_i32_32 = arith.constant 2 : i32
    %93 = vector.broadcast %c2_i32_32 : i32 to vector<8x128xi32>
    %94 = arith.cmpi eq, %75, %93 : vector<8x128xi32>
    %95 = arith.andi %92, %94 : vector<8x128xi1>
    %96 = vector.broadcast %73 : f32 to vector<8x128xf32>
    %97 = arith.select %95, %96, %90 : vector<8x128xi1>, vector<8x128xf32>
    %c0_33 = arith.constant 0 : index
    %c0_34 = arith.constant 0 : index
    %98 = vector.load %arg7[%c0_33, %c0_34] : memref<8x128xf32, #tpu.memory_space<vmem>>, vector<8x128xf32>
    tpu.vector_store %arg7[%c0_33, %c0_34], %97 {strides = array<i32>} : memref<8x128xf32, #tpu.memory_space<vmem>>, vector<8x128xf32>,
    return
  }
  func.func @transform_0(%arg0: i32) -> (i32, i32) {
    %c0_i32 = arith.constant 0 : i32
    %c0_i32_0 = arith.constant 0 : i32
    return %arg0, %c0_i32 : i32, i32
  }
  func.func @transform_1(%arg0: i32) -> (i32, i32) {
    %c0_i32 = arith.constant 0 : i32
    %c0_i32_0 = arith.constant 0 : i32
    %c0_i32_1 = arith.constant 0 : i32
    return %c0_i32, %c0_i32_0 : i32, i32
  }
  func.func @transform_2(%arg0: i32) -> (i32, i32) {
    %c0_i32 = arith.constant 0 : i32
    %c0_i32_0 = arith.constant 0 : i32
    return %arg0, %c0_i32 : i32, i32
  }
  func.func @transform_3(%arg0: i32) -> (i32, i32) {
    %c0_i32 = arith.constant 0 : i32
    %c0_i32_0 = arith.constant 0 : i32
    %c0_i32_1 = arith.constant 0 : i32
    return %c0_i32, %c0_i32_0 : i32, i32
  }
  func.func @transform_4(%arg0: i32) -> (i32, i32) {
    %c0_i32 = arith.constant 0 : i32
    %c0_i32_0 = arith.constant 0 : i32
    return %arg0, %c0_i32 : i32, i32
  }
  func.func @transform_5(%arg0: i32) -> (i32, i32) {
    %c0_i32 = arith.constant 0 : i32
    %c0_i32_0 = arith.constant 0 : i32
    %c0_i32_1 = arith.constant 0 : i32
    return %c0_i32, %c0_i32_0 : i32, i32
  }
  func.func @transform_6(%arg0: i32) -> (i32, i32) {
    %c0_i32 = arith.constant 0 : i32
    %c0_i32_0 = arith.constant 0 : i32
    return %arg0, %c0_i32 : i32, i32
  }
}

module attributes {stable_mosaic.version = 11 : i64} {
  func.func @_gcd_loss_kernel(%arg0: i32, %arg1: memref<128x32xbf16, #tpu.memory_space<vmem>>, %arg2: memref<32x256xbf16, #tpu.memory_space<vmem>>, %arg3: memref<128x1xi32, #tpu.memory_space<vmem>>, %arg4: memref<1x256xi32, #tpu.memory_space<vmem>>, %arg5: memref<128x2xf32, #tpu.memory_space<vmem>>, %arg6: memref<2x256xf32, #tpu.memory_space<vmem>>, %arg7: memref<8x128xf32, #tpu.memory_space<vmem>>) attributes {dimension_semantics = [#tpu.dimension_semantics<parallel>], iteration_bounds = array<i64: 2>, scalar_prefetch = 0 : i64, scratch_operands = 0 : i64, tpu.core_type = #tpu.core_type<tc>, window_params = [{transform_indices = @transform_0, window_bounds = array<i64: 128, 32>}, {pipeline_mode = #tpu.pipeline_mode<synchronous>, transform_indices = @transform_1, window_bounds = array<i64: 32, 256>}, {transform_indices = @transform_2, window_bounds = array<i64: 128, 1>}, {pipeline_mode = #tpu.pipeline_mode<synchronous>, transform_indices = @transform_3, window_bounds = array<i64: 1, 256>}, {transform_indices = @transform_4, window_bounds = array<i64: 128, 2>}, {pipeline_mode = #tpu.pipeline_mode<synchronous>, transform_indices = @transform_5, window_bounds = array<i64: 2, 256>}, {transform_indices = @transform_6, window_bounds = array<i64: 8, 128>}]} {
    %c128_i32 = arith.constant 128 : i32
    %0 = arith.muli %arg0, %c128_i32 : i32
    %c0 = arith.constant 0 : index
    %c0_0 = arith.constant 0 : index
    %1 = vector.load %arg1[%c0, %c0_0] : memref<128x32xbf16, #tpu.memory_space<vmem>>, vector<128x32xbf16>
    %c0_1 = arith.constant 0 : index
    %c0_2 = arith.constant 0 : index
    %2 = vector.load %arg2[%c0_1, %c0_2] : memref<32x256xbf16, #tpu.memory_space<vmem>>, vector<32x256xbf16>
    %cst = arith.constant dense<0.000000e+00> : vector<128x256xf32>
    %3 = tpu.matmul %1, %2, %cst {dimension_numbers = #tpu.dot_dimension_numbers<[1], [0], [0], [1], [0, 0, 1, 1], [], []>} : vector<128x32xbf16>, vector<32x256xbf16>, vector<128x256xf32> -> vector<128x256xf32>
    %c0_3 = arith.constant 0 : index
    %c0_4 = arith.constant 0 : index
    %4 = vector.load %arg6[%c0_3, %c0_4] : memref<2x256xf32, #tpu.memory_space<vmem>>, vector<1x256xf32>
    %c1 = arith.constant 1 : index
    %c0_5 = arith.constant 0 : index
    %5 = vector.load %arg6[%c1, %c0_5] : memref<2x256xf32, #tpu.memory_space<vmem>>, vector<1x256xf32>
    %cst_6 = arith.constant 1.000000e+01 : f32
    %6 = vector.broadcast %cst_6 : f32 to vector<128x256xf32>
    %7 = arith.mulf %3, %6 : vector<128x256xf32>
    %8 = vector.broadcast %4 : vector<1x256xf32> to vector<128x256xf32>
    %9 = arith.addf %7, %8 : vector<128x256xf32>
    %10 = tpu.iota {dimensions = array<i32: 1>} : vector<128x256xi32>
    %11 = tpu.iota {dimensions = array<i32: 0>} : vector<128x1xi32>
    %12 = vector.broadcast %0 : i32 to vector<128x1xi32>
    %13 = arith.addi %11, %12 : vector<128x1xi32>
    %14 = vector.broadcast %13 : vector<128x1xi32> to vector<128x256xi32>
    %15 = arith.cmpi eq, %10, %14 : vector<128x256xi32>
    %cst_7 = arith.constant -1.000000e+30 : f32
    %16 = vector.broadcast %cst_7 : f32 to vector<128x256xf32>
    %17 = arith.select %15, %16, %9 : vector<128x256xi1>, vector<128x256xf32>
    %cst_8 = arith.constant dense<0xFF800000> : vector<128xf32>
    %18 = vector.multi_reduction <maximumf>, %17, %cst_8 [1] : vector<128x256xf32> to vector<128xf32>
    %19 = vector.shape_cast %18 : vector<128xf32> to vector<128x1xf32>
    %20 = vector.broadcast %19 : vector<128x1xf32> to vector<128x256xf32>
    %21 = arith.subf %17, %20 : vector<128x256xf32>
    %22 = math.exp %21 : vector<128x256xf32>
    %c0_9 = arith.constant 0 : index
    %c0_10 = arith.constant 0 : index
    %23 = vector.load %arg5[%c0_9, %c0_10] : memref<128x2xf32, #tpu.memory_space<vmem>>, vector<128x1xf32>
    %cst_11 = arith.constant dense<0.000000e+00> : vector<128xf32>
    %24 = vector.multi_reduction <add>, %22, %cst_11 [1] : vector<128x256xf32> to vector<128xf32>
    %25 = vector.shape_cast %24 : vector<128xf32> to vector<128x1xf32>
    %26 = math.log %25 : vector<128x1xf32>
    %27 = arith.addf %19, %26 : vector<128x1xf32>
    %28 = arith.mulf %27, %23 : vector<128x1xf32>
    %29 = vector.shape_cast %28 : vector<128x1xf32> to vector<1x128x1xf32>
    %cst_12 = arith.constant dense<0.000000e+00> : vector<1xf32>
    %30 = vector.multi_reduction <add>, %29, %cst_12 [1, 2] : vector<1x128x1xf32> to vector<1xf32>
    %31 = vector.shape_cast %30 : vector<1xf32> to vector<1x1x1xf32>
    %32 = vector.extract %31[0, 0, 0] : f32 from vector<1x1x1xf32>
    %33 = vector.broadcast %5 : vector<1x256xf32> to vector<128x256xf32>
    %34 = arith.mulf %22, %33 : vector<128x256xf32>
    %cst_13 = arith.constant dense<0.000000e+00> : vector<128xf32>
    %35 = vector.multi_reduction <add>, %34, %cst_13 [1] : vector<128x256xf32> to vector<128xf32>
    %36 = vector.shape_cast %35 : vector<128xf32> to vector<128x1xf32>
    %cst_14 = arith.constant 1.000000e-30 : f32
    %37 = vector.broadcast %cst_14 : f32 to vector<128x1xf32>
    %38 = arith.maximumf %36, %37 : vector<128x1xf32>
    %39 = math.log %38 : vector<128x1xf32>
    %40 = arith.addf %19, %39 : vector<128x1xf32>
    %c0_15 = arith.constant 0 : index
    %c0_16 = arith.constant 0 : index
    %41 = vector.load %arg3[%c0_15, %c0_16] : memref<128x1xi32, #tpu.memory_space<vmem>>, vector<128x1xi32>
    %c0_17 = arith.constant 0 : index
    %c0_18 = arith.constant 0 : index
    %42 = vector.load %arg4[%c0_17, %c0_18] : memref<1x256xi32, #tpu.memory_space<vmem>>, vector<1x256xi32>
    %43 = vector.broadcast %41 : vector<128x1xi32> to vector<128x256xi32>
    %44 = vector.broadcast %42 : vector<1x256xi32> to vector<128x256xi32>
    %45 = arith.cmpi eq, %43, %44 : vector<128x256xi32>
    %46 = arith.extui %45 : vector<128x256xi1> to vector<128x256xi32>
    %cst_19 = arith.constant dense<0> : vector<128xi32>
    %47 = vector.multi_reduction <add>, %46, %cst_19 [1] : vector<128x256xi32> to vector<128xi32>
    %48 = vector.shape_cast %47 : vector<128xi32> to vector<128x1xi32>
    %c0_20 = arith.constant 0 : index
    %c1_21 = arith.constant 1 : index
    %49 = vector.load %arg5[%c0_20, %c1_21] : memref<128x2xf32, #tpu.memory_space<vmem>>, vector<128x1xf32>
    %cst_22 = arith.constant 0.000000e+00 : f32
    %50 = vector.broadcast %cst_22 : f32 to vector<128x256xf32>
    %51 = arith.select %45, %9, %50 : vector<128x256xi1>, vector<128x256xf32>
    %cst_23 = arith.constant dense<0.000000e+00> : vector<128xf32>
    %52 = vector.multi_reduction <add>, %51, %cst_23 [1] : vector<128x256xf32> to vector<128xf32>
    %53 = vector.shape_cast %52 : vector<128xf32> to vector<128x1xf32>
    %54 = arith.subf %53, %49 : vector<128x1xf32>
    %c2_i32 = arith.constant 2 : i32
    %55 = vector.broadcast %c2_i32 : i32 to vector<128x1xi32>
    %56 = arith.cmpi sge, %48, %55 : vector<128x1xi32>
    %57 = arith.sitofp %48 : vector<128x1xi32> to vector<128x1xf32>
    %cst_24 = arith.constant 1.000000e+00 : f32
    %58 = vector.broadcast %cst_24 : f32 to vector<128x1xf32>
    %59 = arith.select %56, %57, %58 : vector<128x1xi1>, vector<128x1xf32>
    %60 = arith.divf %54, %59 : vector<128x1xf32>
    %61 = arith.subf %40, %60 : vector<128x1xf32>
    %cst_25 = arith.constant 0.000000e+00 : f32
    %62 = vector.broadcast %cst_25 : f32 to vector<128x1xf32>
    %63 = arith.select %56, %61, %62 : vector<128x1xi1>, vector<128x1xf32>
    %64 = vector.shape_cast %63 : vector<128x1xf32> to vector<1x128x1xf32>
    %cst_26 = arith.constant dense<0.000000e+00> : vector<1xf32>
    %65 = vector.multi_reduction <add>, %64, %cst_26 [1, 2] : vector<1x128x1xf32> to vector<1xf32>
    %66 = vector.shape_cast %65 : vector<1xf32> to vector<1x1x1xf32>
    %67 = vector.extract %66[0, 0, 0] : f32 from vector<1x1x1xf32>
    %68 = arith.extui %56 : vector<128x1xi1> to vector<128x1xi32>
    %69 = arith.sitofp %68 : vector<128x1xi32> to vector<128x1xf32>
    %70 = vector.shape_cast %69 : vector<128x1xf32> to vector<1x128x1xf32>
    %cst_27 = arith.constant dense<0.000000e+00> : vector<1xf32>
    %71 = vector.multi_reduction <add>, %70, %cst_27 [1, 2] : vector<1x128x1xf32> to vector<1xf32>
    %72 = vector.shape_cast %71 : vector<1xf32> to vector<1x1x1xf32>
    %73 = vector.extract %72[0, 0, 0] : f32 from vector<1x1x1xf32>
    %74 = tpu.iota {dimensions = array<i32: 0>} : vector<8x128xi32>
    %75 = tpu.iota {dimensions = array<i32: 1>} : vector<8x128xi32>
    %c0_i32 = arith.constant 0 : i32
    %76 = vector.broadcast %c0_i32 : i32 to vector<8x128xi32>
    %77 = arith.cmpi eq, %74, %76 : vector<8x128xi32>
    %c0_i32_28 = arith.constant 0 : i32
    %78 = vector.broadcast %c0_i32_28 : i32 to vector<8x128xi32>
    %79 = arith.cmpi eq, %75, %78 : vector<8x128xi32>
    %80 = arith.andi %77, %79 : vector<8x128xi1>
    %cst_29 = arith.constant 0.000000e+00 : f32
    %81 = vector.broadcast %32 : f32 to vector<8x128xf32>
    %82 = vector.broadcast %cst_29 : f32 to vector<8x128xf32>
    %83 = arith.select %80, %81, %82 : vector<8x128xi1>, vector<8x128xf32>
    %c0_i32_30 = arith.constant 0 : i32
    %84 = vector.broadcast %c0_i32_30 : i32 to vector<8x128xi32>
    %85 = arith.cmpi eq, %74, %84 : vector<8x128xi32>
    %c1_i32 = arith.constant 1 : i32
    %86 = vector.broadcast %c1_i32 : i32 to vector<8x128xi32>
    %87 = arith.cmpi eq, %75, %86 : vector<8x128xi32>
    %88 = arith.andi %85, %87 : vector<8x128xi1>
    %89 = vector.broadcast %67 : f32 to vector<8x128xf32>
    %90 = arith.select %88, %89, %83 : vector<8x128xi1>, vector<8x128xf32>
    %c0_i32_31 = arith.constant 0 : i32
    %91 = vector.broadcast %c0_i32_31 : i32 to vector<8x128xi32>
    %92 = arith.cmpi eq, %74, %91 : vector<8x128xi32>
    %c2_i32_32 = arith.constant 2 : i32
    %93 = vector.broadcast %c2_i32_32 : i32 to vector<8x128xi32>
    %94 = arith.cmpi eq, %75, %93 : vector<8x128xi32>
    %95 = arith.andi %92, %94 : vector<8x128xi1>
    %96 = vector.broadcast %73 : f32 to vector<8x128xf32>
    %97 = arith.select %95, %96, %90 : vector<8x128xi1>, vector<8x128xf32>
    %c0_33 = arith.constant 0 : index
    %c0_34 = arith.constant 0 : index
    %98 = vector.load %arg7[%c0_33, %c0_34] : memref<8x128xf32, #tpu.memory_space<vmem>>, vector<8x128xf32>
    tpu.vector_store %arg7[%c0_33, %c0_34], %97 {strides = array<i32>} : memref<8x128xf32, #tpu.memory_space<vmem>>, vector<8x128xf32>,
    return
  }
  func.func @transform_0(%arg0: i32) -> (i32, i32) {
    %c0_i32 = arith.constant 0 : i32
    %c0_i32_0 = arith.constant 0 : i32
    return %arg0, %c0_i32 : i32, i32
  }
  func.func @transform_1(%arg0: i32) -> (i32, i32) {
    %c0_i32 = arith.constant 0 : i32
    %c0_i32_0 = arith.constant 0 : i32
    %c0_i32_1 = arith.constant 0 : i32
    return %c0_i32, %c0_i32_0 : i32, i32
  }
  func.func @transform_2(%arg0: i32) -> (i32, i32) {
    %c0_i32 = arith.constant 0 : i32
    %c0_i32_0 = arith.constant 0 : i32
    return %arg0, %c0_i32 : i32, i32
  }
  func.func @transform_3(%arg0: i32) -> (i32, i32) {
    %c0_i32 = arith.constant 0 : i32
    %c0_i32_0 = arith.constant 0 : i32
    %c0_i32_1 = arith.constant 0 : i32
    return %c0_i32, %c0_i32_0 : i32, i32
  }
  func.func @transform_4(%arg0: i32) -> (i32, i32) {
    %c0_i32 = arith.constant 0 : i32
    %c0_i32_0 = arith.constant 0 : i32
    return %arg0, %c0_i32 : i32, i32
  }
  func.func @transform_5(%arg0: i32) -> (i32, i32) {
    %c0_i32 = arith.constant 0 : i32
    %c0_i32_0 = arith.constant 0 : i32
    %c0_i32_1 = arith.constant 0 : i32
    return %c0_i32, %c0_i32_0 : i32, i32
  }
  func.func @transform_6(%arg0: i32) -> (i32, i32) {
    %c0_i32 = arith.constant 0 : i32
    %c0_i32_0 = arith.constant 0 : i32
    return %arg0, %c0_i32 : i32, i32
  }
}

</mosaic_0001>

<llo_original>
// kernel: tpu_custom_call.1
$region0: #{tpu_custom_call.1}
  #allocation0 [shape = 'u32[]', space=smem, size = 0x4, offset = 0x4, fixed_abs, tag = 'smem constant byte address 0x4 - core index']
  #allocation1 [shape = 'u32[144,128]{1,0:T(1,128)}', space=vmem, size = 0x12000, scoped, tag = 'internal scratch']
  %s0 = inlined_call_operand.vmem [shape: bf16[256,32], index: 0, kind: input, shape index: {}]
  %s1 = inlined_call_operand.vmem [shape: bf16[32,256], index: 1, kind: input, shape index: {}]
  %s2 = inlined_call_operand.vmem [shape: s32[256,1], index: 2, kind: input, shape index: {}]
  %s3 = inlined_call_operand.vmem [shape: s32[1,256], index: 3, kind: input, shape index: {}]
  %s4 = inlined_call_operand.vmem [shape: f32[256,2], index: 4, kind: input, shape index: {}]
  %s5 = inlined_call_operand.vmem [shape: f32[2,256], index: 5, kind: input, shape index: {}]
  %s6 = inlined_call_operand.hbm [shape: f32[16,128], index: 6, kind: output, shape index: {}]
  %s7 = sld [smem:[#allocation0]]
  $region57: #{tpu_custom_call.1} parent=0
    _
  %s9 = ssub.s32 1, %s7
  %s10 = scalar_select 0, %s9, %s7
  $region1: #{tpu_custom_call.1} parent=0
    #allocation2 [shape = 'u8[8192]{0}', space=vmem, size = 0x2000, scoped, tag = 'output window, operand 0']
    #allocation3 [shape = 's32[2]{0}', space=sflag, size = 0x8, scoped, tag = 'scoped memory for tpu_custom_call.1']
    %11 = vsyncpa [#allocation3], 0
    %s12 = scalar_lea.sflag [#allocation3], 1
    %13 = vsyncpa %s12, 0
    loop: start=0, step=1, limit=4
    $region2: #{tpu_custom_call.1} parent=1 // loop_pre_header
      _
    $region3: #{tpu_custom_call.1} parent=1 // loop_header
      %s15 = sphi 0, %s19
      %p16 = scmp.ge.s32.totalorder %s15, 4
      %s25 = sphi 0, %s27
      %s28 = sphi 0, %s25
      %s29 = sphi 0, %s28
      %s45 = sphi 0, %s29
      %s49 = sphi 0, %s49
      %s51 = sphi 0, %s49
      %s52 = sphi 0, %s51
      %s66 = sphi 0, %s52
      %s72 = sphi 0, %s74
      %s75 = sphi 0, %s72
      %s76 = sphi 0, %s75
      %s92 = sphi 0, %s76
      %s96 = sphi 0, %s96
      %s98 = sphi 0, %s96
      %s99 = sphi 0, %s98
      %s113 = sphi 0, %s99
      %s119 = sphi 0, %s121
      %s122 = sphi 0, %s119
      %s123 = sphi 0, %s122
      %s139 = sphi 0, %s123
      %s143 = sphi 0, %s143
      %s145 = sphi 0, %s143
      %s146 = sphi 0, %s145
      %s160 = sphi 0, %s146
      %s166 = sphi 0, %s168
      %s169 = sphi 0, %s166
      %s170 = sphi 0, %s169
      %s186 = sphi 0, %s170
    $region4: #{tpu_custom_call.1} parent=1 // loop_header_branch
      %18 = sbr.rel (%p16) target = $region8
    $region5: #{tpu_custom_call.1} parent=1 // loop_body
      %s20 = ssub.s32 %s15, 1
      %s21 = ssub.s32 %s15, 2
      %s22 = sadd.s32 %s15, 1
      %s23 = ssub.s32 %s15, %s22
      %p24 = scmp.eq.s32.totalorder %s23, 0
      %s26 = sadd.s32 %s25, 1
      %s27 = scalar_select %p24, %s25, %s26
      %p30 = pneg %p24
      %p31 = scmp.eq.s32.totalorder %s15, 1
      %p32 = por %p30, %p31
      %p33 = scmp.ne.s32.totalorder %s25, %s28
      %p34 = scmp.eq.s32.totalorder %s15, 0
      %p35 = por %p33, %p34
      %p36 = scmp.ne.s32.totalorder %s25, %s28
      %p37 = scmp.eq.s32.totalorder %s20, 1
      %p38 = por %p36, %p37
      %p39 = scmp.ne.s32.totalorder %s28, %s29
      %p40 = scmp.eq.s32.totalorder %s20, 0
      %p41 = por %p39, %p40
      %p42 = scmp.ne.s32.totalorder %s28, %s29
      %p43 = scmp.eq.s32.totalorder %s21, 1
      %p44 = por %p42, %p43
      %p46 = scmp.ne.s32.totalorder %s29, %s45
      %p47 = scmp.eq.s32.totalorder %s21, 0
      %p48 = por %p46, %p47
      %s50 = sadd.s32 %s49, 1
      %p53 = scmp.eq.s32.totalorder %s15, 1
      %p54 = scmp.ne.s32.totalorder %s49, %s51
      %p55 = scmp.eq.s32.totalorder %s15, 0
      %p56 = por %p54, %p55
      %p57 = scmp.ne.s32.totalorder %s49, %s51
      %p58 = scmp.eq.s32.totalorder %s20, 1
      %p59 = por %p57, %p58
      %p60 = scmp.ne.s32.totalorder %s51, %s52
      %p61 = scmp.eq.s32.totalorder %s20, 0
      %p62 = por %p60, %p61
      %p63 = scmp.ne.s32.totalorder %s51, %s52
      %p64 = scmp.eq.s32.totalorder %s21, 1
      %p65 = por %p63, %p64
      %p67 = scmp.ne.s32.totalorder %s52, %s66
      %p68 = scmp.eq.s32.totalorder %s21, 0
      %p69 = por %p67, %p68
      %s70 = ssub.s32 %s15, %s22
      %p71 = scmp.eq.s32.totalorder %s70, 0
      %s73 = sadd.s32 %s72, 1
      %s74 = scalar_select %p71, %s72, %s73
      %p77 = pneg %p71
      %p78 = scmp.eq.s32.totalorder %s15, 1
      %p79 = por %p77, %p78
      %p80 = scmp.ne.s32.totalorder %s72, %s75
      %p81 = scmp.eq.s32.totalorder %s15, 0
      %p82 = por %p80, %p81
      %p83 = scmp.ne.s32.totalorder %s72, %s75
      %p84 = scmp.eq.s32.totalorder %s20, 1
      %p85 = por %p83, %p84
      %p86 = scmp.ne.s32.totalorder %s75, %s76
      %p87 = scmp.eq.s32.totalorder %s20, 0
      %p88 = por %p86, %p87
      %p89 = scmp.ne.s32.totalorder %s75, %s76
      %p90 = scmp.eq.s32.totalorder %s21, 1
      %p91 = por %p89, %p90
      %p93 = scmp.ne.s32.totalorder %s76, %s92
      %p94 = scmp.eq.s32.totalorder %s21, 0
      %p95 = por %p93, %p94
      %s97 = sadd.s32 %s96, 1
      %p100 = scmp.eq.s32.totalorder %s15, 1
      %p101 = scmp.ne.s32.totalorder %s96, %s98
      %p102 = scmp.eq.s32.totalorder %s15, 0
      %p103 = por %p101, %p102
      %p104 = scmp.ne.s32.totalorder %s96, %s98
      %p105 = scmp.eq.s32.totalorder %s20, 1
      %p106 = por %p104, %p105
      %p107 = scmp.ne.s32.totalorder %s98, %s99
      %p108 = scmp.eq.s32.totalorder %s20, 0
      %p109 = por %p107, %p108
      %p110 = scmp.ne.s32.totalorder %s98, %s99
      %p111 = scmp.eq.s32.totalorder %s21, 1
      %p112 = por %p110, %p111
      %p114 = scmp.ne.s32.totalorder %s99, %s113
      %p115 = scmp.eq.s32.totalorder %s21, 0
      %p116 = por %p114, %p115
      %s117 = ssub.s32 %s15, %s22
      %p118 = scmp.eq.s32.totalorder %s117, 0
      %s120 = sadd.s32 %s119, 1
      %s121 = scalar_select %p118, %s119, %s120
      %p124 = pneg %p118
      %p125 = scmp.eq.s32.totalorder %s15, 1
      %p126 = por %p124, %p125
      %p127 = scmp.ne.s32.totalorder %s119, %s122
      %p128 = scmp.eq.s32.totalorder %s15, 0
      %p129 = por %p127, %p128
      %p130 = scmp.ne.s32.totalorder %s119, %s122
      %p131 = scmp.eq.s32.totalorder %s20, 1
      %p132 = por %p130, %p131
      %p133 = scmp.ne.s32.totalorder %s122, %s123
      %p134 = scmp.eq.s32.totalorder %s20, 0
      %p135 = por %p133, %p134
      %p136 = scmp.ne.s32.totalorder %s122, %s123
      %p137 = scmp.eq.s32.totalorder %s21, 1
      %p138 = por %p136, %p137
      %p140 = scmp.ne.s32.totalorder %s123, %s139
      %p141 = scmp.eq.s32.totalorder %s21, 0
      %p142 = por %p140, %p141
      %s144 = sadd.s32 %s143, 1
      %p147 = scmp.eq.s32.totalorder %s15, 1
      %p148 = scmp.ne.s32.totalorder %s143, %s145
      %p149 = scmp.eq.s32.totalorder %s15, 0
      %p150 = por %p148, %p149
      %p151 = scmp.ne.s32.totalorder %s143, %s145
      %p152 = scmp.eq.s32.totalorder %s20, 1
      %p153 = por %p151, %p152
      %p154 = scmp.ne.s32.totalorder %s145, %s146
      %p155 = scmp.eq.s32.totalorder %s20, 0
      %p156 = por %p154, %p155
      %p157 = scmp.ne.s32.totalorder %s145, %s146
      %p158 = scmp.eq.s32.totalorder %s21, 1
      %p159 = por %p157, %p158
      %p161 = scmp.ne.s32.totalorder %s146, %s160
      %p162 = scmp.eq.s32.totalorder %s21, 0
      %p163 = por %p161, %p162
      %s164 = ssub.s32 %s15, %s22
      %p165 = scmp.eq.s32.totalorder %s164, 0
      %s167 = sadd.s32 %s166, 1
      %s168 = scalar_select %p165, %s166, %s167
      %p171 = pneg %p165
      %p172 = scmp.eq.s32.totalorder %s15, 1
      %p173 = por %p171, %p172
      %p174 = scmp.ne.s32.totalorder %s166, %s169
      %p175 = scmp.eq.s32.totalorder %s15, 0
      %p176 = por %p174, %p175
      %p177 = scmp.ne.s32.totalorder %s166, %s169
      %p178 = scmp.eq.s32.totalorder %s20, 1
      %p179 = por %p177, %p178
      %p180 = scmp.ne.s32.totalorder %s169, %s170
      %p181 = scmp.eq.s32.totalorder %s20, 0
      %p182 = por %p180, %p181
      %p183 = scmp.ne.s32.totalorder %s169, %s170
      %p184 = scmp.eq.s32.totalorder %s21, 1
      %p185 = por %p183, %p184
      %p187 = scmp.ne.s32.totalorder %s170, %s186
      %p188 = scmp.eq.s32.totalorder %s21, 0
      %p189 = por %p187, %p188
      %p190 = scmp.le.s32.totalorder 1, %s15
      %p191 = scmp.lt.s32.totalorder %s15, 3
      %p192 = pnand %p190, %p191
      %p193 = pneg %p192
      // Predicated region
      $region9: #{tpu_custom_call.1} parent=5 // pred_check
        _
      $region10: #{tpu_custom_call.1} parent=5 // pred_check_branch
        %195 = sbr.rel (%p192) target = $region12
      $region11: #{tpu_custom_call.1} parent=5 // pred_region
        %s196 = ssub.s32 %s15, 1
        // Predicated region
        $region13: #{tpu_custom_call.1} parent=11 // pred_check
          %p197 = pneg %p62
        $region14: #{tpu_custom_call.1} parent=11 // pred_check_branch
          %199 = sbr.rel (%p197) target = $region16
        $region15: #{tpu_custom_call.1} parent=11 // pred_region
          _
        $region16: #{tpu_custom_call.1} parent=11 // pred_fallthru
          _
        // Predicated region
        $region17: #{tpu_custom_call.1} parent=11 // pred_check
          %p200 = pneg %p109
        $region18: #{tpu_custom_call.1} parent=11 // pred_check_branch
          %202 = sbr.rel (%p200) target = $region20
        $region19: #{tpu_custom_call.1} parent=11 // pred_region
          _
        $region20: #{tpu_custom_call.1} parent=11 // pred_fallthru
          _
        // Predicated region
        $region21: #{tpu_custom_call.1} parent=11 // pred_check
          %p203 = pneg %p156
        $region22: #{tpu_custom_call.1} parent=11 // pred_check_branch
          %205 = sbr.rel (%p203) target = $region24
        $region23: #{tpu_custom_call.1} parent=11 // pred_region
          _
        $region24: #{tpu_custom_call.1} parent=11 // pred_fallthru
          _
      $region12: #{tpu_custom_call.1} parent=5 // pred_fallthru
        _
      %p206 = scmp.lt.s32.totalorder %s15, 2
      // Predicated region
      $region25: #{tpu_custom_call.1} parent=5 // pred_check
        %p207 = pneg %p206
      $region26: #{tpu_custom_call.1} parent=5 // pred_check_branch
        %209 = sbr.rel (%p207) target = $region28
      $region27: #{tpu_custom_call.1} parent=5 // pred_region
        // Predicated region
        $region29: #{tpu_custom_call.1} parent=27 // pred_check
          %p210 = pneg %p35
        $region30: #{tpu_custom_call.1} parent=27 // pred_check_branch
          %212 = sbr.rel (%p210) target = $region32
        $region31: #{tpu_custom_call.1} parent=27 // pred_region
          %s213 = smul.u32 16, %s15
          %p214 = scmp.lt.s32.totalorder %s213, 31
          %s215 = scalar_select %p214, %s213, 31
          %s216 = smul.addr %s215, 4
          %s217 = scalar_lea.vmem %s0, %s216
          %s218 = smul.u32 16, %s15
        $region32: #{tpu_custom_call.1} parent=27 // pred_fallthru
          _
        // Predicated region
        $region33: #{tpu_custom_call.1} parent=27 // pred_check
          %p219 = pneg %p82
        $region34: #{tpu_custom_call.1} parent=27 // pred_check_branch
          %221 = sbr.rel (%p219) target = $region36
        $region35: #{tpu_custom_call.1} parent=27 // pred_region
          %s222 = smul.u32 16, %s15
          %p223 = scmp.lt.s32.totalorder %s222, 31
          %s224 = scalar_select %p223, %s222, 31
          %s225 = smul.addr %s224, 8
          %s226 = scalar_lea.vmem %s2, %s225
          %s227 = smul.u32 16, %s15
        $region36: #{tpu_custom_call.1} parent=27 // pred_fallthru
          _
        // Predicated region
        $region37: #{tpu_custom_call.1} parent=27 // pred_check
          %p228 = pneg %p129
        $region38: #{tpu_custom_call.1} parent=27 // pred_check_branch
          %230 = sbr.rel (%p228) target = $region40
        $region39: #{tpu_custom_call.1} parent=27 // pred_region
          %s231 = smul.u32 16, %s15
          %p232 = scmp.lt.s32.totalorder %s231, 31
          %s233 = scalar_select %p232, %s231, 31
          %s234 = smul.addr %s233, 8
          %s235 = scalar_lea.vmem %s4, %s234
          %s236 = smul.u32 16, %s15
        $region40: #{tpu_custom_call.1} parent=27 // pred_fallthru
          _
      $region28: #{tpu_custom_call.1} parent=5 // pred_fallthru
        _
      %p237 = scmp.le.s32.totalorder 1, %s15
      %p238 = scmp.lt.s32.totalorder %s15, 3
      %p239 = pnand %p237, %p238
      %p240 = pneg %p239
      // Predicated region
      $region41: #{tpu_custom_call.1} parent=5 // pred_check
        _
      $region42: #{tpu_custom_call.1} parent=5 // pred_check_branch
        %242 = sbr.rel (%p239) target = $region44
      $region43: #{tpu_custom_call.1} parent=5 // pred_region
        %s243 = ssub.s32 %s15, 1
        %s244 = smul.u32 16, %s20
        %p245 = scmp.lt.s32.totalorder %s244, 31
        %s246 = scalar_select %p245, %s244, 31
        %s247 = smul.addr %s246, 4
        %s248 = scalar_lea.vmem %s0, %s247
        %p249 = pneg %p41
        %p250 = pneg %p38
        %p251 = pneg %p62
        %p252 = pneg %p59
        %s253 = smul.u32 16, %s20
        %p254 = scmp.lt.s32.totalorder %s253, 31
        %s255 = scalar_select %p254, %s253, 31
        %s256 = smul.addr %s255, 8
        %s257 = scalar_lea.vmem %s2, %s256
        %p258 = pneg %p88
        %p259 = pneg %p85
        %p260 = pneg %p109
        %p261 = pneg %p106
        %s262 = smul.u32 16, %s20
        %p263 = scmp.lt.s32.totalorder %s262, 31
        %s264 = scalar_select %p263, %s262, 31
        %s265 = smul.addr %s264, 8
        %s266 = scalar_lea.vmem %s4, %s265
        %p267 = pneg %p135
        %p268 = pneg %p132
        %p269 = pneg %p156
        %p270 = pneg %p153
        %p271 = pneg %p182
        %p272 = pneg %p179
        %s273 = sand.u32 %s169, 1
        %s274 = scalar_lea.sflag [#allocation3], %s273
        %s275 = sand.u32 %s169, 1
        %s276 = smul.addr %s275, 8
        %s277 = scalar_lea.vmem [#allocation2], %s276
        %s278 = smul.u32 16, %s20
        %p279 = scmp.lt.s32.totalorder %s278, 31
        %s280 = scalar_select %p279, %s278, 31
        %s281 = smul.addr %s280, 4
        %s282 = scalar_lea.vmem %s0, %s281
        %s283 = smul.u32 16, %s20
        %s284 = smul.u32 16, %s20
        %p285 = scmp.lt.s32.totalorder %s284, 31
        %s286 = scalar_select %p285, %s284, 31
        %s287 = smul.addr %s286, 8
        %s288 = scalar_lea.vmem %s2, %s287
        %s289 = smul.u32 16, %s20
        %s290 = smul.u32 16, %s20
        %p291 = scmp.lt.s32.totalorder %s290, 31
        %s292 = scalar_select %p291, %s290, 31
        %s293 = smul.addr %s292, 8
        %s294 = scalar_lea.vmem %s4, %s293
        %s295 = smul.u32 16, %s20
        %s297 = smul.u32 %s20, 128
        %v298 = vld [vmem:[%s282] sm:$0xf]
        %v299 = vld [vmem:[%s282 + $0x4] sm:$0xf]
        %v300 = vld [vmem:[%s282 + $0x8] sm:$0xf]
        %v301 = vld [vmem:[%s282 + $0xc] sm:$0xf]
        %v302 = vld [vmem:[%s282 + $0x10] sm:$0xf]
        %v303 = vld [vmem:[%s282 + $0x14] sm:$0xf]
        %v304 = vld [vmem:[%s282 + $0x18] sm:$0xf]
        %v305 = vld [vmem:[%s282 + $0x1c] sm:$0xf]
        %v306 = vld [vmem:[%s282 + $0x20] sm:$0xf]
        %v307 = vld [vmem:[%s282 + $0x24] sm:$0xf]
        %v308 = vld [vmem:[%s282 + $0x28] sm:$0xf]
        %v309 = vld [vmem:[%s282 + $0x2c] sm:$0xf]
        %v310 = vld [vmem:[%s282 + $0x30] sm:$0xf]
        %v311 = vld [vmem:[%s282 + $0x34] sm:$0xf]
        %v312 = vld [vmem:[%s282 + $0x38] sm:$0xf]
        %v313 = vld [vmem:[%s282 + $0x3c] sm:$0xf]
        %v314 = vld [vmem:[%s1] sm:$0xff]
        %v315 = vld [vmem:[%s1 + $0x8] sm:$0xff]
        %v316 = vld [vmem:[%s1 + $0x10] sm:$0xff]
        %v317 = vld [vmem:[%s1 + $0x18] sm:$0xff]
        %v334 = vunpack.c.l.b16 %v298
        %v335 = vunpack.c.l.b16 %v299
        %v336 = vunpack.c.l.b16 %v300
        %v337 = vunpack.c.l.b16 %v301
        %v338 = vunpack.c.l.b16 %v302
        %v339 = vunpack.c.l.b16 %v303
        %v340 = vunpack.c.l.b16 %v304
        %v341 = vunpack.c.l.b16 %v305
        %v342 = vunpack.c.l.b16 %v306
        %v343 = vunpack.c.l.b16 %v307
        %v344 = vunpack.c.l.b16 %v308
        %v345 = vunpack.c.l.b16 %v309
        %v346 = vunpack.c.l.b16 %v310
        %v347 = vunpack.c.l.b16 %v311
        %v348 = vunpack.c.l.b16 %v312
        %v349 = vunpack.c.l.b16 %v313
        %v350 = vpack.c.b16 %v335, %v334
        %v351 = vpack.c.b16 %v337, %v336
        %v352 = vpack.c.b16 %v339, %v338
        %v353 = vpack.c.b16 %v341, %v340
        %v354 = vpack.c.b16 %v343, %v342
        %v355 = vpack.c.b16 %v345, %v344
        %v356 = vpack.c.b16 %v347, %v346
        %v357 = vpack.c.b16 %v349, %v348
        %v362 = vunpack.c.l.b16 %v314
        %v363 = vunpack.c.h.b16 %v314
        %v364 = vunpack.c.l.b16 %v315
        %v365 = vunpack.c.h.b16 %v315
        %v366 = vunpack.c.l.b16 %v316
        %v367 = vunpack.c.h.b16 %v316
        %v368 = vunpack.c.l.b16 %v317
        %v369 = vunpack.c.h.b16 %v317
        %v370 = vpack.c.b16 %v364, %v362
        %v371 = vpack.c.b16 %v365, %v363
        %v372 = vpack.c.b16 %v368, %v366
        %v373 = vpack.c.b16 %v369, %v367
        %vm378 = vcmask 261120
        %v380 = vsel %vm378, %v350, 0
        %v383 = vsel %vm378, %v351, 0
        %v386 = vsel %vm378, %v352, 0
        %v389 = vsel %vm378, %v353, 0
        %v392 = vsel %vm378, %v354, 0
        %v395 = vsel %vm378, %v355, 0
        %v398 = vsel %vm378, %v356, 0
        %v401 = vsel %vm378, %v357, 0
        %403 = vmatprep.subr.bf16.mxu0 0
        %404 = vmatpush1.bf16.msra.mxu0 0
        %405 = vmatprep.subr.bf16.mxu0 0
        %406 = vmatpush1.bf16.msra.mxu0 0
        %407 = vmatprep.subr.bf16.mxu0 0
        %408 = vmatpush1.bf16.msra.mxu0 0
        %409 = vmatprep.subr.bf16.mxu0 0
        %410 = vmatpush1.bf16.msra.mxu0 0
        %411 = vmatprep.subr.bf16.mxu0 0
        %412 = vmatpush1.bf16.msra.mxu0 0
        %413 = vmatprep.subr.bf16.mxu0 0
        %414 = vmatpush1.bf16.msra.mxu0 0
        %415 = vmatprep.subr.bf16.mxu0 %v373
        %416 = vmatpush1.bf16.msra.mxu0 %v372
        %417 = vmatprep.subr.bf16.mxu0 %v371
        %418 = vmatpush1.bf16.msra.mxu0 %v370
        %419 = vmatprep.subr.bf16.mxu0 0
        %420 = vmatpush2.bf16.msra.mxu0 0
        %421 = vmatprep.subr.bf16.mxu0 0
        %422 = vmatpush2.bf16.msra.mxu0 0
        %423 = vmatprep.subr.bf16.mxu0 0
        %424 = vmatpush2.bf16.msra.mxu0 0
        %425 = vmatprep.subr.bf16.mxu0 0
        %426 = vmatpush2.bf16.msra.mxu0 0
        %427 = vmatprep.subr.bf16.mxu0 0
        %428 = vmatpush2.bf16.msra.mxu0 0
        %429 = vmatprep.subr.bf16.mxu0 0
        %430 = vmatpush2.bf16.msra.mxu0 0
        %431 = vmatprep.subr.bf16.mxu0 0
        %432 = vmatpush2.bf16.msra.mxu0 0
        %433 = vmatprep.subr.bf16.mxu0 0
        %434 = vmatpush2.bf16.msra.mxu0 0
        %435 = vmatprep.mubr.bf16.mxu0 0
        %436 = vmatmul.mubr.bf16.gmra.mxu0 %v380
        %v437 = vpop.f32.mrf.mxu0
        %v438 = vadd.f32 0.0, %v437
        %v439 = vpop.f32.mrf.mxu0
        %v440 = vadd.f32 0.0, %v439
        %v441 = vpop.f32.mrf.mxu0
        %v442 = vadd.f32 0.0, %v441
        %v443 = vpop.f32.mrf.mxu0
        %v444 = vadd.f32 0.0, %v443
        %445 = vmatprep.mubr.bf16.mxu0 0
        %446 = vmatmul.mubr.bf16.gmra.mxu0 %v383
        %v447 = vpop.f32.mrf.mxu0
        %v448 = vadd.f32 0.0, %v447
        %v449 = vpop.f32.mrf.mxu0
        %v450 = vadd.f32 0.0, %v449
        %v451 = vpop.f32.mrf.mxu0
        %v452 = vadd.f32 0.0, %v451
        %v453 = vpop.f32.mrf.mxu0
        %v454 = vadd.f32 0.0, %v453
        %455 = vmatprep.mubr.bf16.mxu0 0
        %456 = vmatmul.mubr.bf16.gmra.mxu0 %v386
        %v457 = vpop.f32.mrf.mxu0
        %v458 = vadd.f32 0.0, %v457
        %v459 = vpop.f32.mrf.mxu0
        %v460 = vadd.f32 0.0, %v459
        %v461 = vpop.f32.mrf.mxu0
        %v462 = vadd.f32 0.0, %v461
        %v463 = vpop.f32.mrf.mxu0
        %v464 = vadd.f32 0.0, %v463
        %465 = vmatprep.mubr.bf16.mxu0 0
        %466 = vmatmul.mubr.bf16.gmra.mxu0 %v389
        %v467 = vpop.f32.mrf.mxu0
        %v468 = vadd.f32 0.0, %v467
        %v469 = vpop.f32.mrf.mxu0
        %v470 = vadd.f32 0.0, %v469
        %v471 = vpop.f32.mrf.mxu0
        %v472 = vadd.f32 0.0, %v471
        %v473 = vpop.f32.mrf.mxu0
        %v474 = vadd.f32 0.0, %v473
        %475 = vmatprep.mubr.bf16.mxu0 0
        %476 = vmatmul.mubr.bf16.gmra.mxu0 %v392
        %v477 = vpop.f32.mrf.mxu0
        %v478 = vadd.f32 0.0, %v477
        %v479 = vpop.f32.mrf.mxu0
        %v480 = vadd.f32 0.0, %v479
        %v481 = vpop.f32.mrf.mxu0
        %v482 = vadd.f32 0.0, %v481
        %v483 = vpop.f32.mrf.mxu0
        %v484 = vadd.f32 0.0, %v483
        %485 = vmatprep.mubr.bf16.mxu0 0
        %486 = vmatmul.mubr.bf16.gmra.mxu0 %v395
        %v487 = vpop.f32.mrf.mxu0
        %v488 = vadd.f32 0.0, %v487
        %v489 = vpop.f32.mrf.mxu0
        %v490 = vadd.f32 0.0, %v489
        %v491 = vpop.f32.mrf.mxu0
        %v492 = vadd.f32 0.0, %v491
        %v493 = vpop.f32.mrf.mxu0
        %v494 = vadd.f32 0.0, %v493
        %495 = vmatprep.mubr.bf16.mxu0 0
        %496 = vmatmul.mubr.bf16.gmra.mxu0 %v398
        %v497 = vpop.f32.mrf.mxu0
        %v498 = vadd.f32 0.0, %v497
        %v499 = vpop.f32.mrf.mxu0
        %v500 = vadd.f32 0.0, %v499
        %v501 = vpop.f32.mrf.mxu0
        %v502 = vadd.f32 0.0, %v501
        %v503 = vpop.f32.mrf.mxu0
        %v504 = vadd.f32 0.0, %v503
        %505 = vmatprep.mubr.bf16.mxu0 0
        %506 = vmatmul.mubr.bf16.gmra.mxu0 %v401
        %v507 = vpop.f32.mrf.mxu0
        %v508 = vadd.f32 0.0, %v507
        %v509 = vpop.f32.mrf.mxu0
        %v510 = vadd.f32 0.0, %v509
        %v511 = vpop.f32.mrf.mxu0
        %v512 = vadd.f32 0.0, %v511
        %v513 = vpop.f32.mrf.mxu0
        %v514 = vadd.f32 0.0, %v513
        %515 = vdwg.mxu0
        %v516 = vld [vmem:[%s5] ss:$2 sm:$0x3]
        %s517 = scalar_lea.vmem %s5, 1
        %v518 = vld [vmem:[%s517] ss:$2 sm:$0x3]
        %v519 = vmul.f32 %v438, 10.0
        %v520 = vmul.f32 %v440, 10.0
        %v521 = vmul.f32 %v442, 10.0
        %v522 = vmul.f32 %v444, 10.0
        %v523 = vmul.f32 %v448, 10.0
        %v524 = vmul.f32 %v450, 10.0
        %v525 = vmul.f32 %v452, 10.0
        %v526 = vmul.f32 %v454, 10.0
        %v527 = vmul.f32 %v458, 10.0
        %v528 = vmul.f32 %v460, 10.0
        %v529 = vmul.f32 %v462, 10.0
        %v530 = vmul.f32 %v464, 10.0
        %v531 = vmul.f32 %v468, 10.0
        %v532 = vmul.f32 %v470, 10.0
        %v533 = vmul.f32 %v472, 10.0
        %v534 = vmul.f32 %v474, 10.0
        %v535 = vmul.f32 %v478, 10.0
        %v536 = vmul.f32 %v480, 10.0
        %v537 = vmul.f32 %v482, 10.0
        %v538 = vmul.f32 %v484, 10.0
        %v539 = vmul.f32 %v488, 10.0
        %v540 = vmul.f32 %v490, 10.0
        %v541 = vmul.f32 %v492, 10.0
        %v542 = vmul.f32 %v494, 10.0
        %v543 = vmul.f32 %v498, 10.0
        %v544 = vmul.f32 %v500, 10.0
        %v545 = vmul.f32 %v502, 10.0
        %v546 = vmul.f32 %v504, 10.0
        %v547 = vmul.f32 %v508, 10.0
        %v548 = vmul.f32 %v510, 10.0
        %v549 = vmul.f32 %v512, 10.0
        %v550 = vmul.f32 %v514, 10.0
        %v552 = vlaneseq
        %v553 = vshrl.u32 %v552, 7
        %v554 = vsub.s32 0, %v553
        %v555 = vrot.slane %v516, %v554
        %v556 = vlaneseq
        %v557 = vshrl.u32 %v556, 7
        %v558 = vsub.s32 1, %v557
        %v559 = vrot.slane %v516, %v558
        %v562 = vadd.f32 %v519, %v555
        %v563 = vadd.f32 %v520, %v559
        %v564 = vadd.f32 %v521, %v555
        %v565 = vadd.f32 %v522, %v559
        %v566 = vadd.f32 %v523, %v555
        %v567 = vadd.f32 %v524, %v559
        %v568 = vadd.f32 %v525, %v555
        %v569 = vadd.f32 %v526, %v559
        %v570 = vadd.f32 %v527, %v555
        %v571 = vadd.f32 %v528, %v559
        %v572 = vadd.f32 %v529, %v555
        %v573 = vadd.f32 %v530, %v559
        %v574 = vadd.f32 %v531, %v555
        %v575 = vadd.f32 %v532, %v559
        %v576 = vadd.f32 %v533, %v555
        %v577 = vadd.f32 %v534, %v559
        %v578 = vadd.f32 %v535, %v555
        %v579 = vadd.f32 %v536, %v559
        %v580 = vadd.f32 %v537, %v555
        %v581 = vadd.f32 %v538, %v559
        %v582 = vadd.f32 %v539, %v555
        %v583 = vadd.f32 %v540, %v559
        %v584 = vadd.f32 %v541, %v555
        %v585 = vadd.f32 %v542, %v559
        %v586 = vadd.f32 %v543, %v555
        %v587 = vadd.f32 %v544, %v559
        %v588 = vadd.f32 %v545, %v555
        %v589 = vadd.f32 %v546, %v559
        %v590 = vadd.f32 %v547, %v555
        %v591 = vadd.f32 %v548, %v559
        %v592 = vadd.f32 %v549, %v555
        %v593 = vadd.f32 %v550, %v559
        %v594 = vlaneseq
        %v595 = vand.u32 %v594, 127
        %v596 = vadd.s32 %v595, 128
        %v597 = vlaneseq
        %v598 = vshrl.u32 %v597, 7
        %v599 = vadd.s32 %v598, 8
        %v600 = vadd.s32 %v598, 16
        %v601 = vadd.s32 %v598, 24
        %v602 = vadd.s32 %v598, 32
        %v603 = vadd.s32 %v598, 40
        %v604 = vadd.s32 %v598, 48
        %v605 = vadd.s32 %v598, 56
        %v606 = vadd.s32 %v598, 64
        %v607 = vadd.s32 %v598, 72
        %v608 = vadd.s32 %v598, 80
        %v609 = vadd.s32 %v598, 88
        %v610 = vadd.s32 %v598, 96
        %v611 = vadd.s32 %v598, 104
        %v612 = vadd.s32 %v598, 112
        %v613 = vadd.s32 %v598, 120
        %v614 = vstv %s297
        %v615 = vadd.s32 %v598, %v614
        %v616 = vadd.s32 %v599, %v614
        %v617 = vadd.s32 %v600, %v614
        %v618 = vadd.s32 %v601, %v614
        %v619 = vadd.s32 %v602, %v614
        %v620 = vadd.s32 %v603, %v614
        %v621 = vadd.s32 %v604, %v614
        %v622 = vadd.s32 %v605, %v614
        %v623 = vadd.s32 %v606, %v614
        %v624 = vadd.s32 %v607, %v614
        %v625 = vadd.s32 %v608, %v614
        %v626 = vadd.s32 %v609, %v614
        %v627 = vadd.s32 %v610, %v614
        %v628 = vadd.s32 %v611, %v614
        %v629 = vadd.s32 %v612, %v614
        %v630 = vadd.s32 %v613, %v614
        %vm631 = vcmp.eq.s32.totalorder %v595, %v615
        %vm632 = vcmp.eq.s32.totalorder %v596, %v615
        %vm633 = vcmp.eq.s32.totalorder %v595, %v616
        %vm634 = vcmp.eq.s32.totalorder %v596, %v616
        %vm635 = vcmp.eq.s32.totalorder %v595, %v617
        %vm636 = vcmp.eq.s32.totalorder %v596, %v617
        %vm637 = vcmp.eq.s32.totalorder %v595, %v618
        %vm638 = vcmp.eq.s32.totalorder %v596, %v618
        %vm639 = vcmp.eq.s32.totalorder %v595, %v619
        %vm640 = vcmp.eq.s32.totalorder %v596, %v619
        %vm641 = vcmp.eq.s32.totalorder %v595, %v620
        %vm642 = vcmp.eq.s32.totalorder %v596, %v620
        %vm643 = vcmp.eq.s32.totalorder %v595, %v621
        %vm644 = vcmp.eq.s32.totalorder %v596, %v621
        %vm645 = vcmp.eq.s32.totalorder %v595, %v622
        %vm646 = vcmp.eq.s32.totalorder %v596, %v622
        %vm647 = vcmp.eq.s32.totalorder %v595, %v623
        %vm648 = vcmp.eq.s32.totalorder %v596, %v623
        %vm649 = vcmp.eq.s32.totalorder %v595, %v624
        %vm650 = vcmp.eq.s32.totalorder %v596, %v624
        %vm651 = vcmp.eq.s32.totalorder %v595, %v625
        %vm652 = vcmp.eq.s32.totalorder %v596, %v625
        %vm653 = vcmp.eq.s32.totalorder %v595, %v626
        %vm654 = vcmp.eq.s32.totalorder %v596, %v626
        %vm655 = vcmp.eq.s32.totalorder %v595, %v627
        %vm656 = vcmp.eq.s32.totalorder %v596, %v627
        %vm657 = vcmp.eq.s32.totalorder %v595, %v628
        %vm658 = vcmp.eq.s32.totalorder %v596, %v628
        %vm659 = vcmp.eq.s32.totalorder %v595, %v629
        %vm660 = vcmp.eq.s32.totalorder %v596, %v629
        %vm661 = vcmp.eq.s32.totalorder %v595, %v630
        %vm662 = vcmp.eq.s32.totalorder %v596, %v630
        %v663 = vsel %vm631, -1e+30, %v562
        %v664 = vsel %vm632, -1e+30, %v563
        %v665 = vsel %vm633, -1e+30, %v564
        %v666 = vsel %vm634, -1e+30, %v565
        %v667 = vsel %vm635, -1e+30, %v566
        %v668 = vsel %vm636, -1e+30, %v567
        %v669 = vsel %vm637, -1e+30, %v568
        %v670 = vsel %vm638, -1e+30, %v569
        %v671 = vsel %vm639, -1e+30, %v570
        %v672 = vsel %vm640, -1e+30, %v571
        %v673 = vsel %vm641, -1e+30, %v572
        %v674 = vsel %vm642, -1e+30, %v573
        %v675 = vsel %vm643, -1e+30, %v574
        %v676 = vsel %vm644, -1e+30, %v575
        %v677 = vsel %vm645, -1e+30, %v576
        %v678 = vsel %vm646, -1e+30, %v577
        %v679 = vsel %vm647, -1e+30, %v578
        %v680 = vsel %vm648, -1e+30, %v579
        %v681 = vsel %vm649, -1e+30, %v580
        %v682 = vsel %vm650, -1e+30, %v581
        %v683 = vsel %vm651, -1e+30, %v582
        %v684 = vsel %vm652, -1e+30, %v583
        %v685 = vsel %vm653, -1e+30, %v584
        %v686 = vsel %vm654, -1e+30, %v585
        %v687 = vsel %vm655, -1e+30, %v586
        %v688 = vsel %vm656, -1e+30, %v587
        %v689 = vsel %vm657, -1e+30, %v588
        %v690 = vsel %vm658, -1e+30, %v589
        %v691 = vsel %vm659, -1e+30, %v590
        %v692 = vsel %vm660, -1e+30, %v591
        %v693 = vsel %vm661, -1e+30, %v592
        %v694 = vsel %vm662, -1e+30, %v593
        %v695 = vmax.f32 %v663, %v664
        %696 = vmax.xlane.f32.xlu0 %v695
        %v697 = vpop.xlane.xlu0 %696
        %v698 = vmax.f32 %v665, %v666
        %699 = vmax.xlane.f32.xlu0 %v698
        %v700 = vpop.xlane.xlu0 %699
        %v701 = vmax.f32 %v667, %v668
        %702 = vmax.xlane.f32.xlu0 %v701
        %v703 = vpop.xlane.xlu0 %702
        %v704 = vmax.f32 %v669, %v670
        %705 = vmax.xlane.f32.xlu0 %v704
        %v706 = vpop.xlane.xlu0 %705
        %v707 = vmax.f32 %v671, %v672
        %708 = vmax.xlane.f32.xlu0 %v707
        %v709 = vpop.xlane.xlu0 %708
        %v710 = vmax.f32 %v673, %v674
        %711 = vmax.xlane.f32.xlu0 %v710
        %v712 = vpop.xlane.xlu0 %711
        %v713 = vmax.f32 %v675, %v676
        %714 = vmax.xlane.f32.xlu0 %v713
        %v715 = vpop.xlane.xlu0 %714
        %v716 = vmax.f32 %v677, %v678
        %717 = vmax.xlane.f32.xlu0 %v716
        %v718 = vpop.xlane.xlu0 %717
        %v719 = vmax.f32 %v679, %v680
        %720 = vmax.xlane.f32.xlu0 %v719
        %v721 = vpop.xlane.xlu0 %720
        %v722 = vmax.f32 %v681, %v682
        %723 = vmax.xlane.f32.xlu0 %v722
        %v724 = vpop.xlane.xlu0 %723
        %v725 = vmax.f32 %v683, %v684
        %726 = vmax.xlane.f32.xlu0 %v725
        %v727 = vpop.xlane.xlu0 %726
        %v728 = vmax.f32 %v685, %v686
        %729 = vmax.xlane.f32.xlu0 %v728
        %v730 = vpop.xlane.xlu0 %729
        %v731 = vmax.f32 %v687, %v688
        %732 = vmax.xlane.f32.xlu0 %v731
        %v733 = vpop.xlane.xlu0 %732
        %v734 = vmax.f32 %v689, %v690
        %735 = vmax.xlane.f32.xlu0 %v734
        %v736 = vpop.xlane.xlu0 %735
        %v737 = vmax.f32 %v691, %v692
        %738 = vmax.xlane.f32.xlu0 %v737
        %v739 = vpop.xlane.xlu0 %738
        %v740 = vmax.f32 %v693, %v694
        %741 = vmax.xlane.f32.xlu0 %v740
        %v742 = vpop.xlane.xlu0 %741
        %v743 = vsub.f32 %v663, %v697
        %v744 = vsub.f32 %v664, %v697
        %v745 = vsub.f32 %v665, %v700
        %v746 = vsub.f32 %v666, %v700
        %v747 = vsub.f32 %v667, %v703
        %v748 = vsub.f32 %v668, %v703
        %v749 = vsub.f32 %v669, %v706
        %v750 = vsub.f32 %v670, %v706
        %v751 = vsub.f32 %v671, %v709
        %v752 = vsub.f32 %v672, %v709
        %v753 = vsub.f32 %v673, %v712
        %v754 = vsub.f32 %v674, %v712
        %v755 = vsub.f32 %v675, %v715
        %v756 = vsub.f32 %v676, %v715
        %v757 = vsub.f32 %v677, %v718
        %v758 = vsub.f32 %v678, %v718
        %v759 = vsub.f32 %v679, %v721
        %v760 = vsub.f32 %v680, %v721
        %v761 = vsub.f32 %v681, %v724
        %v762 = vsub.f32 %v682, %v724
        %v763 = vsub.f32 %v683, %v727
        %v764 = vsub.f32 %v684, %v727
        %v765 = vsub.f32 %v685, %v730
        %v766 = vsub.f32 %v686, %v730
        %v767 = vsub.f32 %v687, %v733
        %v768 = vsub.f32 %v688, %v733
        %v769 = vsub.f32 %v689, %v736
        %v770 = vsub.f32 %v690, %v736
        %v771 = vsub.f32 %v691, %v739
        %v772 = vsub.f32 %v692, %v739
        %v773 = vsub.f32 %v693, %v742
        %v774 = vsub.f32 %v694, %v742
        %v775 = vmul.f32 %v743, 1.442695
        %v776 = vpow.pop %v775
        %v777 = vmul.f32 %v744, 1.442695
        %v778 = vpow.pop %v777
        %v779 = vmul.f32 %v745, 1.442695
        %v780 = vpow.pop %v779
        %v781 = vmul.f32 %v746, 1.442695
        %v782 = vpow.pop %v781
        %v783 = vmul.f32 %v747, 1.442695
        %v784 = vpow.pop %v783
        %v785 = vmul.f32 %v748, 1.442695
        %v786 = vpow.pop %v785
        %v787 = vmul.f32 %v749, 1.442695
        %v788 = vpow.pop %v787
        %v789 = vmul.f32 %v750, 1.442695
        %v790 = vpow.pop %v789
        %v791 = vmul.f32 %v751, 1.442695
        %v792 = vpow.pop %v791
        %v793 = vmul.f32 %v752, 1.442695
        %v794 = vpow.pop %v793
        %v795 = vmul.f32 %v753, 1.442695
        %v796 = vpow.pop %v795
        %v797 = vmul.f32 %v754, 1.442695
        %v798 = vpow.pop %v797
        %v799 = vmul.f32 %v755, 1.442695
        %v800 = vpow.pop %v799
        %v801 = vmul.f32 %v756, 1.442695
        %v802 = vpow.pop %v801
        %v803 = vmul.f32 %v757, 1.442695
        %v804 = vpow.pop %v803
        %v805 = vmul.f32 %v758, 1.442695
        %v806 = vpow.pop %v805
        %v807 = vmul.f32 %v759, 1.442695
        %v808 = vpow.pop %v807
        %v809 = vmul.f32 %v760, 1.442695
        %v810 = vpow.pop %v809
        %v811 = vmul.f32 %v761, 1.442695
        %v812 = vpow.pop %v811
        %v813 = vmul.f32 %v762, 1.442695
        %v814 = vpow.pop %v813
        %v815 = vmul.f32 %v763, 1.442695
        %v816 = vpow.pop %v815
        %v817 = vmul.f32 %v764, 1.442695
        %v818 = vpow.pop %v817
        %v819 = vmul.f32 %v765, 1.442695
        %v820 = vpow.pop %v819
        %v821 = vmul.f32 %v766, 1.442695
        %v822 = vpow.pop %v821
        %v823 = vmul.f32 %v767, 1.442695
        %v824 = vpow.pop %v823
        %v825 = vmul.f32 %v768, 1.442695
        %v826 = vpow.pop %v825
        %v827 = vmul.f32 %v769, 1.442695
        %v828 = vpow.pop %v827
        %v829 = vmul.f32 %v770, 1.442695
        %v830 = vpow.pop %v829
        %v831 = vmul.f32 %v771, 1.442695
        %v832 = vpow.pop %v831
        %v833 = vmul.f32 %v772, 1.442695
        %v834 = vpow.pop %v833
        %v835 = vmul.f32 %v773, 1.442695
        %v836 = vpow.pop %v835
        %v837 = vmul.f32 %v774, 1.442695
        %v838 = vpow.pop %v837
        %v839 = vld [vmem:[%s294] sm:$0xff]
        %v840 = vld [vmem:[%s294 + $0x8] sm:$0xff]
        %v841 = vld [vmem:[%s294 + $0x10] sm:$0xff]
        %v842 = vld [vmem:[%s294 + $0x18] sm:$0xff]
        %v843 = vld [vmem:[%s294 + $0x20] sm:$0xff]
        %v844 = vld [vmem:[%s294 + $0x28] sm:$0xff]
        %v845 = vld [vmem:[%s294 + $0x30] sm:$0xff]
        %v846 = vld [vmem:[%s294 + $0x38] sm:$0xff]
        %v847 = vld [vmem:[%s294 + $0x40] sm:$0xff]
        %v848 = vld [vmem:[%s294 + $0x48] sm:$0xff]
        %v849 = vld [vmem:[%s294 + $0x50] sm:$0xff]
        %v850 = vld [vmem:[%s294 + $0x58] sm:$0xff]
        %v851 = vld [vmem:[%s294 + $0x60] sm:$0xff]
        %v852 = vld [vmem:[%s294 + $0x68] sm:$0xff]
        %v853 = vld [vmem:[%s294 + $0x70] sm:$0xff]
        %v854 = vld [vmem:[%s294 + $0x78] sm:$0xff]
        %v855 = vadd.f32 %v776, %v778
        %856 = vadd.xlane.f32.xlu0 %v855
        %v857 = vpop.xlane.xlu0 %856
        %v858 = vadd.f32 %v780, %v782
        %859 = vadd.xlane.f32.xlu0 %v858
        %v860 = vpop.xlane.xlu0 %859
        %v861 = vadd.f32 %v784, %v786
        %862 = vadd.xlane.f32.xlu0 %v861
        %v863 = vpop.xlane.xlu0 %862
        %v864 = vadd.f32 %v788, %v790
        %865 = vadd.xlane.f32.xlu0 %v864
        %v866 = vpop.xlane.xlu0 %865
        %v867 = vadd.f32 %v792, %v794
        %868 = vadd.xlane.f32.xlu0 %v867
        %v869 = vpop.xlane.xlu0 %868
        %v870 = vadd.f32 %v796, %v798
        %871 = vadd.xlane.f32.xlu0 %v870
        %v872 = vpop.xlane.xlu0 %871
        %v873 = vadd.f32 %v800, %v802
        %874 = vadd.xlane.f32.xlu0 %v873
        %v875 = vpop.xlane.xlu0 %874
        %v876 = vadd.f32 %v804, %v806
        %877 = vadd.xlane.f32.xlu0 %v876
        %v878 = vpop.xlane.xlu0 %877
        %v879 = vadd.f32 %v808, %v810
        %880 = vadd.xlane.f32.xlu0 %v879
        %v881 = vpop.xlane.xlu0 %880
        %v882 = vadd.f32 %v812, %v814
        %883 = vadd.xlane.f32.xlu0 %v882
        %v884 = vpop.xlane.xlu0 %883
        %v885 = vadd.f32 %v816, %v818
        %886 = vadd.xlane.f32.xlu0 %v885
        %v887 = vpop.xlane.xlu0 %886
        %v888 = vadd.f32 %v820, %v822
        %889 = vadd.xlane.f32.xlu0 %v888
        %v890 = vpop.xlane.xlu0 %889
        %v891 = vadd.f32 %v824, %v826
        %892 = vadd.xlane.f32.xlu0 %v891
        %v893 = vpop.xlane.xlu0 %892
        %v894 = vadd.f32 %v828, %v830
        %895 = vadd.xlane.f32.xlu0 %v894
        %v896 = vpop.xlane.xlu0 %895
        %v897 = vadd.f32 %v832, %v834
        %898 = vadd.xlane.f32.xlu0 %v897
        %v899 = vpop.xlane.xlu0 %898
        %v900 = vadd.f32 %v836, %v838
        %901 = vadd.xlane.f32.xlu0 %v900
        %v902 = vpop.xlane.xlu0 %901
        %v903 = vlog2.pop %v857
        %v904 = vmul.f32 %v903, 0.6931472
        %v905 = vlog2.pop %v860
        %v906 = vmul.f32 %v905, 0.6931472
        %v907 = vlog2.pop %v863
        %v908 = vmul.f32 %v907, 0.6931472
        %v909 = vlog2.pop %v866
        %v910 = vmul.f32 %v909, 0.6931472
        %v911 = vlog2.pop %v869
        %v912 = vmul.f32 %v911, 0.6931472
        %v913 = vlog2.pop %v872
        %v914 = vmul.f32 %v913, 0.6931472
        %v915 = vlog2.pop %v875
        %v916 = vmul.f32 %v915, 0.6931472
        %v917 = vlog2.pop %v878
        %v918 = vmul.f32 %v917, 0.6931472
        %v919 = vlog2.pop %v881
        %v920 = vmul.f32 %v919, 0.6931472
        %v921 = vlog2.pop %v884
        %v922 = vmul.f32 %v921, 0.6931472
        %v923 = vlog2.pop %v887
        %v924 = vmul.f32 %v923, 0.6931472
        %v925 = vlog2.pop %v890
        %v926 = vmul.f32 %v925, 0.6931472
        %v927 = vlog2.pop %v893
        %v928 = vmul.f32 %v927, 0.6931472
        %v929 = vlog2.pop %v896
        %v930 = vmul.f32 %v929, 0.6931472
        %v931 = vlog2.pop %v899
        %v932 = vmul.f32 %v931, 0.6931472
        %v933 = vlog2.pop %v902
        %v934 = vmul.f32 %v933, 0.6931472
        %v935 = vadd.f32 %v697, %v904
        %v936 = vadd.f32 %v700, %v906
        %v937 = vadd.f32 %v703, %v908
        %v938 = vadd.f32 %v706, %v910
        %v939 = vadd.f32 %v709, %v912
        %v940 = vadd.f32 %v712, %v914
        %v941 = vadd.f32 %v715, %v916
        %v942 = vadd.f32 %v718, %v918
        %v943 = vadd.f32 %v721, %v920
        %v944 = vadd.f32 %v724, %v922
        %v945 = vadd.f32 %v727, %v924
        %v946 = vadd.f32 %v730, %v926
        %v947 = vadd.f32 %v733, %v928
        %v948 = vadd.f32 %v736, %v930
        %v949 = vadd.f32 %v739, %v932
        %v950 = vadd.f32 %v742, %v934
        %v951 = vmul.f32 %v935, %v839
        %v952 = vmul.f32 %v936, %v840
        %v953 = vmul.f32 %v937, %v841
        %v954 = vmul.f32 %v938, %v842
        %v955 = vmul.f32 %v939, %v843
        %v956 = vmul.f32 %v940, %v844
        %v957 = vmul.f32 %v941, %v845
        %v958 = vmul.f32 %v942, %v846
        %v959 = vmul.f32 %v943, %v847
        %v960 = vmul.f32 %v944, %v848
        %v961 = vmul.f32 %v945, %v849
        %v962 = vmul.f32 %v946, %v850
        %v963 = vmul.f32 %v947, %v851
        %v964 = vmul.f32 %v948, %v852
        %v965 = vmul.f32 %v949, %v853
        %v966 = vmul.f32 %v950, %v854
        %vm967 = vcmask 7168
        %v968 = vsel %vm967, %v951, 0.0
        %v969 = vsel %vm967, %v952, 0.0
        %v970 = vadd.f32 %v968, %v969
        %v971 = vsel %vm967, %v953, 0.0
        %v972 = vadd.f32 %v970, %v971
        %v973 = vsel %vm967, %v954, 0.0
        %v974 = vadd.f32 %v972, %v973
        %v975 = vsel %vm967, %v955, 0.0
        %v976 = vadd.f32 %v974, %v975
        %v977 = vsel %vm967, %v956, 0.0
        %v978 = vadd.f32 %v976, %v977
        %v979 = vsel %vm967, %v957, 0.0
        %v980 = vadd.f32 %v978, %v979
        %v981 = vsel %vm967, %v958, 0.0
        %v982 = vadd.f32 %v980, %v981
        %v983 = vsel %vm967, %v959, 0.0
        %v984 = vadd.f32 %v982, %v983
        %v985 = vsel %vm967, %v960, 0.0
        %v986 = vadd.f32 %v984, %v985
        %v987 = vsel %vm967, %v961, 0.0
        %v988 = vadd.f32 %v986, %v987
        %v989 = vsel %vm967, %v962, 0.0
        %v990 = vadd.f32 %v988, %v989
        %v991 = vsel %vm967, %v963, 0.0
        %v992 = vadd.f32 %v990, %v991
        %v993 = vsel %vm967, %v964, 0.0
        %v994 = vadd.f32 %v992, %v993
        %v995 = vsel %vm967, %v965, 0.0
        %v996 = vadd.f32 %v994, %v995
        %v997 = vsel %vm967, %v966, 0.0
        %v998 = vadd.f32 %v996, %v997
        %999 = vadd.xlane.f32.xlu0 %v998
        %v1000 = vpop.xlane.xlu0 %999
        %v1001 = vrot.slane %v1000, 4
        %v1002 = vadd.f32 %v1000, %v1001
        %v1003 = vrot.slane %v1002, 2
        %v1004 = vadd.f32 %v1002, %v1003
        %v1005 = vrot.slane %v1004, 1
        %v1006 = vadd.f32 %v1004, %v1005
        %s1007 = vtos %v1006
        %v1009 = vlaneseq
        %v1010 = vshrl.u32 %v1009, 7
        %v1011 = vsub.s32 0, %v1010
        %v1012 = vrot.slane %v518, %v1011
        %v1013 = vlaneseq
        %v1014 = vshrl.u32 %v1013, 7
        %v1015 = vsub.s32 1, %v1014
        %v1016 = vrot.slane %v518, %v1015
        %v1019 = vmul.f32 %v776, %v1012
        %v1020 = vmul.f32 %v778, %v1016
        %v1021 = vmul.f32 %v780, %v1012
        %v1022 = vmul.f32 %v782, %v1016
        %v1023 = vmul.f32 %v784, %v1012
        %v1024 = vmul.f32 %v786, %v1016
        %v1025 = vmul.f32 %v788, %v1012
        %v1026 = vmul.f32 %v790, %v1016
        %v1027 = vmul.f32 %v792, %v1012
        %v1028 = vmul.f32 %v794, %v1016
        %v1029 = vmul.f32 %v796, %v1012
        %v1030 = vmul.f32 %v798, %v1016
        %v1031 = vmul.f32 %v800, %v1012
        %v1032 = vmul.f32 %v802, %v1016
        %v1033 = vmul.f32 %v804, %v1012
        %v1034 = vmul.f32 %v806, %v1016
        %v1035 = vmul.f32 %v808, %v1012
        %v1036 = vmul.f32 %v810, %v1016
        %v1037 = vmul.f32 %v812, %v1012
        %v1038 = vmul.f32 %v814, %v1016
        %v1039 = vmul.f32 %v816, %v1012
        %v1040 = vmul.f32 %v818, %v1016
        %v1041 = vmul.f32 %v820, %v1012
        %v1042 = vmul.f32 %v822, %v1016
        %v1043 = vmul.f32 %v824, %v1012
        %v1044 = vmul.f32 %v826, %v1016
        %v1045 = vmul.f32 %v828, %v1012
        %v1046 = vmul.f32 %v830, %v1016
        %v1047 = vmul.f32 %v832, %v1012
        %v1048 = vmul.f32 %v834, %v1016
        %v1049 = vmul.f32 %v836, %v1012
        %v1050 = vmul.f32 %v838, %v1016
        %v1051 = vadd.f32 %v1019, %v1020
        %1052 = vadd.xlane.f32.xlu0 %v1051
        %v1053 = vpop.xlane.xlu0 %1052
        %v1054 = vadd.f32 %v1021, %v1022
        %1055 = vadd.xlane.f32.xlu0 %v1054
        %v1056 = vpop.xlane.xlu0 %1055
        %v1057 = vadd.f32 %v1023, %v1024
        %1058 = vadd.xlane.f32.xlu0 %v1057
        %v1059 = vpop.xlane.xlu0 %1058
        %v1060 = vadd.f32 %v1025, %v1026
        %1061 = vadd.xlane.f32.xlu0 %v1060
        %v1062 = vpop.xlane.xlu0 %1061
        %v1063 = vadd.f32 %v1027, %v1028
        %1064 = vadd.xlane.f32.xlu0 %v1063
        %v1065 = vpop.xlane.xlu0 %1064
        %v1066 = vadd.f32 %v1029, %v1030
        %1067 = vadd.xlane.f32.xlu0 %v1066
        %v1068 = vpop.xlane.xlu0 %1067
        %v1069 = vadd.f32 %v1031, %v1032
        %1070 = vadd.xlane.f32.xlu0 %v1069
        %v1071 = vpop.xlane.xlu0 %1070
        %v1072 = vadd.f32 %v1033, %v1034
        %1073 = vadd.xlane.f32.xlu0 %v1072
        %v1074 = vpop.xlane.xlu0 %1073
        %v1075 = vadd.f32 %v1035, %v1036
        %1076 = vadd.xlane.f32.xlu0 %v1075
        %v1077 = vpop.xlane.xlu0 %1076
        %v1078 = vadd.f32 %v1037, %v1038
        %1079 = vadd.xlane.f32.xlu0 %v1078
        %v1080 = vpop.xlane.xlu0 %1079
        %v1081 = vadd.f32 %v1039, %v1040
        %1082 = vadd.xlane.f32.xlu0 %v1081
        %v1083 = vpop.xlane.xlu0 %1082
        %v1084 = vadd.f32 %v1041, %v1042
        %1085 = vadd.xlane.f32.xlu0 %v1084
        %v1086 = vpop.xlane.xlu0 %1085
        %v1087 = vadd.f32 %v1043, %v1044
        %1088 = vadd.xlane.f32.xlu0 %v1087
        %v1089 = vpop.xlane.xlu0 %1088
        %v1090 = vadd.f32 %v1045, %v1046
        %1091 = vadd.xlane.f32.xlu0 %v1090
        %v1092 = vpop.xlane.xlu0 %1091
        %v1093 = vadd.f32 %v1047, %v1048
        %1094 = vadd.xlane.f32.xlu0 %v1093
        %v1095 = vpop.xlane.xlu0 %1094
        %v1096 = vadd.f32 %v1049, %v1050
        %1097 = vadd.xlane.f32.xlu0 %v1096
        %v1098 = vpop.xlane.xlu0 %1097
        %v1099 = vmax.f32 %v1053, 1e-30
        %v1100 = vmax.f32 %v1056, 1e-30
        %v1101 = vmax.f32 %v1059, 1e-30
        %v1102 = vmax.f32 %v1062, 1e-30
        %v1103 = vmax.f32 %v1065, 1e-30
        %v1104 = vmax.f32 %v1068, 1e-30
        %v1105 = vmax.f32 %v1071, 1e-30
        %v1106 = vmax.f32 %v1074, 1e-30
        %v1107 = vmax.f32 %v1077, 1e-30
        %v1108 = vmax.f32 %v1080, 1e-30
        %v1109 = vmax.f32 %v1083, 1e-30
        %v1110 = vmax.f32 %v1086, 1e-30
        %v1111 = vmax.f32 %v1089, 1e-30
        %v1112 = vmax.f32 %v1092, 1e-30
        %v1113 = vmax.f32 %v1095, 1e-30
        %v1114 = vmax.f32 %v1098, 1e-30
        %v1115 = vlog2.pop %v1099
        %v1116 = vmul.f32 %v1115, 0.6931472
        %v1117 = vlog2.pop %v1100
        %v1118 = vmul.f32 %v1117, 0.6931472
        %v1119 = vlog2.pop %v1101
        %v1120 = vmul.f32 %v1119, 0.6931472
        %v1121 = vlog2.pop %v1102
        %v1122 = vmul.f32 %v1121, 0.6931472
        %v1123 = vlog2.pop %v1103
        %v1124 = vmul.f32 %v1123, 0.6931472
        %v1125 = vlog2.pop %v1104
        %v1126 = vmul.f32 %v1125, 0.6931472
        %v1127 = vlog2.pop %v1105
        %v1128 = vmul.f32 %v1127, 0.6931472
        %v1129 = vlog2.pop %v1106
        %v1130 = vmul.f32 %v1129, 0.6931472
        %v1131 = vlog2.pop %v1107
        %v1132 = vmul.f32 %v1131, 0.6931472
        %v1133 = vlog2.pop %v1108
        %v1134 = vmul.f32 %v1133, 0.6931472
        %v1135 = vlog2.pop %v1109
        %v1136 = vmul.f32 %v1135, 0.6931472
        %v1137 = vlog2.pop %v1110
        %v1138 = vmul.f32 %v1137, 0.6931472
        %v1139 = vlog2.pop %v1111
        %v1140 = vmul.f32 %v1139, 0.6931472
        %v1141 = vlog2.pop %v1112
        %v1142 = vmul.f32 %v1141, 0.6931472
        %v1143 = vlog2.pop %v1113
        %v1144 = vmul.f32 %v1143, 0.6931472
        %v1145 = vlog2.pop %v1114
        %v1146 = vmul.f32 %v1145, 0.6931472
        %v1147 = vadd.f32 %v697, %v1116
        %v1148 = vadd.f32 %v700, %v1118
        %v1149 = vadd.f32 %v703, %v1120
        %v1150 = vadd.f32 %v706, %v1122
        %v1151 = vadd.f32 %v709, %v1124
        %v1152 = vadd.f32 %v712, %v1126
        %v1153 = vadd.f32 %v715, %v1128
        %v1154 = vadd.f32 %v718, %v1130
        %v1155 = vadd.f32 %v721, %v1132
        %v1156 = vadd.f32 %v724, %v1134
        %v1157 = vadd.f32 %v727, %v1136
        %v1158 = vadd.f32 %v730, %v1138
        %v1159 = vadd.f32 %v733, %v1140
        %v1160 = vadd.f32 %v736, %v1142
        %v1161 = vadd.f32 %v739, %v1144
        %v1162 = vadd.f32 %v742, %v1146
        %v1163 = vld [vmem:[%s288] sm:$0xff]
        %v1164 = vld [vmem:[%s288 + $0x8] sm:$0xff]
        %v1165 = vld [vmem:[%s288 + $0x10] sm:$0xff]
        %v1166 = vld [vmem:[%s288 + $0x18] sm:$0xff]
        %v1167 = vld [vmem:[%s288 + $0x20] sm:$0xff]
        %v1168 = vld [vmem:[%s288 + $0x28] sm:$0xff]
        %v1169 = vld [vmem:[%s288 + $0x30] sm:$0xff]
        %v1170 = vld [vmem:[%s288 + $0x38] sm:$0xff]
        %v1171 = vld [vmem:[%s288 + $0x40] sm:$0xff]
        %v1172 = vld [vmem:[%s288 + $0x48] sm:$0xff]
        %v1173 = vld [vmem:[%s288 + $0x50] sm:$0xff]
        %v1174 = vld [vmem:[%s288 + $0x58] sm:$0xff]
        %v1175 = vld [vmem:[%s288 + $0x60] sm:$0xff]
        %v1176 = vld [vmem:[%s288 + $0x68] sm:$0xff]
        %v1177 = vld [vmem:[%s288 + $0x70] sm:$0xff]
        %v1178 = vld [vmem:[%s288 + $0x78] sm:$0xff]
        %v1179 = vld [vmem:[%s3] sm:$0x3]
        %1180 = vset.pattern.permute.xlu0 0
        %1181 = vperm.xlu0 %1180, %v1163
        %v1182 = vpop.permute.xlu0 %1181
        %1183 = vset.pattern.permute.xlu0 0
        %1184 = vperm.xlu0 %1183, %v1164
        %v1185 = vpop.permute.xlu0 %1184
        %1186 = vset.pattern.permute.xlu0 0
        %1187 = vperm.xlu0 %1186, %v1165
        %v1188 = vpop.permute.xlu0 %1187
        %1189 = vset.pattern.permute.xlu0 0
        %1190 = vperm.xlu0 %1189, %v1166
        %v1191 = vpop.permute.xlu0 %1190
        %1192 = vset.pattern.permute.xlu0 0
        %1193 = vperm.xlu0 %1192, %v1167
        %v1194 = vpop.permute.xlu0 %1193
        %1195 = vset.pattern.permute.xlu0 0
        %1196 = vperm.xlu0 %1195, %v1168
        %v1197 = vpop.permute.xlu0 %1196
        %1198 = vset.pattern.permute.xlu0 0
        %1199 = vperm.xlu0 %1198, %v1169
        %v1200 = vpop.permute.xlu0 %1199
        %1201 = vset.pattern.permute.xlu0 0
        %1202 = vperm.xlu0 %1201, %v1170
        %v1203 = vpop.permute.xlu0 %1202
        %1204 = vset.pattern.permute.xlu0 0
        %1205 = vperm.xlu0 %1204, %v1171
        %v1206 = vpop.permute.xlu0 %1205
        %1207 = vset.pattern.permute.xlu0 0
        %1208 = vperm.xlu0 %1207, %v1172
        %v1209 = vpop.permute.xlu0 %1208
        %1210 = vset.pattern.permute.xlu0 0
        %1211 = vperm.xlu0 %1210, %v1173
        %v1212 = vpop.permute.xlu0 %1211
        %1213 = vset.pattern.permute.xlu0 0
        %1214 = vperm.xlu0 %1213, %v1174
        %v1215 = vpop.permute.xlu0 %1214
        %1216 = vset.pattern.permute.xlu0 0
        %1217 = vperm.xlu0 %1216, %v1175
        %v1218 = vpop.permute.xlu0 %1217
        %1219 = vset.pattern.permute.xlu0 0
        %1220 = vperm.xlu0 %1219, %v1176
        %v1221 = vpop.permute.xlu0 %1220
        %1222 = vset.pattern.permute.xlu0 0
        %1223 = vperm.xlu0 %1222, %v1177
        %v1224 = vpop.permute.xlu0 %1223
        %1225 = vset.pattern.permute.xlu0 0
        %1226 = vperm.xlu0 %1225, %v1178
        %v1227 = vpop.permute.xlu0 %1226
        %v1228 = vlaneseq
        %v1229 = vshrl.u32 %v1228, 7
        %v1230 = vsub.s32 0, %v1229
        %v1231 = vrot.slane %v1179, %v1230
        %v1232 = vlaneseq
        %v1233 = vshrl.u32 %v1232, 7
        %v1234 = vsub.s32 1, %v1233
        %v1235 = vrot.slane %v1179, %v1234
        %vm1236 = vcmp.eq.s32.totalorder %v1182, %v1231
        %vm1237 = vcmp.eq.s32.totalorder %v1182, %v1235
        %vm1238 = vcmp.eq.s32.totalorder %v1185, %v1231
        %vm1239 = vcmp.eq.s32.totalorder %v1185, %v1235
        %vm1240 = vcmp.eq.s32.totalorder %v1188, %v1231
        %vm1241 = vcmp.eq.s32.totalorder %v1188, %v1235
        %vm1242 = vcmp.eq.s32.totalorder %v1191, %v1231
        %vm1243 = vcmp.eq.s32.totalorder %v1191, %v1235
        %vm1244 = vcmp.eq.s32.totalorder %v1194, %v1231
        %vm1245 = vcmp.eq.s32.totalorder %v1194, %v1235
        %vm1246 = vcmp.eq.s32.totalorder %v1197, %v1231
        %vm1247 = vcmp.eq.s32.totalorder %v1197, %v1235
        %vm1248 = vcmp.eq.s32.totalorder %v1200, %v1231
        %vm1249 = vcmp.eq.s32.totalorder %v1200, %v1235
        %vm1250 = vcmp.eq.s32.totalorder %v1203, %v1231
        %vm1251 = vcmp.eq.s32.totalorder %v1203, %v1235
        %vm1252 = vcmp.eq.s32.totalorder %v1206, %v1231
        %vm1253 = vcmp.eq.s32.totalorder %v1206, %v1235
        %vm1254 = vcmp.eq.s32.totalorder %v1209, %v1231
        %vm1255 = vcmp.eq.s32.totalorder %v1209, %v1235
        %vm1256 = vcmp.eq.s32.totalorder %v1212, %v1231
        %vm1257 = vcmp.eq.s32.totalorder %v1212, %v1235
        %vm1258 = vcmp.eq.s32.totalorder %v1215, %v1231
        %vm1259 = vcmp.eq.s32.totalorder %v1215, %v1235
        %vm1260 = vcmp.eq.s32.totalorder %v1218, %v1231
        %vm1261 = vcmp.eq.s32.totalorder %v1218, %v1235
        %vm1262 = vcmp.eq.s32.totalorder %v1221, %v1231
        %vm1263 = vcmp.eq.s32.totalorder %v1221, %v1235
        %vm1264 = vcmp.eq.s32.totalorder %v1224, %v1231
        %vm1265 = vcmp.eq.s32.totalorder %v1224, %v1235
        %vm1266 = vcmp.eq.s32.totalorder %v1227, %v1231
        %vm1267 = vcmp.eq.s32.totalorder %v1227, %v1235
        %v1268 = vsel %vm1236, 1, 0
        %v1269 = vsel %vm1237, 1, 0
        %v1270 = vsel %vm1238, 1, 0
        %v1271 = vsel %vm1239, 1, 0
        %v1272 = vsel %vm1240, 1, 0
        %v1273 = vsel %vm1241, 1, 0
        %v1274 = vsel %vm1242, 1, 0
        %v1275 = vsel %vm1243, 1, 0
        %v1276 = vsel %vm1244, 1, 0
        %v1277 = vsel %vm1245, 1, 0
        %v1278 = vsel %vm1246, 1, 0
        %v1279 = vsel %vm1247, 1, 0
        %v1280 = vsel %vm1248, 1, 0
        %v1281 = vsel %vm1249, 1, 0
        %v1282 = vsel %vm1250, 1, 0
        %v1283 = vsel %vm1251, 1, 0
        %v1284 = vsel %vm1252, 1, 0
        %v1285 = vsel %vm1253, 1, 0
        %v1286 = vsel %vm1254, 1, 0
        %v1287 = vsel %vm1255, 1, 0
        %v1288 = vsel %vm1256, 1, 0
        %v1289 = vsel %vm1257, 1, 0
        %v1290 = vsel %vm1258, 1, 0
        %v1291 = vsel %vm1259, 1, 0
        %v1292 = vsel %vm1260, 1, 0
        %v1293 = vsel %vm1261, 1, 0
        %v1294 = vsel %vm1262, 1, 0
        %v1295 = vsel %vm1263, 1, 0
        %v1296 = vsel %vm1264, 1, 0
        %v1297 = vsel %vm1265, 1, 0
        %v1298 = vsel %vm1266, 1, 0
        %v1299 = vsel %vm1267, 1, 0
        %v1300 = vadd.s32 %v1268, %v1269
        %v1301 = vand.u32 %v1300, 65535
        %v1302 = vshrl.u32 %v1300, 16
        %v1303 = vcvt.s32.f32 %v1301
        %v1304 = vcvt.s32.f32 %v1302
        %1305 = vadd.xlane.f32.xlu0 %v1303
        %v1306 = vpop.xlane.xlu0 %1305
        %1307 = vadd.xlane.f32.xlu0 %v1304
        %v1308 = vpop.xlane.xlu0 %1307
        %v1309 = vcvt.f32.s32 %v1306
        %v1310 = vcvt.f32.s32 %v1308
        %v1311 = vshll.u32 %v1310, 16
        %v1312 = vadd.s32 %v1311, %v1309
        %v1313 = vadd.s32 %v1270, %v1271
        %v1314 = vand.u32 %v1313, 65535
        %v1315 = vshrl.u32 %v1313, 16
        %v1316 = vcvt.s32.f32 %v1314
        %v1317 = vcvt.s32.f32 %v1315
        %1318 = vadd.xlane.f32.xlu0 %v1316
        %v1319 = vpop.xlane.xlu0 %1318
        %1320 = vadd.xlane.f32.xlu0 %v1317
        %v1321 = vpop.xlane.xlu0 %1320
        %v1322 = vcvt.f32.s32 %v1319
        %v1323 = vcvt.f32.s32 %v1321
        %v1324 = vshll.u32 %v1323, 16
        %v1325 = vadd.s32 %v1324, %v1322
        %v1326 = vadd.s32 %v1272, %v1273
        %v1327 = vand.u32 %v1326, 65535
        %v1328 = vshrl.u32 %v1326, 16
        %v1329 = vcvt.s32.f32 %v1327
        %v1330 = vcvt.s32.f32 %v1328
        %1331 = vadd.xlane.f32.xlu0 %v1329
        %v1332 = vpop.xlane.xlu0 %1331
        %1333 = vadd.xlane.f32.xlu0 %v1330
        %v1334 = vpop.xlane.xlu0 %1333
        %v1335 = vcvt.f32.s32 %v1332
        %v1336 = vcvt.f32.s32 %v1334
        %v1337 = vshll.u32 %v1336, 16
        %v1338 = vadd.s32 %v1337, %v1335
        %v1339 = vadd.s32 %v1274, %v1275
        %v1340 = vand.u32 %v1339, 65535
        %v1341 = vshrl.u32 %v1339, 16
        %v1342 = vcvt.s32.f32 %v1340
        %v1343 = vcvt.s32.f32 %v1341
        %1344 = vadd.xlane.f32.xlu0 %v1342
        %v1345 = vpop.xlane.xlu0 %1344
        %1346 = vadd.xlane.f32.xlu0 %v1343
        %v1347 = vpop.xlane.xlu0 %1346
        %v1348 = vcvt.f32.s32 %v1345
        %v1349 = vcvt.f32.s32 %v1347
        %v1350 = vshll.u32 %v1349, 16
        %v1351 = vadd.s32 %v1350, %v1348
        %v1352 = vadd.s32 %v1276, %v1277
        %v1353 = vand.u32 %v1352, 65535
        %v1354 = vshrl.u32 %v1352, 16
        %v1355 = vcvt.s32.f32 %v1353
        %v1356 = vcvt.s32.f32 %v1354
        %1357 = vadd.xlane.f32.xlu0 %v1355
        %v1358 = vpop.xlane.xlu0 %1357
        %1359 = vadd.xlane.f32.xlu0 %v1356
        %v1360 = vpop.xlane.xlu0 %1359
        %v1361 = vcvt.f32.s32 %v1358
        %v1362 = vcvt.f32.s32 %v1360
        %v1363 = vshll.u32 %v1362, 16
        %v1364 = vadd.s32 %v1363, %v1361
        %v1365 = vadd.s32 %v1278, %v1279
        %v1366 = vand.u32 %v1365, 65535
        %v1367 = vshrl.u32 %v1365, 16
        %v1368 = vcvt.s32.f32 %v1366
        %v1369 = vcvt.s32.f32 %v1367
        %1370 = vadd.xlane.f32.xlu0 %v1368
        %v1371 = vpop.xlane.xlu0 %1370
        %1372 = vadd.xlane.f32.xlu0 %v1369
        %v1373 = vpop.xlane.xlu0 %1372
        %v1374 = vcvt.f32.s32 %v1371
        %v1375 = vcvt.f32.s32 %v1373
        %v1376 = vshll.u32 %v1375, 16
        %v1377 = vadd.s32 %v1376, %v1374
        %v1378 = vadd.s32 %v1280, %v1281
        %v1379 = vand.u32 %v1378, 65535
        %v1380 = vshrl.u32 %v1378, 16
        %v1381 = vcvt.s32.f32 %v1379
        %v1382 = vcvt.s32.f32 %v1380
        %1383 = vadd.xlane.f32.xlu0 %v1381
        %v1384 = vpop.xlane.xlu0 %1383
        %1385 = vadd.xlane.f32.xlu0 %v1382
        %v1386 = vpop.xlane.xlu0 %1385
        %v1387 = vcvt.f32.s32 %v1384
        %v1388 = vcvt.f32.s32 %v1386
        %v1389 = vshll.u32 %v1388, 16
        %v1390 = vadd.s32 %v1389, %v1387
        %v1391 = vadd.s32 %v1282, %v1283
        %v1392 = vand.u32 %v1391, 65535
        %v1393 = vshrl.u32 %v1391, 16
        %v1394 = vcvt.s32.f32 %v1392
        %v1395 = vcvt.s32.f32 %v1393
        %1396 = vadd.xlane.f32.xlu0 %v1394
        %v1397 = vpop.xlane.xlu0 %1396
        %1398 = vadd.xlane.f32.xlu0 %v1395
        %v1399 = vpop.xlane.xlu0 %1398
        %v1400 = vcvt.f32.s32 %v1397
        %v1401 = vcvt.f32.s32 %v1399
        %v1402 = vshll.u32 %v1401, 16
        %v1403 = vadd.s32 %v1402, %v1400
        %v1404 = vadd.s32 %v1284, %v1285
        %v1405 = vand.u32 %v1404, 65535
        %v1406 = vshrl.u32 %v1404, 16
        %v1407 = vcvt.s32.f32 %v1405
        %v1408 = vcvt.s32.f32 %v1406
        %1409 = vadd.xlane.f32.xlu0 %v1407
        %v1410 = vpop.xlane.xlu0 %1409
        %1411 = vadd.xlane.f32.xlu0 %v1408
        %v1412 = vpop.xlane.xlu0 %1411
        %v1413 = vcvt.f32.s32 %v1410
        %v1414 = vcvt.f32.s32 %v1412
        %v1415 = vshll.u32 %v1414, 16
        %v1416 = vadd.s32 %v1415, %v1413
        %v1417 = vadd.s32 %v1286, %v1287
        %v1418 = vand.u32 %v1417, 65535
        %v1419 = vshrl.u32 %v1417, 16
        %v1420 = vcvt.s32.f32 %v1418
        %v1421 = vcvt.s32.f32 %v1419
        %1422 = vadd.xlane.f32.xlu0 %v1420
        %v1423 = vpop.xlane.xlu0 %1422
        %1424 = vadd.xlane.f32.xlu0 %v1421
        %v1425 = vpop.xlane.xlu0 %1424
        %v1426 = vcvt.f32.s32 %v1423
        %v1427 = vcvt.f32.s32 %v1425
        %v1428 = vshll.u32 %v1427, 16
        %v1429 = vadd.s32 %v1428, %v1426
        %v1430 = vadd.s32 %v1288, %v1289
        %v1431 = vand.u32 %v1430, 65535
        %v1432 = vshrl.u32 %v1430, 16
        %v1433 = vcvt.s32.f32 %v1431
        %v1434 = vcvt.s32.f32 %v1432
        %1435 = vadd.xlane.f32.xlu0 %v1433
        %v1436 = vpop.xlane.xlu0 %1435
        %1437 = vadd.xlane.f32.xlu0 %v1434
        %v1438 = vpop.xlane.xlu0 %1437
        %v1439 = vcvt.f32.s32 %v1436
        %v1440 = vcvt.f32.s32 %v1438
        %v1441 = vshll.u32 %v1440, 16
        %v1442 = vadd.s32 %v1441, %v1439
        %v1443 = vadd.s32 %v1290, %v1291
        %v1444 = vand.u32 %v1443, 65535
        %v1445 = vshrl.u32 %v1443, 16
        %v1446 = vcvt.s32.f32 %v1444
        %v1447 = vcvt.s32.f32 %v1445
        %1448 = vadd.xlane.f32.xlu0 %v1446
        %v1449 = vpop.xlane.xlu0 %1448
        %1450 = vadd.xlane.f32.xlu0 %v1447
        %v1451 = vpop.xlane.xlu0 %1450
        %v1452 = vcvt.f32.s32 %v1449
        %v1453 = vcvt.f32.s32 %v1451
        %v1454 = vshll.u32 %v1453, 16
        %v1455 = vadd.s32 %v1454, %v1452
        %v1456 = vadd.s32 %v1292, %v1293
        %v1457 = vand.u32 %v1456, 65535
        %v1458 = vshrl.u32 %v1456, 16
        %v1459 = vcvt.s32.f32 %v1457
        %v1460 = vcvt.s32.f32 %v1458
        %1461 = vadd.xlane.f32.xlu0 %v1459
        %v1462 = vpop.xlane.xlu0 %1461
        %1463 = vadd.xlane.f32.xlu0 %v1460
        %v1464 = vpop.xlane.xlu0 %1463
        %v1465 = vcvt.f32.s32 %v1462
        %v1466 = vcvt.f32.s32 %v1464
        %v1467 = vshll.u32 %v1466, 16
        %v1468 = vadd.s32 %v1467, %v1465
        %v1469 = vadd.s32 %v1294, %v1295
        %v1470 = vand.u32 %v1469, 65535
        %v1471 = vshrl.u32 %v1469, 16
        %v1472 = vcvt.s32.f32 %v1470
        %v1473 = vcvt.s32.f32 %v1471
        %1474 = vadd.xlane.f32.xlu0 %v1472
        %v1475 = vpop.xlane.xlu0 %1474
        %1476 = vadd.xlane.f32.xlu0 %v1473
        %v1477 = vpop.xlane.xlu0 %1476
        %v1478 = vcvt.f32.s32 %v1475
        %v1479 = vcvt.f32.s32 %v1477
        %v1480 = vshll.u32 %v1479, 16
        %v1481 = vadd.s32 %v1480, %v1478
        %v1482 = vadd.s32 %v1296, %v1297
        %v1483 = vand.u32 %v1482, 65535
        %v1484 = vshrl.u32 %v1482, 16
        %v1485 = vcvt.s32.f32 %v1483
        %v1486 = vcvt.s32.f32 %v1484
        %1487 = vadd.xlane.f32.xlu0 %v1485
        %v1488 = vpop.xlane.xlu0 %1487
        %1489 = vadd.xlane.f32.xlu0 %v1486
        %v1490 = vpop.xlane.xlu0 %1489
        %v1491 = vcvt.f32.s32 %v1488
        %v1492 = vcvt.f32.s32 %v1490
        %v1493 = vshll.u32 %v1492, 16
        %v1494 = vadd.s32 %v1493, %v1491
        %v1495 = vadd.s32 %v1298, %v1299
        %v1496 = vand.u32 %v1495, 65535
        %v1497 = vshrl.u32 %v1495, 16
        %v1498 = vcvt.s32.f32 %v1496
        %v1499 = vcvt.s32.f32 %v1497
        %1500 = vadd.xlane.f32.xlu0 %v1498
        %v1501 = vpop.xlane.xlu0 %1500
        %1502 = vadd.xlane.f32.xlu0 %v1499
        %v1503 = vpop.xlane.xlu0 %1502
        %v1504 = vcvt.f32.s32 %v1501
        %v1505 = vcvt.f32.s32 %v1503
        %v1506 = vshll.u32 %v1505, 16
        %v1507 = vadd.s32 %v1506, %v1504
        %v1508 = vsel %vm1236, %v562, 0.0
        %v1509 = vsel %vm1237, %v563, 0.0
        %v1510 = vsel %vm1238, %v564, 0.0
        %v1511 = vsel %vm1239, %v565, 0.0
        %v1512 = vsel %vm1240, %v566, 0.0
        %v1513 = vsel %vm1241, %v567, 0.0
        %v1514 = vsel %vm1242, %v568, 0.0
        %v1515 = vsel %vm1243, %v569, 0.0
        %v1516 = vsel %vm1244, %v570, 0.0
        %v1517 = vsel %vm1245, %v571, 0.0
        %v1518 = vsel %vm1246, %v572, 0.0
        %v1519 = vsel %vm1247, %v573, 0.0
        %v1520 = vsel %vm1248, %v574, 0.0
        %v1521 = vsel %vm1249, %v575, 0.0
        %v1522 = vsel %vm1250, %v576, 0.0
        %v1523 = vsel %vm1251, %v577, 0.0
        %v1524 = vsel %vm1252, %v578, 0.0
        %v1525 = vsel %vm1253, %v579, 0.0
        %v1526 = vsel %vm1254, %v580, 0.0
        %v1527 = vsel %vm1255, %v581, 0.0
        %v1528 = vsel %vm1256, %v582, 0.0
        %v1529 = vsel %vm1257, %v583, 0.0
        %v1530 = vsel %vm1258, %v584, 0.0
        %v1531 = vsel %vm1259, %v585, 0.0
        %v1532 = vsel %vm1260, %v586, 0.0
        %v1533 = vsel %vm1261, %v587, 0.0
        %v1534 = vsel %vm1262, %v588, 0.0
        %v1535 = vsel %vm1263, %v589, 0.0
        %v1536 = vsel %vm1264, %v590, 0.0
        %v1537 = vsel %vm1265, %v591, 0.0
        %v1538 = vsel %vm1266, %v592, 0.0
        %v1539 = vsel %vm1267, %v593, 0.0
        %v1540 = vadd.f32 %v1508, %v1509
        %1541 = vadd.xlane.f32.xlu0 %v1540
        %v1542 = vpop.xlane.xlu0 %1541
        %v1543 = vadd.f32 %v1510, %v1511
        %1544 = vadd.xlane.f32.xlu0 %v1543
        %v1545 = vpop.xlane.xlu0 %1544
        %v1546 = vadd.f32 %v1512, %v1513
        %1547 = vadd.xlane.f32.xlu0 %v1546
        %v1548 = vpop.xlane.xlu0 %1547
        %v1549 = vadd.f32 %v1514, %v1515
        %1550 = vadd.xlane.f32.xlu0 %v1549
        %v1551 = vpop.xlane.xlu0 %1550
        %v1552 = vadd.f32 %v1516, %v1517
        %1553 = vadd.xlane.f32.xlu0 %v1552
        %v1554 = vpop.xlane.xlu0 %1553
        %v1555 = vadd.f32 %v1518, %v1519
        %1556 = vadd.xlane.f32.xlu0 %v1555
        %v1557 = vpop.xlane.xlu0 %1556
        %v1558 = vadd.f32 %v1520, %v1521
        %1559 = vadd.xlane.f32.xlu0 %v1558
        %v1560 = vpop.xlane.xlu0 %1559
        %v1561 = vadd.f32 %v1522, %v1523
        %1562 = vadd.xlane.f32.xlu0 %v1561
        %v1563 = vpop.xlane.xlu0 %1562
        %v1564 = vadd.f32 %v1524, %v1525
        %1565 = vadd.xlane.f32.xlu0 %v1564
        %v1566 = vpop.xlane.xlu0 %1565
        %v1567 = vadd.f32 %v1526, %v1527
        %1568 = vadd.xlane.f32.xlu0 %v1567
        %v1569 = vpop.xlane.xlu0 %1568
        %v1570 = vadd.f32 %v1528, %v1529
        %1571 = vadd.xlane.f32.xlu0 %v1570
        %v1572 = vpop.xlane.xlu0 %1571
        %v1573 = vadd.f32 %v1530, %v1531
        %1574 = vadd.xlane.f32.xlu0 %v1573
        %v1575 = vpop.xlane.xlu0 %1574
        %v1576 = vadd.f32 %v1532, %v1533
        %1577 = vadd.xlane.f32.xlu0 %v1576
        %v1578 = vpop.xlane.xlu0 %1577
        %v1579 = vadd.f32 %v1534, %v1535
        %1580 = vadd.xlane.f32.xlu0 %v1579
        %v1581 = vpop.xlane.xlu0 %1580
        %v1582 = vadd.f32 %v1536, %v1537
        %1583 = vadd.xlane.f32.xlu0 %v1582
        %v1584 = vpop.xlane.xlu0 %1583
        %v1585 = vadd.f32 %v1538, %v1539
        %1586 = vadd.xlane.f32.xlu0 %v1585
        %v1587 = vpop.xlane.xlu0 %1586
        %v1588 = vsub.f32 %v1542, %v839
        %v1589 = vsub.f32 %v1545, %v840
        %v1590 = vsub.f32 %v1548, %v841
        %v1591 = vsub.f32 %v1551, %v842
        %v1592 = vsub.f32 %v1554, %v843
        %v1593 = vsub.f32 %v1557, %v844
        %v1594 = vsub.f32 %v1560, %v845
        %v1595 = vsub.f32 %v1563, %v846
        %v1596 = vsub.f32 %v1566, %v847
        %v1597 = vsub.f32 %v1569, %v848
        %v1598 = vsub.f32 %v1572, %v849
        %v1599 = vsub.f32 %v1575, %v850
        %v1600 = vsub.f32 %v1578, %v851
        %v1601 = vsub.f32 %v1581, %v852
        %v1602 = vsub.f32 %v1584, %v853
        %v1603 = vsub.f32 %v1587, %v854
        %vm1604 = vcmp.ge.s32.totalorder %v1312, 2
        %vm1605 = vcmp.ge.s32.totalorder %v1325, 2
        %vm1606 = vcmp.ge.s32.totalorder %v1338, 2
        %vm1607 = vcmp.ge.s32.totalorder %v1351, 2
        %vm1608 = vcmp.ge.s32.totalorder %v1364, 2
        %vm1609 = vcmp.ge.s32.totalorder %v1377, 2
        %vm1610 = vcmp.ge.s32.totalorder %v1390, 2
        %vm1611 = vcmp.ge.s32.totalorder %v1403, 2
        %vm1612 = vcmp.ge.s32.totalorder %v1416, 2
        %vm1613 = vcmp.ge.s32.totalorder %v1429, 2
        %vm1614 = vcmp.ge.s32.totalorder %v1442, 2
        %vm1615 = vcmp.ge.s32.totalorder %v1455, 2
        %vm1616 = vcmp.ge.s32.totalorder %v1468, 2
        %vm1617 = vcmp.ge.s32.totalorder %v1481, 2
        %vm1618 = vcmp.ge.s32.totalorder %v1494, 2
        %vm1619 = vcmp.ge.s32.totalorder %v1507, 2
        %v1620 = vcvt.s32.f32 %v1312
        %v1621 = vcvt.s32.f32 %v1325
        %v1622 = vcvt.s32.f32 %v1338
        %v1623 = vcvt.s32.f32 %v1351
        %v1624 = vcvt.s32.f32 %v1364
        %v1625 = vcvt.s32.f32 %v1377
        %v1626 = vcvt.s32.f32 %v1390
        %v1627 = vcvt.s32.f32 %v1403
        %v1628 = vcvt.s32.f32 %v1416
        %v1629 = vcvt.s32.f32 %v1429
        %v1630 = vcvt.s32.f32 %v1442
        %v1631 = vcvt.s32.f32 %v1455
        %v1632 = vcvt.s32.f32 %v1468
        %v1633 = vcvt.s32.f32 %v1481
        %v1634 = vcvt.s32.f32 %v1494
        %v1635 = vcvt.s32.f32 %v1507
        %v1636 = vsel %vm1604, %v1620, 1.0
        %v1637 = vsel %vm1605, %v1621, 1.0
        %v1638 = vsel %vm1606, %v1622, 1.0
        %v1639 = vsel %vm1607, %v1623, 1.0
        %v1640 = vsel %vm1608, %v1624, 1.0
        %v1641 = vsel %vm1609, %v1625, 1.0
        %v1642 = vsel %vm1610, %v1626, 1.0
        %v1643 = vsel %vm1611, %v1627, 1.0
        %v1644 = vsel %vm1612, %v1628, 1.0
        %v1645 = vsel %vm1613, %v1629, 1.0
        %v1646 = vsel %vm1614, %v1630, 1.0
        %v1647 = vsel %vm1615, %v1631, 1.0
        %v1648 = vsel %vm1616, %v1632, 1.0
        %v1649 = vsel %vm1617, %v1633, 1.0
        %v1650 = vsel %vm1618, %v1634, 1.0
        %v1651 = vsel %vm1619, %v1635, 1.0
        %v1652 = vrcp.pop %v1636
        %v1653 = vmul.f32 %v1588, %v1652
        %v1654 = vrcp.pop %v1637
        %v1655 = vmul.f32 %v1589, %v1654
        %v1656 = vrcp.pop %v1638
        %v1657 = vmul.f32 %v1590, %v1656
        %v1658 = vrcp.pop %v1639
        %v1659 = vmul.f32 %v1591, %v1658
        %v1660 = vrcp.pop %v1640
        %v1661 = vmul.f32 %v1592, %v1660
        %v1662 = vrcp.pop %v1641
        %v1663 = vmul.f32 %v1593, %v1662
        %v1664 = vrcp.pop %v1642
        %v1665 = vmul.f32 %v1594, %v1664
        %v1666 = vrcp.pop %v1643
        %v1667 = vmul.f32 %v1595, %v1666
        %v1668 = vrcp.pop %v1644
        %v1669 = vmul.f32 %v1596, %v1668
        %v1670 = vrcp.pop %v1645
        %v1671 = vmul.f32 %v1597, %v1670
        %v1672 = vrcp.pop %v1646
        %v1673 = vmul.f32 %v1598, %v1672
        %v1674 = vrcp.pop %v1647
        %v1675 = vmul.f32 %v1599, %v1674
        %v1676 = vrcp.pop %v1648
        %v1677 = vmul.f32 %v1600, %v1676
        %v1678 = vrcp.pop %v1649
        %v1679 = vmul.f32 %v1601, %v1678
        %v1680 = vrcp.pop %v1650
        %v1681 = vmul.f32 %v1602, %v1680
        %v1682 = vrcp.pop %v1651
        %v1683 = vmul.f32 %v1603, %v1682
        %v1684 = vsub.f32 %v1147, %v1653
        %v1685 = vsub.f32 %v1148, %v1655
        %v1686 = vsub.f32 %v1149, %v1657
        %v1687 = vsub.f32 %v1150, %v1659
        %v1688 = vsub.f32 %v1151, %v1661
        %v1689 = vsub.f32 %v1152, %v1663
        %v1690 = vsub.f32 %v1153, %v1665
        %v1691 = vsub.f32 %v1154, %v1667
        %v1692 = vsub.f32 %v1155, %v1669
        %v1693 = vsub.f32 %v1156, %v1671
        %v1694 = vsub.f32 %v1157, %v1673
        %v1695 = vsub.f32 %v1158, %v1675
        %v1696 = vsub.f32 %v1159, %v1677
        %v1697 = vsub.f32 %v1160, %v1679
        %v1698 = vsub.f32 %v1161, %v1681
        %v1699 = vsub.f32 %v1162, %v1683
        %v1700 = vsel %vm1604, %v1684, 0.0
        %v1701 = vsel %vm1605, %v1685, 0.0
        %v1702 = vsel %vm1606, %v1686, 0.0
        %v1703 = vsel %vm1607, %v1687, 0.0
        %v1704 = vsel %vm1608, %v1688, 0.0
        %v1705 = vsel %vm1609, %v1689, 0.0
        %v1706 = vsel %vm1610, %v1690, 0.0
        %v1707 = vsel %vm1611, %v1691, 0.0
        %v1708 = vsel %vm1612, %v1692, 0.0
        %v1709 = vsel %vm1613, %v1693, 0.0
        %v1710 = vsel %vm1614, %v1694, 0.0
        %v1711 = vsel %vm1615, %v1695, 0.0
        %v1712 = vsel %vm1616, %v1696, 0.0
        %v1713 = vsel %vm1617, %v1697, 0.0
        %v1714 = vsel %vm1618, %v1698, 0.0
        %v1715 = vsel %vm1619, %v1699, 0.0
        %1732 = vrot.lane.b32.xlu0 %v1700, 127
        %v1733 = vpop.permute.xlu0 %1732
        %1734 = vrot.lane.b32.xlu0 %v1701, 127
        %v1735 = vpop.permute.xlu0 %1734
        %1736 = vrot.lane.b32.xlu0 %v1702, 127
        %v1737 = vpop.permute.xlu0 %1736
        %1738 = vrot.lane.b32.xlu0 %v1703, 127
        %v1739 = vpop.permute.xlu0 %1738
        %1740 = vrot.lane.b32.xlu0 %v1704, 127
        %v1741 = vpop.permute.xlu0 %1740
        %1742 = vrot.lane.b32.xlu0 %v1705, 127
        %v1743 = vpop.permute.xlu0 %1742
        %1744 = vrot.lane.b32.xlu0 %v1706, 127
        %v1745 = vpop.permute.xlu0 %1744
        %1746 = vrot.lane.b32.xlu0 %v1707, 127
        %v1747 = vpop.permute.xlu0 %1746
        %1748 = vrot.lane.b32.xlu0 %v1708, 127
        %v1749 = vpop.permute.xlu0 %1748
        %1750 = vrot.lane.b32.xlu0 %v1709, 127
        %v1751 = vpop.permute.xlu0 %1750
        %1752 = vrot.lane.b32.xlu0 %v1710, 127
        %v1753 = vpop.permute.xlu0 %1752
        %1754 = vrot.lane.b32.xlu0 %v1711, 127
        %v1755 = vpop.permute.xlu0 %1754
        %1756 = vrot.lane.b32.xlu0 %v1712, 127
        %v1757 = vpop.permute.xlu0 %1756
        %1758 = vrot.lane.b32.xlu0 %v1713, 127
        %v1759 = vpop.permute.xlu0 %1758
        %1760 = vrot.lane.b32.xlu0 %v1714, 127
        %v1761 = vpop.permute.xlu0 %1760
        %1762 = vrot.lane.b32.xlu0 %v1715, 127
        %v1763 = vpop.permute.xlu0 %1762
        %v1780 = vsel %vm967, %v1733, 0.0
        %v1781 = vsel %vm967, %v1735, 0.0
        %v1782 = vadd.f32 %v1780, %v1781
        %v1783 = vsel %vm967, %v1737, 0.0
        %v1784 = vadd.f32 %v1782, %v1783
        %v1785 = vsel %vm967, %v1739, 0.0
        %v1786 = vadd.f32 %v1784, %v1785
        %v1787 = vsel %vm967, %v1741, 0.0
        %v1788 = vadd.f32 %v1786, %v1787
        %v1789 = vsel %vm967, %v1743, 0.0
        %v1790 = vadd.f32 %v1788, %v1789
        %v1791 = vsel %vm967, %v1745, 0.0
        %v1792 = vadd.f32 %v1790, %v1791
        %v1793 = vsel %vm967, %v1747, 0.0
        %v1794 = vadd.f32 %v1792, %v1793
        %v1795 = vsel %vm967, %v1749, 0.0
        %v1796 = vadd.f32 %v1794, %v1795
        %v1797 = vsel %vm967, %v1751, 0.0
        %v1798 = vadd.f32 %v1796, %v1797
        %v1799 = vsel %vm967, %v1753, 0.0
        %v1800 = vadd.f32 %v1798, %v1799
        %v1801 = vsel %vm967, %v1755, 0.0
        %v1802 = vadd.f32 %v1800, %v1801
        %v1803 = vsel %vm967, %v1757, 0.0
        %v1804 = vadd.f32 %v1802, %v1803
        %v1805 = vsel %vm967, %v1759, 0.0
        %v1806 = vadd.f32 %v1804, %v1805
        %v1807 = vsel %vm967, %v1761, 0.0
        %v1808 = vadd.f32 %v1806, %v1807
        %v1809 = vsel %vm967, %v1763, 0.0
        %v1810 = vadd.f32 %v1808, %v1809
        %1811 = vadd.xlane.f32.xlu0 %v1810
        %v1812 = vpop.xlane.xlu0 %1811
        %v1813 = vrot.slane %v1812, 4
        %v1814 = vadd.f32 %v1812, %v1813
        %v1815 = vrot.slane %v1814, 2
        %v1816 = vadd.f32 %v1814, %v1815
        %v1817 = vrot.slane %v1816, 1
        %v1818 = vadd.f32 %v1816, %v1817
        %s1819 = vtos %v1818
        %v1820 = vsel %vm1604, 1, 0
        %v1821 = vsel %vm1605, 1, 0
        %v1822 = vsel %vm1606, 1, 0
        %v1823 = vsel %vm1607, 1, 0
        %v1824 = vsel %vm1608, 1, 0
        %v1825 = vsel %vm1609, 1, 0
        %v1826 = vsel %vm1610, 1, 0
        %v1827 = vsel %vm1611, 1, 0
        %v1828 = vsel %vm1612, 1, 0
        %v1829 = vsel %vm1613, 1, 0
        %v1830 = vsel %vm1614, 1, 0
        %v1831 = vsel %vm1615, 1, 0
        %v1832 = vsel %vm1616, 1, 0
        %v1833 = vsel %vm1617, 1, 0
        %v1834 = vsel %vm1618, 1, 0
        %v1835 = vsel %vm1619, 1, 0
        %v1836 = vcvt.s32.f32 %v1820
        %v1837 = vcvt.s32.f32 %v1821
        %v1838 = vcvt.s32.f32 %v1822
        %v1839 = vcvt.s32.f32 %v1823
        %v1840 = vcvt.s32.f32 %v1824
        %v1841 = vcvt.s32.f32 %v1825
        %v1842 = vcvt.s32.f32 %v1826
        %v1843 = vcvt.s32.f32 %v1827
        %v1844 = vcvt.s32.f32 %v1828
        %v1845 = vcvt.s32.f32 %v1829
        %v1846 = vcvt.s32.f32 %v1830
        %v1847 = vcvt.s32.f32 %v1831
        %v1848 = vcvt.s32.f32 %v1832
        %v1849 = vcvt.s32.f32 %v1833
        %v1850 = vcvt.s32.f32 %v1834
        %v1851 = vcvt.s32.f32 %v1835
        %v1852 = vsel %vm967, %v1836, 0.0
        %v1853 = vsel %vm967, %v1837, 0.0
        %v1854 = vadd.f32 %v1852, %v1853
        %v1855 = vsel %vm967, %v1838, 0.0
        %v1856 = vadd.f32 %v1854, %v1855
        %v1857 = vsel %vm967, %v1839, 0.0
        %v1858 = vadd.f32 %v1856, %v1857
        %v1859 = vsel %vm967, %v1840, 0.0
        %v1860 = vadd.f32 %v1858, %v1859
        %v1861 = vsel %vm967, %v1841, 0.0
        %v1862 = vadd.f32 %v1860, %v1861
        %v1863 = vsel %vm967, %v1842, 0.0
        %v1864 = vadd.f32 %v1862, %v1863
        %v1865 = vsel %vm967, %v1843, 0.0
        %v1866 = vadd.f32 %v1864, %v1865
        %v1867 = vsel %vm967, %v1844, 0.0
        %v1868 = vadd.f32 %v1866, %v1867
        %v1869 = vsel %vm967, %v1845, 0.0
        %v1870 = vadd.f32 %v1868, %v1869
        %v1871 = vsel %vm967, %v1846, 0.0
        %v1872 = vadd.f32 %v1870, %v1871
        %v1873 = vsel %vm967, %v1847, 0.0
        %v1874 = vadd.f32 %v1872, %v1873
        %v1875 = vsel %vm967, %v1848, 0.0
        %v1876 = vadd.f32 %v1874, %v1875
        %v1877 = vsel %vm967, %v1849, 0.0
        %v1878 = vadd.f32 %v1876, %v1877
        %v1879 = vsel %vm967, %v1850, 0.0
        %v1880 = vadd.f32 %v1878, %v1879
        %v1881 = vsel %vm967, %v1851, 0.0
        %v1882 = vadd.f32 %v1880, %v1881
        %1883 = vadd.xlane.f32.xlu0 %v1882
        %v1884 = vpop.xlane.xlu0 %1883
        %v1885 = vrot.slane %v1884, 4
        %v1886 = vadd.f32 %v1884, %v1885
        %v1887 = vrot.slane %v1886, 2
        %v1888 = vadd.f32 %v1886, %v1887
        %v1889 = vrot.slane %v1888, 1
        %v1890 = vadd.f32 %v1888, %v1889
        %s1891 = vtos %v1890
        %vm1892 = vcmp.eq.s32.totalorder %v598, 0
        %vm1893 = vcmp.eq.s32.totalorder %v595, 0
        %vm1894 = vmand %vm1892, %vm1893
        %v1895 = vstv %s1007
        %v1896 = vsel %vm1894, %v1895, 0.0
        %vm1897 = vcmp.eq.s32.totalorder %v595, 1
        %vm1898 = vmand %vm1892, %vm1897
        %v1899 = vstv %s1819
        %v1900 = vsel %vm1898, %v1899, %v1896
        %vm1901 = vcmp.eq.s32.totalorder %v595, 2
        %vm1902 = vmand %vm1892, %vm1901
        %v1903 = vstv %s1891
        %v1904 = vsel %vm1902, %v1903, %v1900
        %1905 = vst [vmem:[%s277] sm:$0xff] %v1904
        %s1906 = sand.u32 %s169, 1
        %s1907 = scalar_lea.sflag [#allocation3], %s1906
        %s1908 = sand.u32 %s169, 1
        %s1909 = smul.addr %s1908, 8
        %s1910 = scalar_lea.vmem [#allocation2], %s1909
        // Predicated region
        $region45: #{tpu_custom_call.1} parent=43 // pred_check
          %p1911 = pneg %p179
        $region46: #{tpu_custom_call.1} parent=43 // pred_check_branch
          %1913 = sbr.rel (%p1911) target = $region48
        $region47: #{tpu_custom_call.1} parent=43 // pred_region
          %s1915 = ssub.s32 128, 128
          %1916 = vsyncadd %s1907, %s1915
          %s1917 = smul.addr %s20, 128
          %s1918 = scalar_lea.hbm %s6, %s1917
          %s1920 = sshll.u32 %s1910, 4
          %s1921 = int_to_ptr.vmem [resolvable:$true] %s1920
          %1923 = dma.vmem_to_hbm [thread:$0]  %s1921, 128, %s1918, %s1907
        $region48: #{tpu_custom_call.1} parent=43 // pred_fallthru
          _
      $region44: #{tpu_custom_call.1} parent=5 // pred_fallthru
        _
      %p1924 = scmp.le.s32.totalorder 2, %s15
      // Predicated region
      $region49: #{tpu_custom_call.1} parent=5 // pred_check
        %p1925 = pneg %p1924
      $region50: #{tpu_custom_call.1} parent=5 // pred_check_branch
        %1927 = sbr.rel (%p1925) target = $region52
      $region51: #{tpu_custom_call.1} parent=5 // pred_region
        %s1928 = ssub.s32 %s15, 2
        // Predicated region
        $region53: #{tpu_custom_call.1} parent=51 // pred_check
          %p1929 = pneg %p185
        $region54: #{tpu_custom_call.1} parent=51 // pred_check_branch
          %1931 = sbr.rel (%p1929) target = $region56
        $region55: #{tpu_custom_call.1} parent=51 // pred_region
          %s1932 = sand.u32 %s170, 1
          %s1933 = scalar_lea.sflag [#allocation3], %s1932
          %s1934 = sand.u32 %s170, 1
          %s1935 = smul.addr %s1934, 8
          %s1936 = scalar_lea.vmem [#allocation2], %s1935
          %1937 = dma.done %s1933, 128
        $region56: #{tpu_custom_call.1} parent=51 // pred_fallthru
          _
      $region52: #{tpu_custom_call.1} parent=5 // pred_fallthru
        _
    $region6: #{tpu_custom_call.1} parent=1 // loop_footer
      %s19 = sadd.s32 1, %s15
    $region7: #{tpu_custom_call.1} parent=1 // loop_footer_branch
      %14 = sbr.rel target = $region3
    $region8: #{tpu_custom_call.1} parent=1 // loop_exit
      _
    %1938 = vsyncpa [#allocation3], 1
    %s1939 = scalar_lea.sflag [#allocation3], 1
    %1940 = vsyncpa %s1939, 1

// kernel: tpu_custom_call.1
$region0: #{tpu_custom_call.1}
  #allocation0 [shape = 'u32[]', space=smem, size = 0x4, offset = 0x4, fixed_abs, tag = 'smem constant byte address 0x4 - core index']
  #allocation1 [shape = 'u32[144,128]{1,0:T(1,128)}', space=vmem, size = 0x12000, scoped, tag = 'internal scratch']
  %s0 = inlined_call_operand.vmem [shape: bf16[256,32], index: 0, kind: input, shape index: {}]
  %s1 = inlined_call_operand.vmem [shape: bf16[32,256], index: 1, kind: input, shape index: {}]
  %s2 = inlined_call_operand.vmem [shape: s32[256,1], index: 2, kind: input, shape index: {}]
  %s3 = inlined_call_operand.vmem [shape: s32[1,256], index: 3, kind: input, shape index: {}]
  %s4 = inlined_call_operand.vmem [shape: f32[256,2], index: 4, kind: input, shape index: {}]
  %s5 = inlined_call_operand.vmem [shape: f32[2,256], index: 5, kind: input, shape index: {}]
  %s6 = inlined_call_operand.hbm [shape: f32[16,128], index: 6, kind: output, shape index: {}]
  %s7 = sld [smem:[#allocation0]]
  $region57: #{tpu_custom_call.1} parent=0
    _
  %s9 = ssub.s32 1, %s7
  %s10 = scalar_select 0, %s9, %s7
  $region1: #{tpu_custom_call.1} parent=0
    #allocation2 [shape = 'u8[8192]{0}', space=vmem, size = 0x2000, scoped, tag = 'output window, operand 0']
    #allocation3 [shape = 's32[2]{0}', space=sflag, size = 0x8, scoped, tag = 'scoped memory for tpu_custom_call.1']
    %11 = vsyncpa [#allocation3], 0
    %s12 = scalar_lea.sflag [#allocation3], 1
    %13 = vsyncpa %s12, 0
    loop: start=0, step=1, limit=4
    $region2: #{tpu_custom_call.1} parent=1 // loop_pre_header
      _
    $region3: #{tpu_custom_call.1} parent=1 // loop_header
      %s15 = sphi 0, %s19
      %p16 = scmp.ge.s32.totalorder %s15, 4
      %s25 = sphi 0, %s27
      %s28 = sphi 0, %s25
      %s29 = sphi 0, %s28
      %s45 = sphi 0, %s29
      %s49 = sphi 0, %s49
      %s51 = sphi 0, %s49
      %s52 = sphi 0, %s51
      %s66 = sphi 0, %s52
      %s72 = sphi 0, %s74
      %s75 = sphi 0, %s72
      %s76 = sphi 0, %s75
      %s92 = sphi 0, %s76
      %s96 = sphi 0, %s96
      %s98 = sphi 0, %s96
      %s99 = sphi 0, %s98
      %s113 = sphi 0, %s99
      %s119 = sphi 0, %s121
      %s122 = sphi 0, %s119
      %s123 = sphi 0, %s122
      %s139 = sphi 0, %s123
      %s143 = sphi 0, %s143
      %s145 = sphi 0, %s143
      %s146 = sphi 0, %s145
      %s160 = sphi 0, %s146
      %s166 = sphi 0, %s168
      %s169 = sphi 0, %s166
      %s170 = sphi 0, %s169
      %s186 = sphi 0, %s170
    $region4: #{tpu_custom_call.1} parent=1 // loop_header_branch
      %18 = sbr.rel (%p16) target = $region8
    $region5: #{tpu_custom_call.1} parent=1 // loop_body
      %s20 = ssub.s32 %s15, 1
      %s21 = ssub.s32 %s15, 2
      %s22 = sadd.s32 %s15, 1
      %s23 = ssub.s32 %s15, %s22
      %p24 = scmp.eq.s32.totalorder %s23, 0
      %s26 = sadd.s32 %s25, 1
      %s27 = scalar_select %p24, %s25, %s26
      %p30 = pneg %p24
      %p31 = scmp.eq.s32.totalorder %s15, 1
      %p32 = por %p30, %p31
      %p33 = scmp.ne.s32.totalorder %s25, %s28
      %p34 = scmp.eq.s32.totalorder %s15, 0
      %p35 = por %p33, %p34
      %p36 = scmp.ne.s32.totalorder %s25, %s28
      %p37 = scmp.eq.s32.totalorder %s20, 1
      %p38 = por %p36, %p37
      %p39 = scmp.ne.s32.totalorder %s28, %s29
      %p40 = scmp.eq.s32.totalorder %s20, 0
      %p41 = por %p39, %p40
      %p42 = scmp.ne.s32.totalorder %s28, %s29
      %p43 = scmp.eq.s32.totalorder %s21, 1
      %p44 = por %p42, %p43
      %p46 = scmp.ne.s32.totalorder %s29, %s45
      %p47 = scmp.eq.s32.totalorder %s21, 0
      %p48 = por %p46, %p47
      %s50 = sadd.s32 %s49, 1
      %p53 = scmp.eq.s32.totalorder %s15, 1
      %p54 = scmp.ne.s32.totalorder %s49, %s51
      %p55 = scmp.eq.s32.totalorder %s15, 0
      %p56 = por %p54, %p55
      %p57 = scmp.ne.s32.totalorder %s49, %s51
      %p58 = scmp.eq.s32.totalorder %s20, 1
      %p59 = por %p57, %p58
      %p60 = scmp.ne.s32.totalorder %s51, %s52
      %p61 = scmp.eq.s32.totalorder %s20, 0
      %p62 = por %p60, %p61
      %p63 = scmp.ne.s32.totalorder %s51, %s52
      %p64 = scmp.eq.s32.totalorder %s21, 1
      %p65 = por %p63, %p64
      %p67 = scmp.ne.s32.totalorder %s52, %s66
      %p68 = scmp.eq.s32.totalorder %s21, 0
      %p69 = por %p67, %p68
      %s70 = ssub.s32 %s15, %s22
      %p71 = scmp.eq.s32.totalorder %s70, 0
      %s73 = sadd.s32 %s72, 1
      %s74 = scalar_select %p71, %s72, %s73
      %p77 = pneg %p71
      %p78 = scmp.eq.s32.totalorder %s15, 1
      %p79 = por %p77, %p78
      %p80 = scmp.ne.s32.totalorder %s72, %s75
      %p81 = scmp.eq.s32.totalorder %s15, 0
      %p82 = por %p80, %p81
      %p83 = scmp.ne.s32.totalorder %s72, %s75
      %p84 = scmp.eq.s32.totalorder %s20, 1
      %p85 = por %p83, %p84
      %p86 = scmp.ne.s32.totalorder %s75, %s76
      %p87 = scmp.eq.s32.totalorder %s20, 0
      %p88 = por %p86, %p87
      %p89 = scmp.ne.s32.totalorder %s75, %s76
      %p90 = scmp.eq.s32.totalorder %s21, 1
      %p91 = por %p89, %p90
      %p93 = scmp.ne.s32.totalorder %s76, %s92
      %p94 = scmp.eq.s32.totalorder %s21, 0
      %p95 = por %p93, %p94
      %s97 = sadd.s32 %s96, 1
      %p100 = scmp.eq.s32.totalorder %s15, 1
      %p101 = scmp.ne.s32.totalorder %s96, %s98
      %p102 = scmp.eq.s32.totalorder %s15, 0
      %p103 = por %p101, %p102
      %p104 = scmp.ne.s32.totalorder %s96, %s98
      %p105 = scmp.eq.s32.totalorder %s20, 1
      %p106 = por %p104, %p105
      %p107 = scmp.ne.s32.totalorder %s98, %s99
      %p108 = scmp.eq.s32.totalorder %s20, 0
      %p109 = por %p107, %p108
      %p110 = scmp.ne.s32.totalorder %s98, %s99
      %p111 = scmp.eq.s32.totalorder %s21, 1
      %p112 = por %p110, %p111
      %p114 = scmp.ne.s32.totalorder %s99, %s113
      %p115 = scmp.eq.s32.totalorder %s21, 0
      %p116 = por %p114, %p115
      %s117 = ssub.s32 %s15, %s22
      %p118 = scmp.eq.s32.totalorder %s117, 0
      %s120 = sadd.s32 %s119, 1
      %s121 = scalar_select %p118, %s119, %s120
      %p124 = pneg %p118
      %p125 = scmp.eq.s32.totalorder %s15, 1
      %p126 = por %p124, %p125
      %p127 = scmp.ne.s32.totalorder %s119, %s122
      %p128 = scmp.eq.s32.totalorder %s15, 0
      %p129 = por %p127, %p128
      %p130 = scmp.ne.s32.totalorder %s119, %s122
      %p131 = scmp.eq.s32.totalorder %s20, 1
      %p132 = por %p130, %p131
      %p133 = scmp.ne.s32.totalorder %s122, %s123
      %p134 = scmp.eq.s32.totalorder %s20, 0
      %p135 = por %p133, %p134
      %p136 = scmp.ne.s32.totalorder %s122, %s123
      %p137 = scmp.eq.s32.totalorder %s21, 1
      %p138 = por %p136, %p137
      %p140 = scmp.ne.s32.totalorder %s123, %s139
      %p141 = scmp.eq.s32.totalorder %s21, 0
      %p142 = por %p140, %p141
      %s144 = sadd.s32 %s143, 1
      %p147 = scmp.eq.s32.totalorder %s15, 1
      %p148 = scmp.ne.s32.totalorder %s143, %s145
      %p149 = scmp.eq.s32.totalorder %s15, 0
      %p150 = por %p148, %p149
      %p151 = scmp.ne.s32.totalorder %s143, %s145
      %p152 = scmp.eq.s32.totalorder %s20, 1
      %p153 = por %p151, %p152
      %p154 = scmp.ne.s32.totalorder %s145, %s146
      %p155 = scmp.eq.s32.totalorder %s20, 0
      %p156 = por %p154, %p155
      %p157 = scmp.ne.s32.totalorder %s145, %s146
      %p158 = scmp.eq.s32.totalorder %s21, 1
      %p159 = por %p157, %p158
      %p161 = scmp.ne.s32.totalorder %s146, %s160
      %p162 = scmp.eq.s32.totalorder %s21, 0
      %p163 = por %p161, %p162
      %s164 = ssub.s32 %s15, %s22
      %p165 = scmp.eq.s32.totalorder %s164, 0
      %s167 = sadd.s32 %s166, 1
      %s168 = scalar_select %p165, %s166, %s167
      %p171 = pneg %p165
      %p172 = scmp.eq.s32.totalorder %s15, 1
      %p173 = por %p171, %p172
      %p174 = scmp.ne.s32.totalorder %s166, %s169
      %p175 = scmp.eq.s32.totalorder %s15, 0
      %p176 = por %p174, %p175
      %p177 = scmp.ne.s32.totalorder %s166, %s169
      %p178 = scmp.eq.s32.totalorder %s20, 1
      %p179 = por %p177, %p178
      %p180 = scmp.ne.s32.totalorder %s169, %s170
      %p181 = scmp.eq.s32.totalorder %s20, 0
      %p182 = por %p180, %p181
      %p183 = scmp.ne.s32.totalorder %s169, %s170
      %p184 = scmp.eq.s32.totalorder %s21, 1
      %p185 = por %p183, %p184
      %p187 = scmp.ne.s32.totalorder %s170, %s186
      %p188 = scmp.eq.s32.totalorder %s21, 0
      %p189 = por %p187, %p188
      %p190 = scmp.le.s32.totalorder 1, %s15
      %p191 = scmp.lt.s32.totalorder %s15, 3
      %p192 = pnand %p190, %p191
      %p193 = pneg %p192
      // Predicated region
      $region9: #{tpu_custom_call.1} parent=5 // pred_check
        _
      $region10: #{tpu_custom_call.1} parent=5 // pred_check_branch
        %195 = sbr.rel (%p192) target = $region12
      $region11: #{tpu_custom_call.1} parent=5 // pred_region
        %s196 = ssub.s32 %s15, 1
        // Predicated region
        $region13: #{tpu_custom_call.1} parent=11 // pred_check
          %p197 = pneg %p62
        $region14: #{tpu_custom_call.1} parent=11 // pred_check_branch
          %199 = sbr.rel (%p197) target = $region16
        $region15: #{tpu_custom_call.1} parent=11 // pred_region
          _
        $region16: #{tpu_custom_call.1} parent=11 // pred_fallthru
          _
        // Predicated region
        $region17: #{tpu_custom_call.1} parent=11 // pred_check
          %p200 = pneg %p109
        $region18: #{tpu_custom_call.1} parent=11 // pred_check_branch
          %202 = sbr.rel (%p200) target = $region20
        $region19: #{tpu_custom_call.1} parent=11 // pred_region
          _
        $region20: #{tpu_custom_call.1} parent=11 // pred_fallthru
          _
        // Predicated region
        $region21: #{tpu_custom_call.1} parent=11 // pred_check
          %p203 = pneg %p156
        $region22: #{tpu_custom_call.1} parent=11 // pred_check_branch
          %205 = sbr.rel (%p203) target = $region24
        $region23: #{tpu_custom_call.1} parent=11 // pred_region
          _
        $region24: #{tpu_custom_call.1} parent=11 // pred_fallthru
          _
      $region12: #{tpu_custom_call.1} parent=5 // pred_fallthru
        _
      %p206 = scmp.lt.s32.totalorder %s15, 2
      // Predicated region
      $region25: #{tpu_custom_call.1} parent=5 // pred_check
        %p207 = pneg %p206
      $region26: #{tpu_custom_call.1} parent=5 // pred_check_branch
        %209 = sbr.rel (%p207) target = $region28
      $region27: #{tpu_custom_call.1} parent=5 // pred_region
        // Predicated region
        $region29: #{tpu_custom_call.1} parent=27 // pred_check
          %p210 = pneg %p35
        $region30: #{tpu_custom_call.1} parent=27 // pred_check_branch
          %212 = sbr.rel (%p210) target = $region32
        $region31: #{tpu_custom_call.1} parent=27 // pred_region
          %s213 = smul.u32 16, %s15
          %p214 = scmp.lt.s32.totalorder %s213, 31
          %s215 = scalar_select %p214, %s213, 31
          %s216 = smul.addr %s215, 4
          %s217 = scalar_lea.vmem %s0, %s216
          %s218 = smul.u32 16, %s15
        $region32: #{tpu_custom_call.1} parent=27 // pred_fallthru
          _
        // Predicated region
        $region33: #{tpu_custom_call.1} parent=27 // pred_check
          %p219 = pneg %p82
        $region34: #{tpu_custom_call.1} parent=27 // pred_check_branch
          %221 = sbr.rel (%p219) target = $region36
        $region35: #{tpu_custom_call.1} parent=27 // pred_region
          %s222 = smul.u32 16, %s15
          %p223 = scmp.lt.s32.totalorder %s222, 31
          %s224 = scalar_select %p223, %s222, 31
          %s225 = smul.addr %s224, 8
          %s226 = scalar_lea.vmem %s2, %s225
          %s227 = smul.u32 16, %s15
        $region36: #{tpu_custom_call.1} parent=27 // pred_fallthru
          _
        // Predicated region
        $region37: #{tpu_custom_call.1} parent=27 // pred_check
          %p228 = pneg %p129
        $region38: #{tpu_custom_call.1} parent=27 // pred_check_branch
          %230 = sbr.rel (%p228) target = $region40
        $region39: #{tpu_custom_call.1} parent=27 // pred_region
          %s231 = smul.u32 16, %s15
          %p232 = scmp.lt.s32.totalorder %s231, 31
          %s233 = scalar_select %p232, %s231, 31
          %s234 = smul.addr %s233, 8
          %s235 = scalar_lea.vmem %s4, %s234
          %s236 = smul.u32 16, %s15
        $region40: #{tpu_custom_call.1} parent=27 // pred_fallthru
          _
      $region28: #{tpu_custom_call.1} parent=5 // pred_fallthru
        _
      %p237 = scmp.le.s32.totalorder 1, %s15
      %p238 = scmp.lt.s32.totalorder %s15, 3
      %p239 = pnand %p237, %p238
      %p240 = pneg %p239
      // Predicated region
      $region41: #{tpu_custom_call.1} parent=5 // pred_check
        _
      $region42: #{tpu_custom_call.1} parent=5 // pred_check_branch
        %242 = sbr.rel (%p239) target = $region44
      $region43: #{tpu_custom_call.1} parent=5 // pred_region
        %s243 = ssub.s32 %s15, 1
        %s244 = smul.u32 16, %s20
        %p245 = scmp.lt.s32.totalorder %s244, 31
        %s246 = scalar_select %p245, %s244, 31
        %s247 = smul.addr %s246, 4
        %s248 = scalar_lea.vmem %s0, %s247
        %p249 = pneg %p41
        %p250 = pneg %p38
        %p251 = pneg %p62
        %p252 = pneg %p59
        %s253 = smul.u32 16, %s20
        %p254 = scmp.lt.s32.totalorder %s253, 31
        %s255 = scalar_select %p254, %s253, 31
        %s256 = smul.addr %s255, 8
        %s257 = scalar_lea.vmem %s2, %s256
        %p258 = pneg %p88
        %p259 = pneg %p85
        %p260 = pneg %p109
        %p261 = pneg %p106
        %s262 = smul.u32 16, %s20
        %p263 = scmp.lt.s32.totalorder %s262, 31
        %s264 = scalar_select %p263, %s262, 31
        %s265 = smul.addr %s264, 8
        %s266 = scalar_lea.vmem %s4, %s265
        %p267 = pneg %p135
        %p268 = pneg %p132
        %p269 = pneg %p156
        %p270 = pneg %p153
        %p271 = pneg %p182
        %p272 = pneg %p179
        %s273 = sand.u32 %s169, 1
        %s274 = scalar_lea.sflag [#allocation3], %s273
        %s275 = sand.u32 %s169, 1
        %s276 = smul.addr %s275, 8
        %s277 = scalar_lea.vmem [#allocation2], %s276
        %s278 = smul.u32 16, %s20
        %p279 = scmp.lt.s32.totalorder %s278, 31
        %s280 = scalar_select %p279, %s278, 31
        %s281 = smul.addr %s280, 4
        %s282 = scalar_lea.vmem %s0, %s281
        %s283 = smul.u32 16, %s20
        %s284 = smul.u32 16, %s20
        %p285 = scmp.lt.s32.totalorder %s284, 31
        %s286 = scalar_select %p285, %s284, 31
        %s287 = smul.addr %s286, 8
        %s288 = scalar_lea.vmem %s2, %s287
        %s289 = smul.u32 16, %s20
        %s290 = smul.u32 16, %s20
        %p291 = scmp.lt.s32.totalorder %s290, 31
        %s292 = scalar_select %p291, %s290, 31
        %s293 = smul.addr %s292, 8
        %s294 = scalar_lea.vmem %s4, %s293
        %s295 = smul.u32 16, %s20
        %s297 = smul.u32 %s20, 128
        %v298 = vld [vmem:[%s282] sm:$0xf]
        %v299 = vld [vmem:[%s282 + $0x4] sm:$0xf]
        %v300 = vld [vmem:[%s282 + $0x8] sm:$0xf]
        %v301 = vld [vmem:[%s282 + $0xc] sm:$0xf]
        %v302 = vld [vmem:[%s282 + $0x10] sm:$0xf]
        %v303 = vld [vmem:[%s282 + $0x14] sm:$0xf]
        %v304 = vld [vmem:[%s282 + $0x18] sm:$0xf]
        %v305 = vld [vmem:[%s282 + $0x1c] sm:$0xf]
        %v306 = vld [vmem:[%s282 + $0x20] sm:$0xf]
        %v307 = vld [vmem:[%s282 + $0x24] sm:$0xf]
        %v308 = vld [vmem:[%s282 + $0x28] sm:$0xf]
        %v309 = vld [vmem:[%s282 + $0x2c] sm:$0xf]
        %v310 = vld [vmem:[%s282 + $0x30] sm:$0xf]
        %v311 = vld [vmem:[%s282 + $0x34] sm:$0xf]
        %v312 = vld [vmem:[%s282 + $0x38] sm:$0xf]
        %v313 = vld [vmem:[%s282 + $0x3c] sm:$0xf]
        %v314 = vld [vmem:[%s1] sm:$0xff]
        %v315 = vld [vmem:[%s1 + $0x8] sm:$0xff]
        %v316 = vld [vmem:[%s1 + $0x10] sm:$0xff]
        %v317 = vld [vmem:[%s1 + $0x18] sm:$0xff]
        %v334 = vunpack.c.l.b16 %v298
        %v335 = vunpack.c.l.b16 %v299
        %v336 = vunpack.c.l.b16 %v300
        %v337 = vunpack.c.l.b16 %v301
        %v338 = vunpack.c.l.b16 %v302
        %v339 = vunpack.c.l.b16 %v303
        %v340 = vunpack.c.l.b16 %v304
        %v341 = vunpack.c.l.b16 %v305
        %v342 = vunpack.c.l.b16 %v306
        %v343 = vunpack.c.l.b16 %v307
        %v344 = vunpack.c.l.b16 %v308
        %v345 = vunpack.c.l.b16 %v309
        %v346 = vunpack.c.l.b16 %v310
        %v347 = vunpack.c.l.b16 %v311
        %v348 = vunpack.c.l.b16 %v312
        %v349 = vunpack.c.l.b16 %v313
        %v350 = vpack.c.b16 %v335, %v334
        %v351 = vpack.c.b16 %v337, %v336
        %v352 = vpack.c.b16 %v339, %v338
        %v353 = vpack.c.b16 %v341, %v340
        %v354 = vpack.c.b16 %v343, %v342
        %v355 = vpack.c.b16 %v345, %v344
        %v356 = vpack.c.b16 %v347, %v346
        %v357 = vpack.c.b16 %v349, %v348
        %v362 = vunpack.c.l.b16 %v314
        %v363 = vunpack.c.h.b16 %v314
        %v364 = vunpack.c.l.b16 %v315
        %v365 = vunpack.c.h.b16 %v315
        %v366 = vunpack.c.l.b16 %v316
        %v367 = vunpack.c.h.b16 %v316
        %v368 = vunpack.c.l.b16 %v317
        %v369 = vunpack.c.h.b16 %v317
        %v370 = vpack.c.b16 %v364, %v362
        %v371 = vpack.c.b16 %v365, %v363
        %v372 = vpack.c.b16 %v368, %v366
        %v373 = vpack.c.b16 %v369, %v367
        %vm378 = vcmask 261120
        %v380 = vsel %vm378, %v350, 0
        %v383 = vsel %vm378, %v351, 0
        %v386 = vsel %vm378, %v352, 0
        %v389 = vsel %vm378, %v353, 0
        %v392 = vsel %vm378, %v354, 0
        %v395 = vsel %vm378, %v355, 0
        %v398 = vsel %vm378, %v356, 0
        %v401 = vsel %vm378, %v357, 0
        %403 = vmatprep.subr.bf16.mxu0 0
        %404 = vmatpush1.bf16.msra.mxu0 0
        %405 = vmatprep.subr.bf16.mxu0 0
        %406 = vmatpush1.bf16.msra.mxu0 0
        %407 = vmatprep.subr.bf16.mxu0 0
        %408 = vmatpush1.bf16.msra.mxu0 0
        %409 = vmatprep.subr.bf16.mxu0 0
        %410 = vmatpush1.bf16.msra.mxu0 0
        %411 = vmatprep.subr.bf16.mxu0 0
        %412 = vmatpush1.bf16.msra.mxu0 0
        %413 = vmatprep.subr.bf16.mxu0 0
        %414 = vmatpush1.bf16.msra.mxu0 0
        %415 = vmatprep.subr.bf16.mxu0 %v373
        %416 = vmatpush1.bf16.msra.mxu0 %v372
        %417 = vmatprep.subr.bf16.mxu0 %v371
        %418 = vmatpush1.bf16.msra.mxu0 %v370
        %419 = vmatprep.subr.bf16.mxu0 0
        %420 = vmatpush2.bf16.msra.mxu0 0
        %421 = vmatprep.subr.bf16.mxu0 0
        %422 = vmatpush2.bf16.msra.mxu0 0
        %423 = vmatprep.subr.bf16.mxu0 0
        %424 = vmatpush2.bf16.msra.mxu0 0
        %425 = vmatprep.subr.bf16.mxu0 0
        %426 = vmatpush2.bf16.msra.mxu0 0
        %427 = vmatprep.subr.bf16.mxu0 0
        %428 = vmatpush2.bf16.msra.mxu0 0
        %429 = vmatprep.subr.bf16.mxu0 0
        %430 = vmatpush2.bf16.msra.mxu0 0
        %431 = vmatprep.subr.bf16.mxu0 0
        %432 = vmatpush2.bf16.msra.mxu0 0
        %433 = vmatprep.subr.bf16.mxu0 0
        %434 = vmatpush2.bf16.msra.mxu0 0
        %435 = vmatprep.mubr.bf16.mxu0 0
        %436 = vmatmul.mubr.bf16.gmra.mxu0 %v380
        %v437 = vpop.f32.mrf.mxu0
        %v438 = vadd.f32 0.0, %v437
        %v439 = vpop.f32.mrf.mxu0
        %v440 = vadd.f32 0.0, %v439
        %v441 = vpop.f32.mrf.mxu0
        %v442 = vadd.f32 0.0, %v441
        %v443 = vpop.f32.mrf.mxu0
        %v444 = vadd.f32 0.0, %v443
        %445 = vmatprep.mubr.bf16.mxu0 0
        %446 = vmatmul.mubr.bf16.gmra.mxu0 %v383
        %v447 = vpop.f32.mrf.mxu0
        %v448 = vadd.f32 0.0, %v447
        %v449 = vpop.f32.mrf.mxu0
        %v450 = vadd.f32 0.0, %v449
        %v451 = vpop.f32.mrf.mxu0
        %v452 = vadd.f32 0.0, %v451
        %v453 = vpop.f32.mrf.mxu0
        %v454 = vadd.f32 0.0, %v453
        %455 = vmatprep.mubr.bf16.mxu0 0
        %456 = vmatmul.mubr.bf16.gmra.mxu0 %v386
        %v457 = vpop.f32.mrf.mxu0
        %v458 = vadd.f32 0.0, %v457
        %v459 = vpop.f32.mrf.mxu0
        %v460 = vadd.f32 0.0, %v459
        %v461 = vpop.f32.mrf.mxu0
        %v462 = vadd.f32 0.0, %v461
        %v463 = vpop.f32.mrf.mxu0
        %v464 = vadd.f32 0.0, %v463
        %465 = vmatprep.mubr.bf16.mxu0 0
        %466 = vmatmul.mubr.bf16.gmra.mxu0 %v389
        %v467 = vpop.f32.mrf.mxu0
        %v468 = vadd.f32 0.0, %v467
        %v469 = vpop.f32.mrf.mxu0
        %v470 = vadd.f32 0.0, %v469
        %v471 = vpop.f32.mrf.mxu0
        %v472 = vadd.f32 0.0, %v471
        %v473 = vpop.f32.mrf.mxu0
        %v474 = vadd.f32 0.0, %v473
        %475 = vmatprep.mubr.bf16.mxu0 0
        %476 = vmatmul.mubr.bf16.gmra.mxu0 %v392
        %v477 = vpop.f32.mrf.mxu0
        %v478 = vadd.f32 0.0, %v477
        %v479 = vpop.f32.mrf.mxu0
        %v480 = vadd.f32 0.0, %v479
        %v481 = vpop.f32.mrf.mxu0
        %v482 = vadd.f32 0.0, %v481
        %v483 = vpop.f32.mrf.mxu0
        %v484 = vadd.f32 0.0, %v483
        %485 = vmatprep.mubr.bf16.mxu0 0
        %486 = vmatmul.mubr.bf16.gmra.mxu0 %v395
        %v487 = vpop.f32.mrf.mxu0
        %v488 = vadd.f32 0.0, %v487
        %v489 = vpop.f32.mrf.mxu0
        %v490 = vadd.f32 0.0, %v489
        %v491 = vpop.f32.mrf.mxu0
        %v492 = vadd.f32 0.0, %v491
        %v493 = vpop.f32.mrf.mxu0
        %v494 = vadd.f32 0.0, %v493
        %495 = vmatprep.mubr.bf16.mxu0 0
        %496 = vmatmul.mubr.bf16.gmra.mxu0 %v398
        %v497 = vpop.f32.mrf.mxu0
        %v498 = vadd.f32 0.0, %v497
        %v499 = vpop.f32.mrf.mxu0
        %v500 = vadd.f32 0.0, %v499
        %v501 = vpop.f32.mrf.mxu0
        %v502 = vadd.f32 0.0, %v501
        %v503 = vpop.f32.mrf.mxu0
        %v504 = vadd.f32 0.0, %v503
        %505 = vmatprep.mubr.bf16.mxu0 0
        %506 = vmatmul.mubr.bf16.gmra.mxu0 %v401
        %v507 = vpop.f32.mrf.mxu0
        %v508 = vadd.f32 0.0, %v507
        %v509 = vpop.f32.mrf.mxu0
        %v510 = vadd.f32 0.0, %v509
        %v511 = vpop.f32.mrf.mxu0
        %v512 = vadd.f32 0.0, %v511
        %v513 = vpop.f32.mrf.mxu0
        %v514 = vadd.f32 0.0, %v513
        %515 = vdwg.mxu0
        %v516 = vld [vmem:[%s5] ss:$2 sm:$0x3]
        %s517 = scalar_lea.vmem %s5, 1
        %v518 = vld [vmem:[%s517] ss:$2 sm:$0x3]
        %v519 = vmul.f32 %v438, 10.0
        %v520 = vmul.f32 %v440, 10.0
        %v521 = vmul.f32 %v442, 10.0
        %v522 = vmul.f32 %v444, 10.0
        %v523 = vmul.f32 %v448, 10.0
        %v524 = vmul.f32 %v450, 10.0
        %v525 = vmul.f32 %v452, 10.0
        %v526 = vmul.f32 %v454, 10.0
        %v527 = vmul.f32 %v458, 10.0
        %v528 = vmul.f32 %v460, 10.0
        %v529 = vmul.f32 %v462, 10.0
        %v530 = vmul.f32 %v464, 10.0
        %v531 = vmul.f32 %v468, 10.0
        %v532 = vmul.f32 %v470, 10.0
        %v533 = vmul.f32 %v472, 10.0
        %v534 = vmul.f32 %v474, 10.0
        %v535 = vmul.f32 %v478, 10.0
        %v536 = vmul.f32 %v480, 10.0
        %v537 = vmul.f32 %v482, 10.0
        %v538 = vmul.f32 %v484, 10.0
        %v539 = vmul.f32 %v488, 10.0
        %v540 = vmul.f32 %v490, 10.0
        %v541 = vmul.f32 %v492, 10.0
        %v542 = vmul.f32 %v494, 10.0
        %v543 = vmul.f32 %v498, 10.0
        %v544 = vmul.f32 %v500, 10.0
        %v545 = vmul.f32 %v502, 10.0
        %v546 = vmul.f32 %v504, 10.0
        %v547 = vmul.f32 %v508, 10.0
        %v548 = vmul.f32 %v510, 10.0
        %v549 = vmul.f32 %v512, 10.0
        %v550 = vmul.f32 %v514, 10.0
        %v552 = vlaneseq
        %v553 = vshrl.u32 %v552, 7
        %v554 = vsub.s32 0, %v553
        %v555 = vrot.slane %v516, %v554
        %v556 = vlaneseq
        %v557 = vshrl.u32 %v556, 7
        %v558 = vsub.s32 1, %v557
        %v559 = vrot.slane %v516, %v558
        %v562 = vadd.f32 %v519, %v555
        %v563 = vadd.f32 %v520, %v559
        %v564 = vadd.f32 %v521, %v555
        %v565 = vadd.f32 %v522, %v559
        %v566 = vadd.f32 %v523, %v555
        %v567 = vadd.f32 %v524, %v559
        %v568 = vadd.f32 %v525, %v555
        %v569 = vadd.f32 %v526, %v559
        %v570 = vadd.f32 %v527, %v555
        %v571 = vadd.f32 %v528, %v559
        %v572 = vadd.f32 %v529, %v555
        %v573 = vadd.f32 %v530, %v559
        %v574 = vadd.f32 %v531, %v555
        %v575 = vadd.f32 %v532, %v559
        %v576 = vadd.f32 %v533, %v555
        %v577 = vadd.f32 %v534, %v559
        %v578 = vadd.f32 %v535, %v555
        %v579 = vadd.f32 %v536, %v559
        %v580 = vadd.f32 %v537, %v555
        %v581 = vadd.f32 %v538, %v559
        %v582 = vadd.f32 %v539, %v555
        %v583 = vadd.f32 %v540, %v559
        %v584 = vadd.f32 %v541, %v555
        %v585 = vadd.f32 %v542, %v559
        %v586 = vadd.f32 %v543, %v555
        %v587 = vadd.f32 %v544, %v559
        %v588 = vadd.f32 %v545, %v555
        %v589 = vadd.f32 %v546, %v559
        %v590 = vadd.f32 %v547, %v555
        %v591 = vadd.f32 %v548, %v559
        %v592 = vadd.f32 %v549, %v555
        %v593 = vadd.f32 %v550, %v559
        %v594 = vlaneseq
        %v595 = vand.u32 %v594, 127
        %v596 = vadd.s32 %v595, 128
        %v597 = vlaneseq
        %v598 = vshrl.u32 %v597, 7
        %v599 = vadd.s32 %v598, 8
        %v600 = vadd.s32 %v598, 16
        %v601 = vadd.s32 %v598, 24
        %v602 = vadd.s32 %v598, 32
        %v603 = vadd.s32 %v598, 40
        %v604 = vadd.s32 %v598, 48
        %v605 = vadd.s32 %v598, 56
        %v606 = vadd.s32 %v598, 64
        %v607 = vadd.s32 %v598, 72
        %v608 = vadd.s32 %v598, 80
        %v609 = vadd.s32 %v598, 88
        %v610 = vadd.s32 %v598, 96
        %v611 = vadd.s32 %v598, 104
        %v612 = vadd.s32 %v598, 112
        %v613 = vadd.s32 %v598, 120
        %v614 = vstv %s297
        %v615 = vadd.s32 %v598, %v614
        %v616 = vadd.s32 %v599, %v614
        %v617 = vadd.s32 %v600, %v614
        %v618 = vadd.s32 %v601, %v614
        %v619 = vadd.s32 %v602, %v614
        %v620 = vadd.s32 %v603, %v614
        %v621 = vadd.s32 %v604, %v614
        %v622 = vadd.s32 %v605, %v614
        %v623 = vadd.s32 %v606, %v614
        %v624 = vadd.s32 %v607, %v614
        %v625 = vadd.s32 %v608, %v614
        %v626 = vadd.s32 %v609, %v614
        %v627 = vadd.s32 %v610, %v614
        %v628 = vadd.s32 %v611, %v614
        %v629 = vadd.s32 %v612, %v614
        %v630 = vadd.s32 %v613, %v614
        %vm631 = vcmp.eq.s32.totalorder %v595, %v615
        %vm632 = vcmp.eq.s32.totalorder %v596, %v615
        %vm633 = vcmp.eq.s32.totalorder %v595, %v616
        %vm634 = vcmp.eq.s32.totalorder %v596, %v616
        %vm635 = vcmp.eq.s32.totalorder %v595, %v617
        %vm636 = vcmp.eq.s32.totalorder %v596, %v617
        %vm637 = vcmp.eq.s32.totalorder %v595, %v618
        %vm638 = vcmp.eq.s32.totalorder %v596, %v618
        %vm639 = vcmp.eq.s32.totalorder %v595, %v619
        %vm640 = vcmp.eq.s32.totalorder %v596, %v619
        %vm641 = vcmp.eq.s32.totalorder %v595, %v620
        %vm642 = vcmp.eq.s32.totalorder %v596, %v620
        %vm643 = vcmp.eq.s32.totalorder %v595, %v621
        %vm644 = vcmp.eq.s32.totalorder %v596, %v621
        %vm645 = vcmp.eq.s32.totalorder %v595, %v622
        %vm646 = vcmp.eq.s32.totalorder %v596, %v622
        %vm647 = vcmp.eq.s32.totalorder %v595, %v623
        %vm648 = vcmp.eq.s32.totalorder %v596, %v623
        %vm649 = vcmp.eq.s32.totalorder %v595, %v624
        %vm650 = vcmp.eq.s32.totalorder %v596, %v624
        %vm651 = vcmp.eq.s32.totalorder %v595, %v625
        %vm652 = vcmp.eq.s32.totalorder %v596, %v625
        %vm653 = vcmp.eq.s32.totalorder %v595, %v626
        %vm654 = vcmp.eq.s32.totalorder %v596, %v626
        %vm655 = vcmp.eq.s32.totalorder %v595, %v627
        %vm656 = vcmp.eq.s32.totalorder %v596, %v627
        %vm657 = vcmp.eq.s32.totalorder %v595, %v628
        %vm658 = vcmp.eq.s32.totalorder %v596, %v628
        %vm659 = vcmp.eq.s32.totalorder %v595, %v629
        %vm660 = vcmp.eq.s32.totalorder %v596, %v629
        %vm661 = vcmp.eq.s32.totalorder %v595, %v630
        %vm662 = vcmp.eq.s32.totalorder %v596, %v630
        %v663 = vsel %vm631, -1e+30, %v562
        %v664 = vsel %vm632, -1e+30, %v563
        %v665 = vsel %vm633, -1e+30, %v564
        %v666 = vsel %vm634, -1e+30, %v565
        %v667 = vsel %vm635, -1e+30, %v566
        %v668 = vsel %vm636, -1e+30, %v567
        %v669 = vsel %vm637, -1e+30, %v568
        %v670 = vsel %vm638, -1e+30, %v569
        %v671 = vsel %vm639, -1e+30, %v570
        %v672 = vsel %vm640, -1e+30, %v571
        %v673 = vsel %vm641, -1e+30, %v572
        %v674 = vsel %vm642, -1e+30, %v573
        %v675 = vsel %vm643, -1e+30, %v574
        %v676 = vsel %vm644, -1e+30, %v575
        %v677 = vsel %vm645, -1e+30, %v576
        %v678 = vsel %vm646, -1e+30, %v577
        %v679 = vsel %vm647, -1e+30, %v578
        %v680 = vsel %vm648, -1e+30, %v579
        %v681 = vsel %vm649, -1e+30, %v580
        %v682 = vsel %vm650, -1e+30, %v581
        %v683 = vsel %vm651, -1e+30, %v582
        %v684 = vsel %vm652, -1e+30, %v583
        %v685 = vsel %vm653, -1e+30, %v584
        %v686 = vsel %vm654, -1e+30, %v585
        %v687 = vsel %vm655, -1e+30, %v586
        %v688 = vsel %vm656, -1e+30, %v587
        %v689 = vsel %vm657, -1e+30, %v588
        %v690 = vsel %vm658, -1e+30, %v589
        %v691 = vsel %vm659, -1e+30, %v590
        %v692 = vsel %vm660, -1e+30, %v591
        %v693 = vsel %vm661, -1e+30, %v592
        %v694 = vsel %vm662, -1e+30, %v593
        %v695 = vmax.f32 %v663, %v664
        %696 = vmax.xlane.f32.xlu0 %v695
        %v697 = vpop.xlane.xlu0 %696
        %v698 = vmax.f32 %v665, %v666
        %699 = vmax.xlane.f32.xlu0 %v698
        %v700 = vpop.xlane.xlu0 %699
        %v701 = vmax.f32 %v667, %v668
        %702 = vmax.xlane.f32.xlu0 %v701
        %v703 = vpop.xlane.xlu0 %702
        %v704 = vmax.f32 %v669, %v670
        %705 = vmax.xlane.f32.xlu0 %v704
        %v706 = vpop.xlane.xlu0 %705
        %v707 = vmax.f32 %v671, %v672
        %708 = vmax.xlane.f32.xlu0 %v707
        %v709 = vpop.xlane.xlu0 %708
        %v710 = vmax.f32 %v673, %v674
        %711 = vmax.xlane.f32.xlu0 %v710
        %v712 = vpop.xlane.xlu0 %711
        %v713 = vmax.f32 %v675, %v676
        %714 = vmax.xlane.f32.xlu0 %v713
        %v715 = vpop.xlane.xlu0 %714
        %v716 = vmax.f32 %v677, %v678
        %717 = vmax.xlane.f32.xlu0 %v716
        %v718 = vpop.xlane.xlu0 %717
        %v719 = vmax.f32 %v679, %v680
        %720 = vmax.xlane.f32.xlu0 %v719
        %v721 = vpop.xlane.xlu0 %720
        %v722 = vmax.f32 %v681, %v682
        %723 = vmax.xlane.f32.xlu0 %v722
        %v724 = vpop.xlane.xlu0 %723
        %v725 = vmax.f32 %v683, %v684
        %726 = vmax.xlane.f32.xlu0 %v725
        %v727 = vpop.xlane.xlu0 %726
        %v728 = vmax.f32 %v685, %v686
        %729 = vmax.xlane.f32.xlu0 %v728
        %v730 = vpop.xlane.xlu0 %729
        %v731 = vmax.f32 %v687, %v688
        %732 = vmax.xlane.f32.xlu0 %v731
        %v733 = vpop.xlane.xlu0 %732
        %v734 = vmax.f32 %v689, %v690
        %735 = vmax.xlane.f32.xlu0 %v734
        %v736 = vpop.xlane.xlu0 %735
        %v737 = vmax.f32 %v691, %v692
        %738 = vmax.xlane.f32.xlu0 %v737
        %v739 = vpop.xlane.xlu0 %738
        %v740 = vmax.f32 %v693, %v694
        %741 = vmax.xlane.f32.xlu0 %v740
        %v742 = vpop.xlane.xlu0 %741
        %v743 = vsub.f32 %v663, %v697
        %v744 = vsub.f32 %v664, %v697
        %v745 = vsub.f32 %v665, %v700
        %v746 = vsub.f32 %v666, %v700
        %v747 = vsub.f32 %v667, %v703
        %v748 = vsub.f32 %v668, %v703
        %v749 = vsub.f32 %v669, %v706
        %v750 = vsub.f32 %v670, %v706
        %v751 = vsub.f32 %v671, %v709
        %v752 = vsub.f32 %v672, %v709
        %v753 = vsub.f32 %v673, %v712
        %v754 = vsub.f32 %v674, %v712
        %v755 = vsub.f32 %v675, %v715
        %v756 = vsub.f32 %v676, %v715
        %v757 = vsub.f32 %v677, %v718
        %v758 = vsub.f32 %v678, %v718
        %v759 = vsub.f32 %v679, %v721
        %v760 = vsub.f32 %v680, %v721
        %v761 = vsub.f32 %v681, %v724
        %v762 = vsub.f32 %v682, %v724
        %v763 = vsub.f32 %v683, %v727
        %v764 = vsub.f32 %v684, %v727
        %v765 = vsub.f32 %v685, %v730
        %v766 = vsub.f32 %v686, %v730
        %v767 = vsub.f32 %v687, %v733
        %v768 = vsub.f32 %v688, %v733
        %v769 = vsub.f32 %v689, %v736
        %v770 = vsub.f32 %v690, %v736
        %v771 = vsub.f32 %v691, %v739
        %v772 = vsub.f32 %v692, %v739
        %v773 = vsub.f32 %v693, %v742
        %v774 = vsub.f32 %v694, %v742
        %v775 = vmul.f32 %v743, 1.442695
        %v776 = vpow.pop %v775
        %v777 = vmul.f32 %v744, 1.442695
        %v778 = vpow.pop %v777
        %v779 = vmul.f32 %v745, 1.442695
        %v780 = vpow.pop %v779
        %v781 = vmul.f32 %v746, 1.442695
        %v782 = vpow.pop %v781
        %v783 = vmul.f32 %v747, 1.442695
        %v784 = vpow.pop %v783
        %v785 = vmul.f32 %v748, 1.442695
        %v786 = vpow.pop %v785
        %v787 = vmul.f32 %v749, 1.442695
        %v788 = vpow.pop %v787
        %v789 = vmul.f32 %v750, 1.442695
        %v790 = vpow.pop %v789
        %v791 = vmul.f32 %v751, 1.442695
        %v792 = vpow.pop %v791
        %v793 = vmul.f32 %v752, 1.442695
        %v794 = vpow.pop %v793
        %v795 = vmul.f32 %v753, 1.442695
        %v796 = vpow.pop %v795
        %v797 = vmul.f32 %v754, 1.442695
        %v798 = vpow.pop %v797
        %v799 = vmul.f32 %v755, 1.442695
        %v800 = vpow.pop %v799
        %v801 = vmul.f32 %v756, 1.442695
        %v802 = vpow.pop %v801
        %v803 = vmul.f32 %v757, 1.442695
        %v804 = vpow.pop %v803
        %v805 = vmul.f32 %v758, 1.442695
        %v806 = vpow.pop %v805
        %v807 = vmul.f32 %v759, 1.442695
        %v808 = vpow.pop %v807
        %v809 = vmul.f32 %v760, 1.442695
        %v810 = vpow.pop %v809
        %v811 = vmul.f32 %v761, 1.442695
        %v812 = vpow.pop %v811
        %v813 = vmul.f32 %v762, 1.442695
        %v814 = vpow.pop %v813
        %v815 = vmul.f32 %v763, 1.442695
        %v816 = vpow.pop %v815
        %v817 = vmul.f32 %v764, 1.442695
        %v818 = vpow.pop %v817
        %v819 = vmul.f32 %v765, 1.442695
        %v820 = vpow.pop %v819
        %v821 = vmul.f32 %v766, 1.442695
        %v822 = vpow.pop %v821
        %v823 = vmul.f32 %v767, 1.442695
        %v824 = vpow.pop %v823
        %v825 = vmul.f32 %v768, 1.442695
        %v826 = vpow.pop %v825
        %v827 = vmul.f32 %v769, 1.442695
        %v828 = vpow.pop %v827
        %v829 = vmul.f32 %v770, 1.442695
        %v830 = vpow.pop %v829
        %v831 = vmul.f32 %v771, 1.442695
        %v832 = vpow.pop %v831
        %v833 = vmul.f32 %v772, 1.442695
        %v834 = vpow.pop %v833
        %v835 = vmul.f32 %v773, 1.442695
        %v836 = vpow.pop %v835
        %v837 = vmul.f32 %v774, 1.442695
        %v838 = vpow.pop %v837
        %v839 = vld [vmem:[%s294] sm:$0xff]
        %v840 = vld [vmem:[%s294 + $0x8] sm:$0xff]
        %v841 = vld [vmem:[%s294 + $0x10] sm:$0xff]
        %v842 = vld [vmem:[%s294 + $0x18] sm:$0xff]
        %v843 = vld [vmem:[%s294 + $0x20] sm:$0xff]
        %v844 = vld [vmem:[%s294 + $0x28] sm:$0xff]
        %v845 = vld [vmem:[%s294 + $0x30] sm:$0xff]
        %v846 = vld [vmem:[%s294 + $0x38] sm:$0xff]
        %v847 = vld [vmem:[%s294 + $0x40] sm:$0xff]
        %v848 = vld [vmem:[%s294 + $0x48] sm:$0xff]
        %v849 = vld [vmem:[%s294 + $0x50] sm:$0xff]
        %v850 = vld [vmem:[%s294 + $0x58] sm:$0xff]
        %v851 = vld [vmem:[%s294 + $0x60] sm:$0xff]
        %v852 = vld [vmem:[%s294 + $0x68] sm:$0xff]
        %v853 = vld [vmem:[%s294 + $0x70] sm:$0xff]
        %v854 = vld [vmem:[%s294 + $0x78] sm:$0xff]
        %v855 = vadd.f32 %v776, %v778
        %856 = vadd.xlane.f32.xlu0 %v855
        %v857 = vpop.xlane.xlu0 %856
        %v858 = vadd.f32 %v780, %v782
        %859 = vadd.xlane.f32.xlu0 %v858
        %v860 = vpop.xlane.xlu0 %859
        %v861 = vadd.f32 %v784, %v786
        %862 = vadd.xlane.f32.xlu0 %v861
        %v863 = vpop.xlane.xlu0 %862
        %v864 = vadd.f32 %v788, %v790
        %865 = vadd.xlane.f32.xlu0 %v864
        %v866 = vpop.xlane.xlu0 %865
        %v867 = vadd.f32 %v792, %v794
        %868 = vadd.xlane.f32.xlu0 %v867
        %v869 = vpop.xlane.xlu0 %868
        %v870 = vadd.f32 %v796, %v798
        %871 = vadd.xlane.f32.xlu0 %v870
        %v872 = vpop.xlane.xlu0 %871
        %v873 = vadd.f32 %v800, %v802
        %874 = vadd.xlane.f32.xlu0 %v873
        %v875 = vpop.xlane.xlu0 %874
        %v876 = vadd.f32 %v804, %v806
        %877 = vadd.xlane.f32.xlu0 %v876
        %v878 = vpop.xlane.xlu0 %877
        %v879 = vadd.f32 %v808, %v810
        %880 = vadd.xlane.f32.xlu0 %v879
        %v881 = vpop.xlane.xlu0 %880
        %v882 = vadd.f32 %v812, %v814
        %883 = vadd.xlane.f32.xlu0 %v882
        %v884 = vpop.xlane.xlu0 %883
        %v885 = vadd.f32 %v816, %v818
        %886 = vadd.xlane.f32.xlu0 %v885
        %v887 = vpop.xlane.xlu0 %886
        %v888 = vadd.f32 %v820, %v822
        %889 = vadd.xlane.f32.xlu0 %v888
        %v890 = vpop.xlane.xlu0 %889
        %v891 = vadd.f32 %v824, %v826
        %892 = vadd.xlane.f32.xlu0 %v891
        %v893 = vpop.xlane.xlu0 %892
        %v894 = vadd.f32 %v828, %v830
        %895 = vadd.xlane.f32.xlu0 %v894
        %v896 = vpop.xlane.xlu0 %895
        %v897 = vadd.f32 %v832, %v834
        %898 = vadd.xlane.f32.xlu0 %v897
        %v899 = vpop.xlane.xlu0 %898
        %v900 = vadd.f32 %v836, %v838
        %901 = vadd.xlane.f32.xlu0 %v900
        %v902 = vpop.xlane.xlu0 %901
        %v903 = vlog2.pop %v857
        %v904 = vmul.f32 %v903, 0.6931472
        %v905 = vlog2.pop %v860
        %v906 = vmul.f32 %v905, 0.6931472
        %v907 = vlog2.pop %v863
        %v908 = vmul.f32 %v907, 0.6931472
        %v909 = vlog2.pop %v866
        %v910 = vmul.f32 %v909, 0.6931472
        %v911 = vlog2.pop %v869
        %v912 = vmul.f32 %v911, 0.6931472
        %v913 = vlog2.pop %v872
        %v914 = vmul.f32 %v913, 0.6931472
        %v915 = vlog2.pop %v875
        %v916 = vmul.f32 %v915, 0.6931472
        %v917 = vlog2.pop %v878
        %v918 = vmul.f32 %v917, 0.6931472
        %v919 = vlog2.pop %v881
        %v920 = vmul.f32 %v919, 0.6931472
        %v921 = vlog2.pop %v884
        %v922 = vmul.f32 %v921, 0.6931472
        %v923 = vlog2.pop %v887
        %v924 = vmul.f32 %v923, 0.6931472
        %v925 = vlog2.pop %v890
        %v926 = vmul.f32 %v925, 0.6931472
        %v927 = vlog2.pop %v893
        %v928 = vmul.f32 %v927, 0.6931472
        %v929 = vlog2.pop %v896
        %v930 = vmul.f32 %v929, 0.6931472
        %v931 = vlog2.pop %v899
        %v932 = vmul.f32 %v931, 0.6931472
        %v933 = vlog2.pop %v902
        %v934 = vmul.f32 %v933, 0.6931472
        %v935 = vadd.f32 %v697, %v904
        %v936 = vadd.f32 %v700, %v906
        %v937 = vadd.f32 %v703, %v908
        %v938 = vadd.f32 %v706, %v910
        %v939 = vadd.f32 %v709, %v912
        %v940 = vadd.f32 %v712, %v914
        %v941 = vadd.f32 %v715, %v916
        %v942 = vadd.f32 %v718, %v918
        %v943 = vadd.f32 %v721, %v920
        %v944 = vadd.f32 %v724, %v922
        %v945 = vadd.f32 %v727, %v924
        %v946 = vadd.f32 %v730, %v926
        %v947 = vadd.f32 %v733, %v928
        %v948 = vadd.f32 %v736, %v930
        %v949 = vadd.f32 %v739, %v932
        %v950 = vadd.f32 %v742, %v934
        %v951 = vmul.f32 %v935, %v839
        %v952 = vmul.f32 %v936, %v840
        %v953 = vmul.f32 %v937, %v841
        %v954 = vmul.f32 %v938, %v842
        %v955 = vmul.f32 %v939, %v843
        %v956 = vmul.f32 %v940, %v844
        %v957 = vmul.f32 %v941, %v845
        %v958 = vmul.f32 %v942, %v846
        %v959 = vmul.f32 %v943, %v847
        %v960 = vmul.f32 %v944, %v848
        %v961 = vmul.f32 %v945, %v849
        %v962 = vmul.f32 %v946, %v850
        %v963 = vmul.f32 %v947, %v851
        %v964 = vmul.f32 %v948, %v852
        %v965 = vmul.f32 %v949, %v853
        %v966 = vmul.f32 %v950, %v854
        %vm967 = vcmask 7168
        %v968 = vsel %vm967, %v951, 0.0
        %v969 = vsel %vm967, %v952, 0.0
        %v970 = vadd.f32 %v968, %v969
        %v971 = vsel %vm967, %v953, 0.0
        %v972 = vadd.f32 %v970, %v971
        %v973 = vsel %vm967, %v954, 0.0
        %v974 = vadd.f32 %v972, %v973
        %v975 = vsel %vm967, %v955, 0.0
        %v976 = vadd.f32 %v974, %v975
        %v977 = vsel %vm967, %v956, 0.0
        %v978 = vadd.f32 %v976, %v977
        %v979 = vsel %vm967, %v957, 0.0
        %v980 = vadd.f32 %v978, %v979
        %v981 = vsel %vm967, %v958, 0.0
        %v982 = vadd.f32 %v980, %v981
        %v983 = vsel %vm967, %v959, 0.0
        %v984 = vadd.f32 %v982, %v983
        %v985 = vsel %vm967, %v960, 0.0
        %v986 = vadd.f32 %v984, %v985
        %v987 = vsel %vm967, %v961, 0.0
        %v988 = vadd.f32 %v986, %v987
        %v989 = vsel %vm967, %v962, 0.0
        %v990 = vadd.f32 %v988, %v989
        %v991 = vsel %vm967, %v963, 0.0
        %v992 = vadd.f32 %v990, %v991
        %v993 = vsel %vm967, %v964, 0.0
        %v994 = vadd.f32 %v992, %v993
        %v995 = vsel %vm967, %v965, 0.0
        %v996 = vadd.f32 %v994, %v995
        %v997 = vsel %vm967, %v966, 0.0
        %v998 = vadd.f32 %v996, %v997
        %999 = vadd.xlane.f32.xlu0 %v998
        %v1000 = vpop.xlane.xlu0 %999
        %v1001 = vrot.slane %v1000, 4
        %v1002 = vadd.f32 %v1000, %v1001
        %v1003 = vrot.slane %v1002, 2
        %v1004 = vadd.f32 %v1002, %v1003
        %v1005 = vrot.slane %v1004, 1
        %v1006 = vadd.f32 %v1004, %v1005
        %s1007 = vtos %v1006
        %v1009 = vlaneseq
        %v1010 = vshrl.u32 %v1009, 7
        %v1011 = vsub.s32 0, %v1010
        %v1012 = vrot.slane %v518, %v1011
        %v1013 = vlaneseq
        %v1014 = vshrl.u32 %v1013, 7
        %v1015 = vsub.s32 1, %v1014
        %v1016 = vrot.slane %v518, %v1015
        %v1019 = vmul.f32 %v776, %v1012
        %v1020 = vmul.f32 %v778, %v1016
        %v1021 = vmul.f32 %v780, %v1012
        %v1022 = vmul.f32 %v782, %v1016
        %v1023 = vmul.f32 %v784, %v1012
        %v1024 = vmul.f32 %v786, %v1016
        %v1025 = vmul.f32 %v788, %v1012
        %v1026 = vmul.f32 %v790, %v1016
        %v1027 = vmul.f32 %v792, %v1012
        %v1028 = vmul.f32 %v794, %v1016
        %v1029 = vmul.f32 %v796, %v1012
        %v1030 = vmul.f32 %v798, %v1016
        %v1031 = vmul.f32 %v800, %v1012
        %v1032 = vmul.f32 %v802, %v1016
        %v1033 = vmul.f32 %v804, %v1012
        %v1034 = vmul.f32 %v806, %v1016
        %v1035 = vmul.f32 %v808, %v1012
        %v1036 = vmul.f32 %v810, %v1016
        %v1037 = vmul.f32 %v812, %v1012
        %v1038 = vmul.f32 %v814, %v1016
        %v1039 = vmul.f32 %v816, %v1012
        %v1040 = vmul.f32 %v818, %v1016
        %v1041 = vmul.f32 %v820, %v1012
        %v1042 = vmul.f32 %v822, %v1016
        %v1043 = vmul.f32 %v824, %v1012
        %v1044 = vmul.f32 %v826, %v1016
        %v1045 = vmul.f32 %v828, %v1012
        %v1046 = vmul.f32 %v830, %v1016
        %v1047 = vmul.f32 %v832, %v1012
        %v1048 = vmul.f32 %v834, %v1016
        %v1049 = vmul.f32 %v836, %v1012
        %v1050 = vmul.f32 %v838, %v1016
        %v1051 = vadd.f32 %v1019, %v1020
        %1052 = vadd.xlane.f32.xlu0 %v1051
        %v1053 = vpop.xlane.xlu0 %1052
        %v1054 = vadd.f32 %v1021, %v1022
        %1055 = vadd.xlane.f32.xlu0 %v1054
        %v1056 = vpop.xlane.xlu0 %1055
        %v1057 = vadd.f32 %v1023, %v1024
        %1058 = vadd.xlane.f32.xlu0 %v1057
        %v1059 = vpop.xlane.xlu0 %1058
        %v1060 = vadd.f32 %v1025, %v1026
        %1061 = vadd.xlane.f32.xlu0 %v1060
        %v1062 = vpop.xlane.xlu0 %1061
        %v1063 = vadd.f32 %v1027, %v1028
        %1064 = vadd.xlane.f32.xlu0 %v1063
        %v1065 = vpop.xlane.xlu0 %1064
        %v1066 = vadd.f32 %v1029, %v1030
        %1067 = vadd.xlane.f32.xlu0 %v1066
        %v1068 = vpop.xlane.xlu0 %1067
        %v1069 = vadd.f32 %v1031, %v1032
        %1070 = vadd.xlane.f32.xlu0 %v1069
        %v1071 = vpop.xlane.xlu0 %1070
        %v1072 = vadd.f32 %v1033, %v1034
        %1073 = vadd.xlane.f32.xlu0 %v1072
        %v1074 = vpop.xlane.xlu0 %1073
        %v1075 = vadd.f32 %v1035, %v1036
        %1076 = vadd.xlane.f32.xlu0 %v1075
        %v1077 = vpop.xlane.xlu0 %1076
        %v1078 = vadd.f32 %v1037, %v1038
        %1079 = vadd.xlane.f32.xlu0 %v1078
        %v1080 = vpop.xlane.xlu0 %1079
        %v1081 = vadd.f32 %v1039, %v1040
        %1082 = vadd.xlane.f32.xlu0 %v1081
        %v1083 = vpop.xlane.xlu0 %1082
        %v1084 = vadd.f32 %v1041, %v1042
        %1085 = vadd.xlane.f32.xlu0 %v1084
        %v1086 = vpop.xlane.xlu0 %1085
        %v1087 = vadd.f32 %v1043, %v1044
        %1088 = vadd.xlane.f32.xlu0 %v1087
        %v1089 = vpop.xlane.xlu0 %1088
        %v1090 = vadd.f32 %v1045, %v1046
        %1091 = vadd.xlane.f32.xlu0 %v1090
        %v1092 = vpop.xlane.xlu0 %1091
        %v1093 = vadd.f32 %v1047, %v1048
        %1094 = vadd.xlane.f32.xlu0 %v1093
        %v1095 = vpop.xlane.xlu0 %1094
        %v1096 = vadd.f32 %v1049, %v1050
        %1097 = vadd.xlane.f32.xlu0 %v1096
        %v1098 = vpop.xlane.xlu0 %1097
        %v1099 = vmax.f32 %v1053, 1e-30
        %v1100 = vmax.f32 %v1056, 1e-30
        %v1101 = vmax.f32 %v1059, 1e-30
        %v1102 = vmax.f32 %v1062, 1e-30
        %v1103 = vmax.f32 %v1065, 1e-30
        %v1104 = vmax.f32 %v1068, 1e-30
        %v1105 = vmax.f32 %v1071, 1e-30
        %v1106 = vmax.f32 %v1074, 1e-30
        %v1107 = vmax.f32 %v1077, 1e-30
        %v1108 = vmax.f32 %v1080, 1e-30
        %v1109 = vmax.f32 %v1083, 1e-30
        %v1110 = vmax.f32 %v1086, 1e-30
        %v1111 = vmax.f32 %v1089, 1e-30
        %v1112 = vmax.f32 %v1092, 1e-30
        %v1113 = vmax.f32 %v1095, 1e-30
        %v1114 = vmax.f32 %v1098, 1e-30
        %v1115 = vlog2.pop %v1099
        %v1116 = vmul.f32 %v1115, 0.6931472
        %v1117 = vlog2.pop %v1100
        %v1118 = vmul.f32 %v1117, 0.6931472
        %v1119 = vlog2.pop %v1101
        %v1120 = vmul.f32 %v1119, 0.6931472
        %v1121 = vlog2.pop %v1102
        %v1122 = vmul.f32 %v1121, 0.6931472
        %v1123 = vlog2.pop %v1103
        %v1124 = vmul.f32 %v1123, 0.6931472
        %v1125 = vlog2.pop %v1104
        %v1126 = vmul.f32 %v1125, 0.6931472
        %v1127 = vlog2.pop %v1105
        %v1128 = vmul.f32 %v1127, 0.6931472
        %v1129 = vlog2.pop %v1106
        %v1130 = vmul.f32 %v1129, 0.6931472
        %v1131 = vlog2.pop %v1107
        %v1132 = vmul.f32 %v1131, 0.6931472
        %v1133 = vlog2.pop %v1108
        %v1134 = vmul.f32 %v1133, 0.6931472
        %v1135 = vlog2.pop %v1109
        %v1136 = vmul.f32 %v1135, 0.6931472
        %v1137 = vlog2.pop %v1110
        %v1138 = vmul.f32 %v1137, 0.6931472
        %v1139 = vlog2.pop %v1111
        %v1140 = vmul.f32 %v1139, 0.6931472
        %v1141 = vlog2.pop %v1112
        %v1142 = vmul.f32 %v1141, 0.6931472
        %v1143 = vlog2.pop %v1113
        %v1144 = vmul.f32 %v1143, 0.6931472
        %v1145 = vlog2.pop %v1114
        %v1146 = vmul.f32 %v1145, 0.6931472
        %v1147 = vadd.f32 %v697, %v1116
        %v1148 = vadd.f32 %v700, %v1118
        %v1149 = vadd.f32 %v703, %v1120
        %v1150 = vadd.f32 %v706, %v1122
        %v1151 = vadd.f32 %v709, %v1124
        %v1152 = vadd.f32 %v712, %v1126
        %v1153 = vadd.f32 %v715, %v1128
        %v1154 = vadd.f32 %v718, %v1130
        %v1155 = vadd.f32 %v721, %v1132
        %v1156 = vadd.f32 %v724, %v1134
        %v1157 = vadd.f32 %v727, %v1136
        %v1158 = vadd.f32 %v730, %v1138
        %v1159 = vadd.f32 %v733, %v1140
        %v1160 = vadd.f32 %v736, %v1142
        %v1161 = vadd.f32 %v739, %v1144
        %v1162 = vadd.f32 %v742, %v1146
        %v1163 = vld [vmem:[%s288] sm:$0xff]
        %v1164 = vld [vmem:[%s288 + $0x8] sm:$0xff]
        %v1165 = vld [vmem:[%s288 + $0x10] sm:$0xff]
        %v1166 = vld [vmem:[%s288 + $0x18] sm:$0xff]
        %v1167 = vld [vmem:[%s288 + $0x20] sm:$0xff]
        %v1168 = vld [vmem:[%s288 + $0x28] sm:$0xff]
        %v1169 = vld [vmem:[%s288 + $0x30] sm:$0xff]
        %v1170 = vld [vmem:[%s288 + $0x38] sm:$0xff]
        %v1171 = vld [vmem:[%s288 + $0x40] sm:$0xff]
        %v1172 = vld [vmem:[%s288 + $0x48] sm:$0xff]
        %v1173 = vld [vmem:[%s288 + $0x50] sm:$0xff]
        %v1174 = vld [vmem:[%s288 + $0x58] sm:$0xff]
        %v1175 = vld [vmem:[%s288 + $0x60] sm:$0xff]
        %v1176 = vld [vmem:[%s288 + $0x68] sm:$0xff]
        %v1177 = vld [vmem:[%s288 + $0x70] sm:$0xff]
        %v1178 = vld [vmem:[%s288 + $0x78] sm:$0xff]
        %v1179 = vld [vmem:[%s3] sm:$0x3]
        %1180 = vset.pattern.permute.xlu0 0
        %1181 = vperm.xlu0 %1180, %v1163
        %v1182 = vpop.permute.xlu0 %1181
        %1183 = vset.pattern.permute.xlu0 0
        %1184 = vperm.xlu0 %1183, %v1164
        %v1185 = vpop.permute.xlu0 %1184
        %1186 = vset.pattern.permute.xlu0 0
        %1187 = vperm.xlu0 %1186, %v1165
        %v1188 = vpop.permute.xlu0 %1187
        %1189 = vset.pattern.permute.xlu0 0
        %1190 = vperm.xlu0 %1189, %v1166
        %v1191 = vpop.permute.xlu0 %1190
        %1192 = vset.pattern.permute.xlu0 0
        %1193 = vperm.xlu0 %1192, %v1167
        %v1194 = vpop.permute.xlu0 %1193
        %1195 = vset.pattern.permute.xlu0 0
        %1196 = vperm.xlu0 %1195, %v1168
        %v1197 = vpop.permute.xlu0 %1196
        %1198 = vset.pattern.permute.xlu0 0
        %1199 = vperm.xlu0 %1198, %v1169
        %v1200 = vpop.permute.xlu0 %1199
        %1201 = vset.pattern.permute.xlu0 0
        %1202 = vperm.xlu0 %1201, %v1170
        %v1203 = vpop.permute.xlu0 %1202
        %1204 = vset.pattern.permute.xlu0 0
        %1205 = vperm.xlu0 %1204, %v1171
        %v1206 = vpop.permute.xlu0 %1205
        %1207 = vset.pattern.permute.xlu0 0
        %1208 = vperm.xlu0 %1207, %v1172
        %v1209 = vpop.permute.xlu0 %1208
        %1210 = vset.pattern.permute.xlu0 0
        %1211 = vperm.xlu0 %1210, %v1173
        %v1212 = vpop.permute.xlu0 %1211
        %1213 = vset.pattern.permute.xlu0 0
        %1214 = vperm.xlu0 %1213, %v1174
        %v1215 = vpop.permute.xlu0 %1214
        %1216 = vset.pattern.permute.xlu0 0
        %1217 = vperm.xlu0 %1216, %v1175
        %v1218 = vpop.permute.xlu0 %1217
        %1219 = vset.pattern.permute.xlu0 0
        %1220 = vperm.xlu0 %1219, %v1176
        %v1221 = vpop.permute.xlu0 %1220
        %1222 = vset.pattern.permute.xlu0 0
        %1223 = vperm.xlu0 %1222, %v1177
        %v1224 = vpop.permute.xlu0 %1223
        %1225 = vset.pattern.permute.xlu0 0
        %1226 = vperm.xlu0 %1225, %v1178
        %v1227 = vpop.permute.xlu0 %1226
        %v1228 = vlaneseq
        %v1229 = vshrl.u32 %v1228, 7
        %v1230 = vsub.s32 0, %v1229
        %v1231 = vrot.slane %v1179, %v1230
        %v1232 = vlaneseq
        %v1233 = vshrl.u32 %v1232, 7
        %v1234 = vsub.s32 1, %v1233
        %v1235 = vrot.slane %v1179, %v1234
        %vm1236 = vcmp.eq.s32.totalorder %v1182, %v1231
        %vm1237 = vcmp.eq.s32.totalorder %v1182, %v1235
        %vm1238 = vcmp.eq.s32.totalorder %v1185, %v1231
        %vm1239 = vcmp.eq.s32.totalorder %v1185, %v1235
        %vm1240 = vcmp.eq.s32.totalorder %v1188, %v1231
        %vm1241 = vcmp.eq.s32.totalorder %v1188, %v1235
        %vm1242 = vcmp.eq.s32.totalorder %v1191, %v1231
        %vm1243 = vcmp.eq.s32.totalorder %v1191, %v1235
        %vm1244 = vcmp.eq.s32.totalorder %v1194, %v1231
        %vm1245 = vcmp.eq.s32.totalorder %v1194, %v1235
        %vm1246 = vcmp.eq.s32.totalorder %v1197, %v1231
        %vm1247 = vcmp.eq.s32.totalorder %v1197, %v1235
        %vm1248 = vcmp.eq.s32.totalorder %v1200, %v1231
        %vm1249 = vcmp.eq.s32.totalorder %v1200, %v1235
        %vm1250 = vcmp.eq.s32.totalorder %v1203, %v1231
        %vm1251 = vcmp.eq.s32.totalorder %v1203, %v1235
        %vm1252 = vcmp.eq.s32.totalorder %v1206, %v1231
        %vm1253 = vcmp.eq.s32.totalorder %v1206, %v1235
        %vm1254 = vcmp.eq.s32.totalorder %v1209, %v1231
        %vm1255 = vcmp.eq.s32.totalorder %v1209, %v1235
        %vm1256 = vcmp.eq.s32.totalorder %v1212, %v1231
        %vm1257 = vcmp.eq.s32.totalorder %v1212, %v1235
        %vm1258 = vcmp.eq.s32.totalorder %v1215, %v1231
        %vm1259 = vcmp.eq.s32.totalorder %v1215, %v1235
        %vm1260 = vcmp.eq.s32.totalorder %v1218, %v1231
        %vm1261 = vcmp.eq.s32.totalorder %v1218, %v1235
        %vm1262 = vcmp.eq.s32.totalorder %v1221, %v1231
        %vm1263 = vcmp.eq.s32.totalorder %v1221, %v1235
        %vm1264 = vcmp.eq.s32.totalorder %v1224, %v1231
        %vm1265 = vcmp.eq.s32.totalorder %v1224, %v1235
        %vm1266 = vcmp.eq.s32.totalorder %v1227, %v1231
        %vm1267 = vcmp.eq.s32.totalorder %v1227, %v1235
        %v1268 = vsel %vm1236, 1, 0
        %v1269 = vsel %vm1237, 1, 0
        %v1270 = vsel %vm1238, 1, 0
        %v1271 = vsel %vm1239, 1, 0
        %v1272 = vsel %vm1240, 1, 0
        %v1273 = vsel %vm1241, 1, 0
        %v1274 = vsel %vm1242, 1, 0
        %v1275 = vsel %vm1243, 1, 0
        %v1276 = vsel %vm1244, 1, 0
        %v1277 = vsel %vm1245, 1, 0
        %v1278 = vsel %vm1246, 1, 0
        %v1279 = vsel %vm1247, 1, 0
        %v1280 = vsel %vm1248, 1, 0
        %v1281 = vsel %vm1249, 1, 0
        %v1282 = vsel %vm1250, 1, 0
        %v1283 = vsel %vm1251, 1, 0
        %v1284 = vsel %vm1252, 1, 0
        %v1285 = vsel %vm1253, 1, 0
        %v1286 = vsel %vm1254, 1, 0
        %v1287 = vsel %vm1255, 1, 0
        %v1288 = vsel %vm1256, 1, 0
        %v1289 = vsel %vm1257, 1, 0
        %v1290 = vsel %vm1258, 1, 0
        %v1291 = vsel %vm1259, 1, 0
        %v1292 = vsel %vm1260, 1, 0
        %v1293 = vsel %vm1261, 1, 0
        %v1294 = vsel %vm1262, 1, 0
        %v1295 = vsel %vm1263, 1, 0
        %v1296 = vsel %vm1264, 1, 0
        %v1297 = vsel %vm1265, 1, 0
        %v1298 = vsel %vm1266, 1, 0
        %v1299 = vsel %vm1267, 1, 0
        %v1300 = vadd.s32 %v1268, %v1269
        %v1301 = vand.u32 %v1300, 65535
        %v1302 = vshrl.u32 %v1300, 16
        %v1303 = vcvt.s32.f32 %v1301
        %v1304 = vcvt.s32.f32 %v1302
        %1305 = vadd.xlane.f32.xlu0 %v1303
        %v1306 = vpop.xlane.xlu0 %1305
        %1307 = vadd.xlane.f32.xlu0 %v1304
        %v1308 = vpop.xlane.xlu0 %1307
        %v1309 = vcvt.f32.s32 %v1306
        %v1310 = vcvt.f32.s32 %v1308
        %v1311 = vshll.u32 %v1310, 16
        %v1312 = vadd.s32 %v1311, %v1309
        %v1313 = vadd.s32 %v1270, %v1271
        %v1314 = vand.u32 %v1313, 65535
        %v1315 = vshrl.u32 %v1313, 16
        %v1316 = vcvt.s32.f32 %v1314
        %v1317 = vcvt.s32.f32 %v1315
        %1318 = vadd.xlane.f32.xlu0 %v1316
        %v1319 = vpop.xlane.xlu0 %1318
        %1320 = vadd.xlane.f32.xlu0 %v1317
        %v1321 = vpop.xlane.xlu0 %1320
        %v1322 = vcvt.f32.s32 %v1319
        %v1323 = vcvt.f32.s32 %v1321
        %v1324 = vshll.u32 %v1323, 16
        %v1325 = vadd.s32 %v1324, %v1322
        %v1326 = vadd.s32 %v1272, %v1273
        %v1327 = vand.u32 %v1326, 65535
        %v1328 = vshrl.u32 %v1326, 16
        %v1329 = vcvt.s32.f32 %v1327
        %v1330 = vcvt.s32.f32 %v1328
        %1331 = vadd.xlane.f32.xlu0 %v1329
        %v1332 = vpop.xlane.xlu0 %1331
        %1333 = vadd.xlane.f32.xlu0 %v1330
        %v1334 = vpop.xlane.xlu0 %1333
        %v1335 = vcvt.f32.s32 %v1332
        %v1336 = vcvt.f32.s32 %v1334
        %v1337 = vshll.u32 %v1336, 16
        %v1338 = vadd.s32 %v1337, %v1335
        %v1339 = vadd.s32 %v1274, %v1275
        %v1340 = vand.u32 %v1339, 65535
        %v1341 = vshrl.u32 %v1339, 16
        %v1342 = vcvt.s32.f32 %v1340
        %v1343 = vcvt.s32.f32 %v1341
        %1344 = vadd.xlane.f32.xlu0 %v1342
        %v1345 = vpop.xlane.xlu0 %1344
        %1346 = vadd.xlane.f32.xlu0 %v1343
        %v1347 = vpop.xlane.xlu0 %1346
        %v1348 = vcvt.f32.s32 %v1345
        %v1349 = vcvt.f32.s32 %v1347
        %v1350 = vshll.u32 %v1349, 16
        %v1351 = vadd.s32 %v1350, %v1348
        %v1352 = vadd.s32 %v1276, %v1277
        %v1353 = vand.u32 %v1352, 65535
        %v1354 = vshrl.u32 %v1352, 16
        %v1355 = vcvt.s32.f32 %v1353
        %v1356 = vcvt.s32.f32 %v1354
        %1357 = vadd.xlane.f32.xlu0 %v1355
        %v1358 = vpop.xlane.xlu0 %1357
        %1359 = vadd.xlane.f32.xlu0 %v1356
        %v1360 = vpop.xlane.xlu0 %1359
        %v1361 = vcvt.f32.s32 %v1358
        %v1362 = vcvt.f32.s32 %v1360
        %v1363 = vshll.u32 %v1362, 16
        %v1364 = vadd.s32 %v1363, %v1361
        %v1365 = vadd.s32 %v1278, %v1279
        %v1366 = vand.u32 %v1365, 65535
        %v1367 = vshrl.u32 %v1365, 16
        %v1368 = vcvt.s32.f32 %v1366
        %v1369 = vcvt.s32.f32 %v1367
        %1370 = vadd.xlane.f32.xlu0 %v1368
        %v1371 = vpop.xlane.xlu0 %1370
        %1372 = vadd.xlane.f32.xlu0 %v1369
        %v1373 = vpop.xlane.xlu0 %1372
        %v1374 = vcvt.f32.s32 %v1371
        %v1375 = vcvt.f32.s32 %v1373
        %v1376 = vshll.u32 %v1375, 16
        %v1377 = vadd.s32 %v1376, %v1374
        %v1378 = vadd.s32 %v1280, %v1281
        %v1379 = vand.u32 %v1378, 65535
        %v1380 = vshrl.u32 %v1378, 16
        %v1381 = vcvt.s32.f32 %v1379
        %v1382 = vcvt.s32.f32 %v1380
        %1383 = vadd.xlane.f32.xlu0 %v1381
        %v1384 = vpop.xlane.xlu0 %1383
        %1385 = vadd.xlane.f32.xlu0 %v1382
        %v1386 = vpop.xlane.xlu0 %1385
        %v1387 = vcvt.f32.s32 %v1384
        %v1388 = vcvt.f32.s32 %v1386
        %v1389 = vshll.u32 %v1388, 16
        %v1390 = vadd.s32 %v1389, %v1387
        %v1391 = vadd.s32 %v1282, %v1283
        %v1392 = vand.u32 %v1391, 65535
        %v1393 = vshrl.u32 %v1391, 16
        %v1394 = vcvt.s32.f32 %v1392
        %v1395 = vcvt.s32.f32 %v1393
        %1396 = vadd.xlane.f32.xlu0 %v1394
        %v1397 = vpop.xlane.xlu0 %1396
        %1398 = vadd.xlane.f32.xlu0 %v1395
        %v1399 = vpop.xlane.xlu0 %1398
        %v1400 = vcvt.f32.s32 %v1397
        %v1401 = vcvt.f32.s32 %v1399
        %v1402 = vshll.u32 %v1401, 16
        %v1403 = vadd.s32 %v1402, %v1400
        %v1404 = vadd.s32 %v1284, %v1285
        %v1405 = vand.u32 %v1404, 65535
        %v1406 = vshrl.u32 %v1404, 16
        %v1407 = vcvt.s32.f32 %v1405
        %v1408 = vcvt.s32.f32 %v1406
        %1409 = vadd.xlane.f32.xlu0 %v1407
        %v1410 = vpop.xlane.xlu0 %1409
        %1411 = vadd.xlane.f32.xlu0 %v1408
        %v1412 = vpop.xlane.xlu0 %1411
        %v1413 = vcvt.f32.s32 %v1410
        %v1414 = vcvt.f32.s32 %v1412
        %v1415 = vshll.u32 %v1414, 16
        %v1416 = vadd.s32 %v1415, %v1413
        %v1417 = vadd.s32 %v1286, %v1287
        %v1418 = vand.u32 %v1417, 65535
        %v1419 = vshrl.u32 %v1417, 16
        %v1420 = vcvt.s32.f32 %v1418
        %v1421 = vcvt.s32.f32 %v1419
        %1422 = vadd.xlane.f32.xlu0 %v1420
        %v1423 = vpop.xlane.xlu0 %1422
        %1424 = vadd.xlane.f32.xlu0 %v1421
        %v1425 = vpop.xlane.xlu0 %1424
        %v1426 = vcvt.f32.s32 %v1423
        %v1427 = vcvt.f32.s32 %v1425
        %v1428 = vshll.u32 %v1427, 16
        %v1429 = vadd.s32 %v1428, %v1426
        %v1430 = vadd.s32 %v1288, %v1289
        %v1431 = vand.u32 %v1430, 65535
        %v1432 = vshrl.u32 %v1430, 16
        %v1433 = vcvt.s32.f32 %v1431
        %v1434 = vcvt.s32.f32 %v1432
        %1435 = vadd.xlane.f32.xlu0 %v1433
        %v1436 = vpop.xlane.xlu0 %1435
        %1437 = vadd.xlane.f32.xlu0 %v1434
        %v1438 = vpop.xlane.xlu0 %1437
        %v1439 = vcvt.f32.s32 %v1436
        %v1440 = vcvt.f32.s32 %v1438
        %v1441 = vshll.u32 %v1440, 16
        %v1442 = vadd.s32 %v1441, %v1439
        %v1443 = vadd.s32 %v1290, %v1291
        %v1444 = vand.u32 %v1443, 65535
        %v1445 = vshrl.u32 %v1443, 16
        %v1446 = vcvt.s32.f32 %v1444
        %v1447 = vcvt.s32.f32 %v1445
        %1448 = vadd.xlane.f32.xlu0 %v1446
        %v1449 = vpop.xlane.xlu0 %1448
        %1450 = vadd.xlane.f32.xlu0 %v1447
        %v1451 = vpop.xlane.xlu0 %1450
        %v1452 = vcvt.f32.s32 %v1449
        %v1453 = vcvt.f32.s32 %v1451
        %v1454 = vshll.u32 %v1453, 16
        %v1455 = vadd.s32 %v1454, %v1452
        %v1456 = vadd.s32 %v1292, %v1293
        %v1457 = vand.u32 %v1456, 65535
        %v1458 = vshrl.u32 %v1456, 16
        %v1459 = vcvt.s32.f32 %v1457
        %v1460 = vcvt.s32.f32 %v1458
        %1461 = vadd.xlane.f32.xlu0 %v1459
        %v1462 = vpop.xlane.xlu0 %1461
        %1463 = vadd.xlane.f32.xlu0 %v1460
        %v1464 = vpop.xlane.xlu0 %1463
        %v1465 = vcvt.f32.s32 %v1462
        %v1466 = vcvt.f32.s32 %v1464
        %v1467 = vshll.u32 %v1466, 16
        %v1468 = vadd.s32 %v1467, %v1465
        %v1469 = vadd.s32 %v1294, %v1295
        %v1470 = vand.u32 %v1469, 65535
        %v1471 = vshrl.u32 %v1469, 16
        %v1472 = vcvt.s32.f32 %v1470
        %v1473 = vcvt.s32.f32 %v1471
        %1474 = vadd.xlane.f32.xlu0 %v1472
        %v1475 = vpop.xlane.xlu0 %1474
        %1476 = vadd.xlane.f32.xlu0 %v1473
        %v1477 = vpop.xlane.xlu0 %1476
        %v1478 = vcvt.f32.s32 %v1475
        %v1479 = vcvt.f32.s32 %v1477
        %v1480 = vshll.u32 %v1479, 16
        %v1481 = vadd.s32 %v1480, %v1478
        %v1482 = vadd.s32 %v1296, %v1297
        %v1483 = vand.u32 %v1482, 65535
        %v1484 = vshrl.u32 %v1482, 16
        %v1485 = vcvt.s32.f32 %v1483
        %v1486 = vcvt.s32.f32 %v1484
        %1487 = vadd.xlane.f32.xlu0 %v1485
        %v1488 = vpop.xlane.xlu0 %1487
        %1489 = vadd.xlane.f32.xlu0 %v1486
        %v1490 = vpop.xlane.xlu0 %1489
        %v1491 = vcvt.f32.s32 %v1488
        %v1492 = vcvt.f32.s32 %v1490
        %v1493 = vshll.u32 %v1492, 16
        %v1494 = vadd.s32 %v1493, %v1491
        %v1495 = vadd.s32 %v1298, %v1299
        %v1496 = vand.u32 %v1495, 65535
        %v1497 = vshrl.u32 %v1495, 16
        %v1498 = vcvt.s32.f32 %v1496
        %v1499 = vcvt.s32.f32 %v1497
        %1500 = vadd.xlane.f32.xlu0 %v1498
        %v1501 = vpop.xlane.xlu0 %1500
        %1502 = vadd.xlane.f32.xlu0 %v1499
        %v1503 = vpop.xlane.xlu0 %1502
        %v1504 = vcvt.f32.s32 %v1501
        %v1505 = vcvt.f32.s32 %v1503
        %v1506 = vshll.u32 %v1505, 16
        %v1507 = vadd.s32 %v1506, %v1504
        %v1508 = vsel %vm1236, %v562, 0.0
        %v1509 = vsel %vm1237, %v563, 0.0
        %v1510 = vsel %vm1238, %v564, 0.0
        %v1511 = vsel %vm1239, %v565, 0.0
        %v1512 = vsel %vm1240, %v566, 0.0
        %v1513 = vsel %vm1241, %v567, 0.0
        %v1514 = vsel %vm1242, %v568, 0.0
        %v1515 = vsel %vm1243, %v569, 0.0
        %v1516 = vsel %vm1244, %v570, 0.0
        %v1517 = vsel %vm1245, %v571, 0.0
        %v1518 = vsel %vm1246, %v572, 0.0
        %v1519 = vsel %vm1247, %v573, 0.0
        %v1520 = vsel %vm1248, %v574, 0.0
        %v1521 = vsel %vm1249, %v575, 0.0
        %v1522 = vsel %vm1250, %v576, 0.0
        %v1523 = vsel %vm1251, %v577, 0.0
        %v1524 = vsel %vm1252, %v578, 0.0
        %v1525 = vsel %vm1253, %v579, 0.0
        %v1526 = vsel %vm1254, %v580, 0.0
        %v1527 = vsel %vm1255, %v581, 0.0
        %v1528 = vsel %vm1256, %v582, 0.0
        %v1529 = vsel %vm1257, %v583, 0.0
        %v1530 = vsel %vm1258, %v584, 0.0
        %v1531 = vsel %vm1259, %v585, 0.0
        %v1532 = vsel %vm1260, %v586, 0.0
        %v1533 = vsel %vm1261, %v587, 0.0
        %v1534 = vsel %vm1262, %v588, 0.0
        %v1535 = vsel %vm1263, %v589, 0.0
        %v1536 = vsel %vm1264, %v590, 0.0
        %v1537 = vsel %vm1265, %v591, 0.0
        %v1538 = vsel %vm1266, %v592, 0.0
        %v1539 = vsel %vm1267, %v593, 0.0
        %v1540 = vadd.f32 %v1508, %v1509
        %1541 = vadd.xlane.f32.xlu0 %v1540
        %v1542 = vpop.xlane.xlu0 %1541
        %v1543 = vadd.f32 %v1510, %v1511
        %1544 = vadd.xlane.f32.xlu0 %v1543
        %v1545 = vpop.xlane.xlu0 %1544
        %v1546 = vadd.f32 %v1512, %v1513
        %1547 = vadd.xlane.f32.xlu0 %v1546
        %v1548 = vpop.xlane.xlu0 %1547
        %v1549 = vadd.f32 %v1514, %v1515
        %1550 = vadd.xlane.f32.xlu0 %v1549
        %v1551 = vpop.xlane.xlu0 %1550
        %v1552 = vadd.f32 %v1516, %v1517
        %1553 = vadd.xlane.f32.xlu0 %v1552
        %v1554 = vpop.xlane.xlu0 %1553
        %v1555 = vadd.f32 %v1518, %v1519
        %1556 = vadd.xlane.f32.xlu0 %v1555
        %v1557 = vpop.xlane.xlu0 %1556
        %v1558 = vadd.f32 %v1520, %v1521
        %1559 = vadd.xlane.f32.xlu0 %v1558
        %v1560 = vpop.xlane.xlu0 %1559
        %v1561 = vadd.f32 %v1522, %v1523
        %1562 = vadd.xlane.f32.xlu0 %v1561
        %v1563 = vpop.xlane.xlu0 %1562
        %v1564 = vadd.f32 %v1524, %v1525
        %1565 = vadd.xlane.f32.xlu0 %v1564
        %v1566 = vpop.xlane.xlu0 %1565
        %v1567 = vadd.f32 %v1526, %v1527
        %1568 = vadd.xlane.f32.xlu0 %v1567
        %v1569 = vpop.xlane.xlu0 %1568
        %v1570 = vadd.f32 %v1528, %v1529
        %1571 = vadd.xlane.f32.xlu0 %v1570
        %v1572 = vpop.xlane.xlu0 %1571
        %v1573 = vadd.f32 %v1530, %v1531
        %1574 = vadd.xlane.f32.xlu0 %v1573
        %v1575 = vpop.xlane.xlu0 %1574
        %v1576 = vadd.f32 %v1532, %v1533
        %1577 = vadd.xlane.f32.xlu0 %v1576
        %v1578 = vpop.xlane.xlu0 %1577
        %v1579 = vadd.f32 %v1534, %v1535
        %1580 = vadd.xlane.f32.xlu0 %v1579
        %v1581 = vpop.xlane.xlu0 %1580
        %v1582 = vadd.f32 %v1536, %v1537
        %1583 = vadd.xlane.f32.xlu0 %v1582
        %v1584 = vpop.xlane.xlu0 %1583
        %v1585 = vadd.f32 %v1538, %v1539
        %1586 = vadd.xlane.f32.xlu0 %v1585
        %v1587 = vpop.xlane.xlu0 %1586
        %v1588 = vsub.f32 %v1542, %v839
        %v1589 = vsub.f32 %v1545, %v840
        %v1590 = vsub.f32 %v1548, %v841
        %v1591 = vsub.f32 %v1551, %v842
        %v1592 = vsub.f32 %v1554, %v843
        %v1593 = vsub.f32 %v1557, %v844
        %v1594 = vsub.f32 %v1560, %v845
        %v1595 = vsub.f32 %v1563, %v846
        %v1596 = vsub.f32 %v1566, %v847
        %v1597 = vsub.f32 %v1569, %v848
        %v1598 = vsub.f32 %v1572, %v849
        %v1599 = vsub.f32 %v1575, %v850
        %v1600 = vsub.f32 %v1578, %v851
        %v1601 = vsub.f32 %v1581, %v852
        %v1602 = vsub.f32 %v1584, %v853
        %v1603 = vsub.f32 %v1587, %v854
        %vm1604 = vcmp.ge.s32.totalorder %v1312, 2
        %vm1605 = vcmp.ge.s32.totalorder %v1325, 2
        %vm1606 = vcmp.ge.s32.totalorder %v1338, 2
        %vm1607 = vcmp.ge.s32.totalorder %v1351, 2
        %vm1608 = vcmp.ge.s32.totalorder %v1364, 2
        %vm1609 = vcmp.ge.s32.totalorder %v1377, 2
        %vm1610 = vcmp.ge.s32.totalorder %v1390, 2
        %vm1611 = vcmp.ge.s32.totalorder %v1403, 2
        %vm1612 = vcmp.ge.s32.totalorder %v1416, 2
        %vm1613 = vcmp.ge.s32.totalorder %v1429, 2
        %vm1614 = vcmp.ge.s32.totalorder %v1442, 2
        %vm1615 = vcmp.ge.s32.totalorder %v1455, 2
        %vm1616 = vcmp.ge.s32.totalorder %v1468, 2
        %vm1617 = vcmp.ge.s32.totalorder %v1481, 2
        %vm1618 = vcmp.ge.s32.totalorder %v1494, 2
        %vm1619 = vcmp.ge.s32.totalorder %v1507, 2
        %v1620 = vcvt.s32.f32 %v1312
        %v1621 = vcvt.s32.f32 %v1325
        %v1622 = vcvt.s32.f32 %v1338
        %v1623 = vcvt.s32.f32 %v1351
        %v1624 = vcvt.s32.f32 %v1364
        %v1625 = vcvt.s32.f32 %v1377
        %v1626 = vcvt.s32.f32 %v1390
        %v1627 = vcvt.s32.f32 %v1403
        %v1628 = vcvt.s32.f32 %v1416
        %v1629 = vcvt.s32.f32 %v1429
        %v1630 = vcvt.s32.f32 %v1442
        %v1631 = vcvt.s32.f32 %v1455
        %v1632 = vcvt.s32.f32 %v1468
        %v1633 = vcvt.s32.f32 %v1481
        %v1634 = vcvt.s32.f32 %v1494
        %v1635 = vcvt.s32.f32 %v1507
        %v1636 = vsel %vm1604, %v1620, 1.0
        %v1637 = vsel %vm1605, %v1621, 1.0
        %v1638 = vsel %vm1606, %v1622, 1.0
        %v1639 = vsel %vm1607, %v1623, 1.0
        %v1640 = vsel %vm1608, %v1624, 1.0
        %v1641 = vsel %vm1609, %v1625, 1.0
        %v1642 = vsel %vm1610, %v1626, 1.0
        %v1643 = vsel %vm1611, %v1627, 1.0
        %v1644 = vsel %vm1612, %v1628, 1.0
        %v1645 = vsel %vm1613, %v1629, 1.0
        %v1646 = vsel %vm1614, %v1630, 1.0
        %v1647 = vsel %vm1615, %v1631, 1.0
        %v1648 = vsel %vm1616, %v1632, 1.0
        %v1649 = vsel %vm1617, %v1633, 1.0
        %v1650 = vsel %vm1618, %v1634, 1.0
        %v1651 = vsel %vm1619, %v1635, 1.0
        %v1652 = vrcp.pop %v1636
        %v1653 = vmul.f32 %v1588, %v1652
        %v1654 = vrcp.pop %v1637
        %v1655 = vmul.f32 %v1589, %v1654
        %v1656 = vrcp.pop %v1638
        %v1657 = vmul.f32 %v1590, %v1656
        %v1658 = vrcp.pop %v1639
        %v1659 = vmul.f32 %v1591, %v1658
        %v1660 = vrcp.pop %v1640
        %v1661 = vmul.f32 %v1592, %v1660
        %v1662 = vrcp.pop %v1641
        %v1663 = vmul.f32 %v1593, %v1662
        %v1664 = vrcp.pop %v1642
        %v1665 = vmul.f32 %v1594, %v1664
        %v1666 = vrcp.pop %v1643
        %v1667 = vmul.f32 %v1595, %v1666
        %v1668 = vrcp.pop %v1644
        %v1669 = vmul.f32 %v1596, %v1668
        %v1670 = vrcp.pop %v1645
        %v1671 = vmul.f32 %v1597, %v1670
        %v1672 = vrcp.pop %v1646
        %v1673 = vmul.f32 %v1598, %v1672
        %v1674 = vrcp.pop %v1647
        %v1675 = vmul.f32 %v1599, %v1674
        %v1676 = vrcp.pop %v1648
        %v1677 = vmul.f32 %v1600, %v1676
        %v1678 = vrcp.pop %v1649
        %v1679 = vmul.f32 %v1601, %v1678
        %v1680 = vrcp.pop %v1650
        %v1681 = vmul.f32 %v1602, %v1680
        %v1682 = vrcp.pop %v1651
        %v1683 = vmul.f32 %v1603, %v1682
        %v1684 = vsub.f32 %v1147, %v1653
        %v1685 = vsub.f32 %v1148, %v1655
        %v1686 = vsub.f32 %v1149, %v1657
        %v1687 = vsub.f32 %v1150, %v1659
        %v1688 = vsub.f32 %v1151, %v1661
        %v1689 = vsub.f32 %v1152, %v1663
        %v1690 = vsub.f32 %v1153, %v1665
        %v1691 = vsub.f32 %v1154, %v1667
        %v1692 = vsub.f32 %v1155, %v1669
        %v1693 = vsub.f32 %v1156, %v1671
        %v1694 = vsub.f32 %v1157, %v1673
        %v1695 = vsub.f32 %v1158, %v1675
        %v1696 = vsub.f32 %v1159, %v1677
        %v1697 = vsub.f32 %v1160, %v1679
        %v1698 = vsub.f32 %v1161, %v1681
        %v1699 = vsub.f32 %v1162, %v1683
        %v1700 = vsel %vm1604, %v1684, 0.0
        %v1701 = vsel %vm1605, %v1685, 0.0
        %v1702 = vsel %vm1606, %v1686, 0.0
        %v1703 = vsel %vm1607, %v1687, 0.0
        %v1704 = vsel %vm1608, %v1688, 0.0
        %v1705 = vsel %vm1609, %v1689, 0.0
        %v1706 = vsel %vm1610, %v1690, 0.0
        %v1707 = vsel %vm1611, %v1691, 0.0
        %v1708 = vsel %vm1612, %v1692, 0.0
        %v1709 = vsel %vm1613, %v1693, 0.0
        %v1710 = vsel %vm1614, %v1694, 0.0
        %v1711 = vsel %vm1615, %v1695, 0.0
        %v1712 = vsel %vm1616, %v1696, 0.0
        %v1713 = vsel %vm1617, %v1697, 0.0
        %v1714 = vsel %vm1618, %v1698, 0.0
        %v1715 = vsel %vm1619, %v1699, 0.0
        %1732 = vrot.lane.b32.xlu0 %v1700, 127
        %v1733 = vpop.permute.xlu0 %1732
        %1734 = vrot.lane.b32.xlu0 %v1701, 127
        %v1735 = vpop.permute.xlu0 %1734
        %1736 = vrot.lane.b32.xlu0 %v1702, 127
        %v1737 = vpop.permute.xlu0 %1736
        %1738 = vrot.lane.b32.xlu0 %v1703, 127
        %v1739 = vpop.permute.xlu0 %1738
        %1740 = vrot.lane.b32.xlu0 %v1704, 127
        %v1741 = vpop.permute.xlu0 %1740
        %1742 = vrot.lane.b32.xlu0 %v1705, 127
        %v1743 = vpop.permute.xlu0 %1742
        %1744 = vrot.lane.b32.xlu0 %v1706, 127
        %v1745 = vpop.permute.xlu0 %1744
        %1746 = vrot.lane.b32.xlu0 %v1707, 127
        %v1747 = vpop.permute.xlu0 %1746
        %1748 = vrot.lane.b32.xlu0 %v1708, 127
        %v1749 = vpop.permute.xlu0 %1748
        %1750 = vrot.lane.b32.xlu0 %v1709, 127
        %v1751 = vpop.permute.xlu0 %1750
        %1752 = vrot.lane.b32.xlu0 %v1710, 127
        %v1753 = vpop.permute.xlu0 %1752
        %1754 = vrot.lane.b32.xlu0 %v1711, 127
        %v1755 = vpop.permute.xlu0 %1754
        %1756 = vrot.lane.b32.xlu0 %v1712, 127
        %v1757 = vpop.permute.xlu0 %1756
        %1758 = vrot.lane.b32.xlu0 %v1713, 127
        %v1759 = vpop.permute.xlu0 %1758
        %1760 = vrot.lane.b32.xlu0 %v1714, 127
        %v1761 = vpop.permute.xlu0 %1760
        %1762 = vrot.lane.b32.xlu0 %v1715, 127
        %v1763 = vpop.permute.xlu0 %1762
        %v1780 = vsel %vm967, %v1733, 0.0
        %v1781 = vsel %vm967, %v1735, 0.0
        %v1782 = vadd.f32 %v1780, %v1781
        %v1783 = vsel %vm967, %v1737, 0.0
        %v1784 = vadd.f32 %v1782, %v1783
        %v1785 = vsel %vm967, %v1739, 0.0
        %v1786 = vadd.f32 %v1784, %v1785
        %v1787 = vsel %vm967, %v1741, 0.0
        %v1788 = vadd.f32 %v1786, %v1787
        %v1789 = vsel %vm967, %v1743, 0.0
        %v1790 = vadd.f32 %v1788, %v1789
        %v1791 = vsel %vm967, %v1745, 0.0
        %v1792 = vadd.f32 %v1790, %v1791
        %v1793 = vsel %vm967, %v1747, 0.0
        %v1794 = vadd.f32 %v1792, %v1793
        %v1795 = vsel %vm967, %v1749, 0.0
        %v1796 = vadd.f32 %v1794, %v1795
        %v1797 = vsel %vm967, %v1751, 0.0
        %v1798 = vadd.f32 %v1796, %v1797
        %v1799 = vsel %vm967, %v1753, 0.0
        %v1800 = vadd.f32 %v1798, %v1799
        %v1801 = vsel %vm967, %v1755, 0.0
        %v1802 = vadd.f32 %v1800, %v1801
        %v1803 = vsel %vm967, %v1757, 0.0
        %v1804 = vadd.f32 %v1802, %v1803
        %v1805 = vsel %vm967, %v1759, 0.0
        %v1806 = vadd.f32 %v1804, %v1805
        %v1807 = vsel %vm967, %v1761, 0.0
        %v1808 = vadd.f32 %v1806, %v1807
        %v1809 = vsel %vm967, %v1763, 0.0
        %v1810 = vadd.f32 %v1808, %v1809
        %1811 = vadd.xlane.f32.xlu0 %v1810
        %v1812 = vpop.xlane.xlu0 %1811
        %v1813 = vrot.slane %v1812, 4
        %v1814 = vadd.f32 %v1812, %v1813
        %v1815 = vrot.slane %v1814, 2
        %v1816 = vadd.f32 %v1814, %v1815
        %v1817 = vrot.slane %v1816, 1
        %v1818 = vadd.f32 %v1816, %v1817
        %s1819 = vtos %v1818
        %v1820 = vsel %vm1604, 1, 0
        %v1821 = vsel %vm1605, 1, 0
        %v1822 = vsel %vm1606, 1, 0
        %v1823 = vsel %vm1607, 1, 0
        %v1824 = vsel %vm1608, 1, 0
        %v1825 = vsel %vm1609, 1, 0
        %v1826 = vsel %vm1610, 1, 0
        %v1827 = vsel %vm1611, 1, 0
        %v1828 = vsel %vm1612, 1, 0
        %v1829 = vsel %vm1613, 1, 0
        %v1830 = vsel %vm1614, 1, 0
        %v1831 = vsel %vm1615, 1, 0
        %v1832 = vsel %vm1616, 1, 0
        %v1833 = vsel %vm1617, 1, 0
        %v1834 = vsel %vm1618, 1, 0
        %v1835 = vsel %vm1619, 1, 0
        %v1836 = vcvt.s32.f32 %v1820
        %v1837 = vcvt.s32.f32 %v1821
        %v1838 = vcvt.s32.f32 %v1822
        %v1839 = vcvt.s32.f32 %v1823
        %v1840 = vcvt.s32.f32 %v1824
        %v1841 = vcvt.s32.f32 %v1825
        %v1842 = vcvt.s32.f32 %v1826
        %v1843 = vcvt.s32.f32 %v1827
        %v1844 = vcvt.s32.f32 %v1828
        %v1845 = vcvt.s32.f32 %v1829
        %v1846 = vcvt.s32.f32 %v1830
        %v1847 = vcvt.s32.f32 %v1831
        %v1848 = vcvt.s32.f32 %v1832
        %v1849 = vcvt.s32.f32 %v1833
        %v1850 = vcvt.s32.f32 %v1834
        %v1851 = vcvt.s32.f32 %v1835
        %v1852 = vsel %vm967, %v1836, 0.0
        %v1853 = vsel %vm967, %v1837, 0.0
        %v1854 = vadd.f32 %v1852, %v1853
        %v1855 = vsel %vm967, %v1838, 0.0
        %v1856 = vadd.f32 %v1854, %v1855
        %v1857 = vsel %vm967, %v1839, 0.0
        %v1858 = vadd.f32 %v1856, %v1857
        %v1859 = vsel %vm967, %v1840, 0.0
        %v1860 = vadd.f32 %v1858, %v1859
        %v1861 = vsel %vm967, %v1841, 0.0
        %v1862 = vadd.f32 %v1860, %v1861
        %v1863 = vsel %vm967, %v1842, 0.0
        %v1864 = vadd.f32 %v1862, %v1863
        %v1865 = vsel %vm967, %v1843, 0.0
        %v1866 = vadd.f32 %v1864, %v1865
        %v1867 = vsel %vm967, %v1844, 0.0
        %v1868 = vadd.f32 %v1866, %v1867
        %v1869 = vsel %vm967, %v1845, 0.0
        %v1870 = vadd.f32 %v1868, %v1869
        %v1871 = vsel %vm967, %v1846, 0.0
        %v1872 = vadd.f32 %v1870, %v1871
        %v1873 = vsel %vm967, %v1847, 0.0
        %v1874 = vadd.f32 %v1872, %v1873
        %v1875 = vsel %vm967, %v1848, 0.0
        %v1876 = vadd.f32 %v1874, %v1875
        %v1877 = vsel %vm967, %v1849, 0.0
        %v1878 = vadd.f32 %v1876, %v1877
        %v1879 = vsel %vm967, %v1850, 0.0
        %v1880 = vadd.f32 %v1878, %v1879
        %v1881 = vsel %vm967, %v1851, 0.0
        %v1882 = vadd.f32 %v1880, %v1881
        %1883 = vadd.xlane.f32.xlu0 %v1882
        %v1884 = vpop.xlane.xlu0 %1883
        %v1885 = vrot.slane %v1884, 4
        %v1886 = vadd.f32 %v1884, %v1885
        %v1887 = vrot.slane %v1886, 2
        %v1888 = vadd.f32 %v1886, %v1887
        %v1889 = vrot.slane %v1888, 1
        %v1890 = vadd.f32 %v1888, %v1889
        %s1891 = vtos %v1890
        %vm1892 = vcmp.eq.s32.totalorder %v598, 0
        %vm1893 = vcmp.eq.s32.totalorder %v595, 0
        %vm1894 = vmand %vm1892, %vm1893
        %v1895 = vstv %s1007
        %v1896 = vsel %vm1894, %v1895, 0.0
        %vm1897 = vcmp.eq.s32.totalorder %v595, 1
        %vm1898 = vmand %vm1892, %vm1897
        %v1899 = vstv %s1819
        %v1900 = vsel %vm1898, %v1899, %v1896
        %vm1901 = vcmp.eq.s32.totalorder %v595, 2
        %vm1902 = vmand %vm1892, %vm1901
        %v1903 = vstv %s1891
        %v1904 = vsel %vm1902, %v1903, %v1900
        %1905 = vst [vmem:[%s277] sm:$0xff] %v1904
        %s1906 = sand.u32 %s169, 1
        %s1907 = scalar_lea.sflag [#allocation3], %s1906
        %s1908 = sand.u32 %s169, 1
        %s1909 = smul.addr %s1908, 8
        %s1910 = scalar_lea.vmem [#allocation2], %s1909
        // Predicated region
        $region45: #{tpu_custom_call.1} parent=43 // pred_check
          %p1911 = pneg %p179
        $region46: #{tpu_custom_call.1} parent=43 // pred_check_branch
          %1913 = sbr.rel (%p1911) target = $region48
        $region47: #{tpu_custom_call.1} parent=43 // pred_region
          %s1915 = ssub.s32 128, 128
          %1916 = vsyncadd %s1907, %s1915
          %s1917 = smul.addr %s20, 128
          %s1918 = scalar_lea.hbm %s6, %s1917
          %s1920 = sshll.u32 %s1910, 4
          %s1921 = int_to_ptr.vmem [resolvable:$true] %s1920
          %1923 = dma.vmem_to_hbm [thread:$0]  %s1921, 128, %s1918, %s1907
        $region48: #{tpu_custom_call.1} parent=43 // pred_fallthru
          _
      $region44: #{tpu_custom_call.1} parent=5 // pred_fallthru
        _
      %p1924 = scmp.le.s32.totalorder 2, %s15
      // Predicated region
      $region49: #{tpu_custom_call.1} parent=5 // pred_check
        %p1925 = pneg %p1924
      $region50: #{tpu_custom_call.1} parent=5 // pred_check_branch
        %1927 = sbr.rel (%p1925) target = $region52
      $region51: #{tpu_custom_call.1} parent=5 // pred_region
        %s1928 = ssub.s32 %s15, 2
        // Predicated region
        $region53: #{tpu_custom_call.1} parent=51 // pred_check
          %p1929 = pneg %p185
        $region54: #{tpu_custom_call.1} parent=51 // pred_check_branch
          %1931 = sbr.rel (%p1929) target = $region56
        $region55: #{tpu_custom_call.1} parent=51 // pred_region
          %s1932 = sand.u32 %s170, 1
          %s1933 = scalar_lea.sflag [#allocation3], %s1932
          %s1934 = sand.u32 %s170, 1
          %s1935 = smul.addr %s1934, 8
          %s1936 = scalar_lea.vmem [#allocation2], %s1935
          %1937 = dma.done %s1933, 128
        $region56: #{tpu_custom_call.1} parent=51 // pred_fallthru
          _
      $region52: #{tpu_custom_call.1} parent=5 // pred_fallthru
        _
    $region6: #{tpu_custom_call.1} parent=1 // loop_footer
      %s19 = sadd.s32 1, %s15
    $region7: #{tpu_custom_call.1} parent=1 // loop_footer_branch
      %14 = sbr.rel target = $region3
    $region8: #{tpu_custom_call.1} parent=1 // loop_exit
      _
    %1938 = vsyncpa [#allocation3], 1
    %s1939 = scalar_lea.sflag [#allocation3], 1
    %1940 = vsyncpa %s1939, 1

</llo_original>
